<compile_context>
chip_gen: v5e
topology: v5e:2x2
jax: 0.10.0
libtpu: 0.0.40
codegen_flags: <defaults>
</compile_context>

<pallas_src>
import functools

import jax
import jax.numpy as jnp
from jax.experimental import pallas as pl
from jax.experimental.pallas import tpu as pltpu


def _round_up(n, m):
    return ((n + m - 1) // m) * m


def _partial_encoder_kernel(
    x_ref, mask_ref, feat_ref, w1x_ref,
    w2_ref, b2_ref, w3_ref, b3_ref, w4_ref, b4_ref,
    out_ref,
    c_acc,
    *, m_chunk,
):
    d = pl.program_id(1)

    @pl.when(d == 0)
    def _():
        c_acc[...] = jnp.zeros_like(c_acc)

    tb, td = x_ref.shape
    h1p = feat_ref.shape[1]
    kp = w2_ref.shape[1]
    n_chunks = td // m_chunk

    # Weights resident for the whole feature tile (hoisted out of the chunk loop).
    w1x = w1x_ref[...]          # (1, H1p)   f32, VPU path
    w2 = w2_ref[...]            # (H1p, Kp)  bf16, MXU path
    b2 = b2_ref[...]            # (1, Kp)    f32

    def chunk_body(ci, carry):
        start = pl.multiple_of(ci * m_chunk, m_chunk)
        x_c = x_ref[:, pl.ds(start, m_chunk)].astype(jnp.float32)      # (tb, mc)
        m_c = mask_ref[:, pl.ds(start, m_chunk)].astype(jnp.float32)   # (tb, mc)
        f_c = feat_ref[pl.ds(start, m_chunk), :].astype(jnp.float32)   # (mc, H1p)

        # h_pre[b, t, :] = x[b, t] * W1_x + feat[t, :]   (VPU, f32)
        # TODO(synk): x_c[:, :, None] implies a lane->sublane relayout (XLU); if the
        # bundle dump shows it on the critical path, feed x transposed (D, B) instead.
        h_pre = x_c[:, :, None] * w1x[None, :, :] + f_c[None, :, :]
        h1 = jnp.maximum(h_pre, 0.0).reshape(tb * m_chunk, h1p)
        # TODO(synk): Dropout is eval-mode identity (dropout_rate defaults to 0.0).

        # Dominant matmul on the MXU: bf16 operands, f32 accumulation.
        h2 = jnp.maximum(
            jnp.dot(h1.astype(jnp.bfloat16), w2,
                    preferred_element_type=jnp.float32) + b2,
            0.0,
        )                                                               # (tb*mc, Kp)

        # Mask and aggregate over the feature chunk into the per-batch code c.
        h2m = h2.reshape(tb, m_chunk, kp) * m_c[:, :, None]
        c_acc[...] += jnp.sum(h2m, axis=1)                              # (tb, Kp)
        return carry

    jax.lax.fori_loop(0, n_chunks, chunk_body, 0, unroll=(n_chunks <= 4))

    # ---- encoder_mlp on the aggregated code (last feature tile only) ----------
    @pl.when(d == pl.num_programs(1) - 1)
    def _():
        e1 = jnp.maximum(
            jnp.dot(c_acc[...].astype(jnp.bfloat16), w3_ref[...],
                    preferred_element_type=jnp.float32) + b3_ref[...],
            0.0,
        )
        out_ref[...] = (
            jnp.dot(e1.astype(jnp.bfloat16), w4_ref[...],
                    preferred_element_type=jnp.float32) + b4_ref[...]
        ).astype(out_ref.dtype)


def partial_encoder_forward(x, mask, params, *, tb=None, td=None, m_chunk=None,
                            vmem_limit_bytes=None):
    """Pallas forward of PartialEncoder. Returns (mu, logvar), each (B, latent_dim).

    Tiling guidance: temporaries are bounded by m_chunk (default <= 512 feature rows),
    so td can be large for HBM/DMA efficiency.  Per generation: v5e keep
    tb*td small or raise vmem_limit_bytes above the 16 MiB scoped default; v6e can use
    td up to 2048-4096 with a raised limit; v7x re-derive against 32 MiB scoped /
    64 MiB physical VMEM and use tb = B // 2 (multiple of 8) when B >= 16 so both
    TensorCores are engaged.
    """
    B, D = x.shape
    K = params["emb"].shape[1]
    H1 = params["w2"].shape[0]
    H2 = params["w3"].shape[1]
    Z = params["w4"].shape[1] // 2

    tb = B if tb is None else tb
    td = D if td is None else td
    assert B % tb == 0, "batch dim must be divisible by the batch tile"
    assert D % td == 0, "feature dim must be divisible by the feature tile"
    assert td == D or td % 128 == 0, "feature tile must be lane aligned"
    m_chunk = min(td, 512) if m_chunk is None else m_chunk
    assert td % m_chunk == 0, "feature tile must be divisible by m_chunk"
    n_chunks = td // m_chunk
    assert n_chunks == 1 or m_chunk % 128 == 0, "m_chunk must be a multiple of 128"
    grid = (B // tb, D // td)

    # Lane-density padding (exact: zero pads cannot change the result).
    H1p = _round_up(H1, 128)
    Kp = _round_up(K, 128)
    H2p = _round_up(H2, 128)
    Op = _round_up(2 * Z, 128)

    f32, bf16 = jnp.float32, jnp.bfloat16
    pad2 = lambda a, r, c: jnp.pad(a, ((0, r - a.shape[0]), (0, c - a.shape[1])))

    # Batch-independent Linear1 term, hoisted out of the kernel:
    #   feat[t, :] = [emb[t] | fbias[t]] @ [W1_E ; W1_b] + b1
    emb_cat = jnp.concatenate([params["emb"], params["fbias"]], axis=1)    # (D, K+1)
    w1e_cat = jnp.concatenate([params["w1e"], params["w1b"]], axis=0)      # (K+1, H1)
    feat = (emb_cat @ w1e_cat + params["b1"]).astype(f32)                  # (D, H1)
    feat = pad2(feat, D, H1p).astype(bf16)

    w1x = pad2(params["w1x"].astype(f32), 1, H1p)          # f32 (VPU path)
    w2 = pad2(params["w2"], H1p, Kp).astype(bf16)
    b2 = pad2(params["b2"].astype(f32), 1, Kp)
    w3 = pad2(params["w3"], Kp, H2p).astype(bf16)
    b3 = pad2(params["b3"].astype(f32), 1, H2p)
    w4 = pad2(params["w4"], H2p, Op).astype(bf16)
    b4 = pad2(params["b4"].astype(f32), 1, Op)

    x_bf = x.astype(bf16)          # halves the streamed bytes
    mask_bf = mask.astype(bf16)    # exact for a 0/1 mask

    full = lambda shape: pl.BlockSpec(shape, lambda b, d: tuple(0 for _ in shape))
    in_specs = [
        pl.BlockSpec((tb, td), lambda b, d: (b, d)),     # x     (bf16)
        pl.BlockSpec((tb, td), lambda b, d: (b, d)),     # mask  (bf16)
        pl.BlockSpec((td, H1p), lambda b, d: (d, 0)),    # feat  (bf16)
        full((1, H1p)),                                  # W1_x  (f32)
        full((H1p, Kp)),                                 # W2    (bf16)
        full((1, Kp)),                                   # b2    (f32)
        full((Kp, H2p)),                                 # W3    (bf16)
        full((1, H2p)),                                  # b3    (f32)
        full((H2p, Op)),                                 # W4    (bf16)
        full((1, Op)),                                   # b4    (f32)
    ]
    out_specs = pl.BlockSpec((tb, Op), lambda b, d: (b, 0))

    cp_kwargs = dict(dimension_semantics=("parallel", "arbitrary"))
    if vmem_limit_bytes is not None:
        cp_kwargs["vmem_limit_bytes"] = vmem_limit_bytes

    out = pl.pallas_call(
        functools.partial(_partial_encoder_kernel, m_chunk=m_chunk),
        out_shape=jax.ShapeDtypeStruct((B, Op), jnp.float32),
        grid_spec=pltpu.PrefetchScalarGridSpec(
            num_scalar_prefetch=0,
            grid=grid,
            in_specs=in_specs,
            out_specs=out_specs,
            scratch_shapes=[pltpu.VMEM((tb, Kp), jnp.float32)],
        ),
        compiler_params=pltpu.CompilerParams(**cp_kwargs),
    )(x_bf, mask_bf, feat, w1x, w2, b2, w3, b3, w4, b4)

    # Split mu / logvar in the wrapper (free in XLA) instead of in-kernel lane slicing.
    return out[:, :Z], out[:, Z:2 * Z]


def partial_encoder_reference(x, mask, params):
    """Pure-f32 JAX reference mirroring the PyTorch forward exactly."""
    B, D = x.shape
    K = params["emb"].shape[1]
    x_flat = x.reshape(-1, 1)
    F_embed = jnp.broadcast_to(params["emb"][None], (B, D, K)).reshape(-1, K)
    b_embed = jnp.broadcast_to(params["fbias"][None], (B, D, 1)).reshape(-1, 1)
    h_input = jnp.concatenate([x_flat, F_embed, b_embed], axis=1)
    w1 = jnp.concatenate([params["w1x"], params["w1e"], params["w1b"]], axis=0)
    h = jnp.maximum(h_input @ w1 + params["b1"], 0.0)
    h = jnp.maximum(h @ params["w2"] + params["b2"], 0.0)
    h = h.reshape(B, D, K)
    c = jnp.sum(h * mask.astype(jnp.float32)[:, :, None], axis=1)
    e = jnp.maximum(c @ params["w3"] + params["b3"], 0.0)
    out = e @ params["w4"] + params["b4"]
    Z = out.shape[-1] // 2
    return out[:, :Z], out[:, Z:]


def partial_encoder_reference_matched(x, mask, params):
    """Reference applying the kernel's bf16 operand casts (for tight validation)."""
    B, D = x.shape
    f32, bf16 = jnp.float32, jnp.bfloat16
    emb_cat = jnp.concatenate([params["emb"], params["fbias"]], axis=1)
    w1e_cat = jnp.concatenate([params["w1e"], params["w1b"]], axis=0)
    feat = (emb_cat @ w1e_cat + params["b1"]).astype(bf16).astype(f32)      # (D, H1)
    xb = x.astype(bf16).astype(f32)
    h_pre = xb[:, :, None] * params["w1x"][0][None, None, :] + feat[None, :, :]
    h1 = jnp.maximum(h_pre, 0.0)
    h2 = jnp.maximum(
        jnp.dot(h1.reshape(-1, h1.shape[-1]).astype(bf16), params["w2"].astype(bf16),
                preferred_element_type=f32) + params["b2"], 0.0)
    K = params["w2"].shape[1]
    h2 = h2.reshape(B, D, K)
    c = jnp.sum(h2 * mask.astype(f32)[:, :, None], axis=1)
    e1 = jnp.maximum(
        jnp.dot(c.astype(bf16), params["w3"].astype(bf16),
                preferred_element_type=f32) + params["b3"], 0.0)
    out = jnp.dot(e1.astype(bf16), params["w4"].astype(bf16),
                  preferred_element_type=f32) + params["b4"]
    Z = out.shape[-1] // 2
    return out[:, :Z], out[:, Z:]


def init_params(key, input_dim, h_hidden_dim, encoder_hidden_dim, latent_dim, code_dim):
    ks = jax.random.split(key, 8)
    D, K, H1, H2, Z = input_dim, code_dim, h_hidden_dim, encoder_hidden_dim, latent_dim
    s = 0.1
    w1 = jax.random.normal(ks[1], (1 + K + 1, H1), jnp.float32) * s
    return {
        "emb":   jax.random.normal(ks[0], (D, K), jnp.float32),          # torch.randn
        "fbias": jnp.zeros((D, 1), jnp.float32),                         # torch.zeros
        "w1x":   w1[0:1, :],
        "w1e":   w1[1:1 + K, :],
        "w1b":   w1[1 + K:, :],
        "b1":    (jax.random.normal(ks[2], (1, H1), jnp.float32) * s),
        "w2":    jax.random.normal(ks[3], (H1, K), jnp.float32) * s,
        "b2":    jax.random.normal(ks[4], (1, K), jnp.float32) * s,
        "w3":    jax.random.normal(ks[5], (K, H2), jnp.float32) * s,
        "b3":    jnp.zeros((1, H2), jnp.float32),
        "w4":    jax.random.normal(ks[6], (H2, 2 * Z), jnp.float32) * s,
        "b4":    jnp.zeros((1, 2 * Z), jnp.float32),
    }


if __name__ == "__main__":
    # Small, deterministic problem: B=8 cells, D=256 junctions, K=32, H1=H2=64, Z=16.
    B, D, K, H1, H2, Z = 8, 256, 32, 64, 64, 16

    key = jax.random.PRNGKey(0)
    k_x, k_m, k_p = jax.random.split(key, 3)

    x = jax.random.normal(k_x, (B, D), jnp.float32)
    mask = (jax.random.uniform(k_m, (B, D)) > 0.3).astype(jnp.float32)
    params = init_params(k_p, D, H1, H2, Z, K)

    fwd = jax.jit(partial_encoder_forward)
    mu, logvar = fwd(x, mask, params)
    jax.block_until_ready((mu, logvar))

    # Tight check vs a matched-precision (bf16-operand) reference.
    mu_m, lv_m = partial_encoder_reference_matched(x, mask, params)
    assert jnp.allclose(mu, mu_m, atol=5e-3, rtol=5e-3), "mu mismatch (matched ref)"
    assert jnp.allclose(logvar, lv_m, atol=5e-3, rtol=5e-3), "logvar mismatch (matched ref)"

    # Loose, scale-relative check vs the exact f32 reference (bf16 quantization noise).
    mu_f, lv_f = partial_encoder_reference(x, mask, params)
    rel = lambda a, b: float(jnp.max(jnp.abs(a - b)) / (jnp.max(jnp.abs(b)) + 1e-6))
    assert rel(mu, mu_f) < 5e-2, "mu deviates too far from f32 reference"
    assert rel(logvar, lv_f) < 5e-2, "logvar deviates too far from f32 reference"

    print("KERNEL_OK")
</pallas_src>

<mosaic_0001>
module attributes {stable_mosaic.version = 11 : i64} {
  func.func @_partial_encoder_kernel(%arg0: i32, %arg1: i32, %arg2: memref<8x256xbf16, #tpu.memory_space<vmem>>, %arg3: memref<8x256xbf16, #tpu.memory_space<vmem>>, %arg4: memref<256x128xbf16, #tpu.memory_space<vmem>>, %arg5: memref<1x128xf32, #tpu.memory_space<vmem>>, %arg6: memref<128x128xbf16, #tpu.memory_space<vmem>>, %arg7: memref<1x128xf32, #tpu.memory_space<vmem>>, %arg8: memref<128x128xbf16, #tpu.memory_space<vmem>>, %arg9: memref<1x128xf32, #tpu.memory_space<vmem>>, %arg10: memref<128x128xbf16, #tpu.memory_space<vmem>>, %arg11: memref<1x128xf32, #tpu.memory_space<vmem>>, %arg12: memref<8x128xf32, #tpu.memory_space<vmem>>, %arg13: memref<8x128xf32, #tpu.memory_space<vmem>>) attributes {dimension_semantics = [#tpu.dimension_semantics<parallel>, #tpu.dimension_semantics<arbitrary>], iteration_bounds = array<i64: 1, 1>, scalar_prefetch = 0 : i64, scratch_operands = 1 : i64, tpu.core_type = #tpu.core_type<tc>, window_params = [{transform_indices = @transform_0, window_bounds = array<i64: 8, 256>}, {transform_indices = @transform_1, window_bounds = array<i64: 8, 256>}, {transform_indices = @transform_2, window_bounds = array<i64: 256, 128>}, {pipeline_mode = #tpu.pipeline_mode<synchronous>, transform_indices = @transform_3, window_bounds = array<i64: 1, 128>}, {pipeline_mode = #tpu.pipeline_mode<synchronous>, transform_indices = @transform_4, window_bounds = array<i64: 128, 128>}, {pipeline_mode = #tpu.pipeline_mode<synchronous>, transform_indices = @transform_5, window_bounds = array<i64: 1, 128>}, {pipeline_mode = #tpu.pipeline_mode<synchronous>, transform_indices = @transform_6, window_bounds = array<i64: 128, 128>}, {pipeline_mode = #tpu.pipeline_mode<synchronous>, transform_indices = @transform_7, window_bounds = array<i64: 1, 128>}, {pipeline_mode = #tpu.pipeline_mode<synchronous>, transform_indices = @transform_8, window_bounds = array<i64: 128, 128>}, {pipeline_mode = #tpu.pipeline_mode<synchronous>, transform_indices = @transform_9, window_bounds = array<i64: 1, 128>}, {transform_indices = @transform_10, window_bounds = array<i64: 8, 128>}]} {
    %c0_i32 = arith.constant 0 : i32
    %0 = arith.cmpi eq, %arg1, %c0_i32 : i32
    %1 = arith.extui %0 : i1 to i32
    %c0_i32_0 = arith.constant 0 : i32
    %2 = arith.cmpi ne, %1, %c0_i32_0 : i32
    scf.if %2 {
      %cst_19 = arith.constant 0.000000e+00 : f32
      %45 = vector.broadcast %cst_19 : f32 to vector<8x128xf32>
      %c0_20 = arith.constant 0 : index
      %c0_21 = arith.constant 0 : index
      %46 = vector.load %arg13[%c0_20, %c0_21] : memref<8x128xf32, #tpu.memory_space<vmem>>, vector<8x128xf32>
      tpu.vector_store %arg13[%c0_20, %c0_21], %45 {strides = array<i32>} : memref<8x128xf32, #tpu.memory_space<vmem>>, vector<8x128xf32>,
    } else {
    }
    %c0 = arith.constant 0 : index
    %c0_1 = arith.constant 0 : index
    %3 = vector.load %arg5[%c0, %c0_1] : memref<1x128xf32, #tpu.memory_space<vmem>>, vector<1x128xf32>
    %c0_2 = arith.constant 0 : index
    %c0_3 = arith.constant 0 : index
    %4 = vector.load %arg6[%c0_2, %c0_3] : memref<128x128xbf16, #tpu.memory_space<vmem>>, vector<128x128xbf16>
    %c0_4 = arith.constant 0 : index
    %c0_5 = arith.constant 0 : index
    %5 = vector.load %arg7[%c0_4, %c0_5] : memref<1x128xf32, #tpu.memory_space<vmem>>, vector<1x128xf32>
    %c0_i32_6 = arith.constant 0 : i32
    %c256_i32 = arith.constant 256 : i32
    %6 = arith.muli %c0_i32_6, %c256_i32 : i32
    %7 = tpu.assume_multiple %6, 256 : i32
    %c0_7 = arith.constant 0 : index
    %8 = arith.index_cast %7 : i32 to index
    %9 = vector.load %arg2[%c0_7, %8] : memref<8x256xbf16, #tpu.memory_space<vmem>>, vector<8x256xbf16>
    %10 = arith.extf %9 : vector<8x256xbf16> to vector<8x256xf32>
    %c0_8 = arith.constant 0 : index
    %11 = arith.index_cast %7 : i32 to index
    %12 = vector.load %arg3[%c0_8, %11] : memref<8x256xbf16, #tpu.memory_space<vmem>>, vector<8x256xbf16>
    %13 = arith.extf %12 : vector<8x256xbf16> to vector<8x256xf32>
    %14 = arith.index_cast %7 : i32 to index
    %c0_9 = arith.constant 0 : index
    %15 = vector.load %arg4[%14, %c0_9] : memref<256x128xbf16, #tpu.memory_space<vmem>>, vector<256x128xbf16>
    %16 = arith.extf %15 : vector<256x128xbf16> to vector<256x128xf32>
    %17 = vector.shape_cast %10 : vector<8x256xf32> to vector<8x256x1xf32>
    %18 = vector.shape_cast %3 : vector<1x128xf32> to vector<1x1x128xf32>
    %19 = vector.broadcast %17 : vector<8x256x1xf32> to vector<8x256x128xf32>
    %20 = vector.broadcast %18 : vector<1x1x128xf32> to vector<8x256x128xf32>
    %21 = arith.mulf %19, %20 : vector<8x256x128xf32>
    %22 = vector.shape_cast %16 : vector<256x128xf32> to vector<1x256x128xf32>
    %23 = vector.broadcast %22 : vector<1x256x128xf32> to vector<8x256x128xf32>
    %24 = arith.addf %21, %23 : vector<8x256x128xf32>
    %cst = arith.constant 0.000000e+00 : f32
    %25 = vector.broadcast %cst : f32 to vector<8x256x128xf32>
    %26 = arith.maximumf %24, %25 : vector<8x256x128xf32>
    %27 = vector.shape_cast %26 : vector<8x256x128xf32> to vector<2048x128xf32>
    %28 = arith.truncf %27 : vector<2048x128xf32> to vector<2048x128xbf16>
    %cst_10 = arith.constant dense<0.000000e+00> : vector<2048x128xf32>
    %29 = tpu.matmul %28, %4, %cst_10 {dimension_numbers = #tpu.dot_dimension_numbers<[1], [0], [0], [1], [0, 0, 1, 1], [], []>} : vector<2048x128xbf16>, vector<128x128xbf16>, vector<2048x128xf32> -> vector<2048x128xf32>
    %30 = vector.broadcast %5 : vector<1x128xf32> to vector<2048x128xf32>
    %31 = arith.addf %29, %30 : vector<2048x128xf32>
    %cst_11 = arith.constant 0.000000e+00 : f32
    %32 = vector.broadcast %cst_11 : f32 to vector<2048x128xf32>
    %33 = arith.maximumf %31, %32 : vector<2048x128xf32>
    %34 = vector.shape_cast %33 : vector<2048x128xf32> to vector<8x256x128xf32>
    %35 = vector.shape_cast %13 : vector<8x256xf32> to vector<8x256x1xf32>
    %36 = vector.broadcast %35 : vector<8x256x1xf32> to vector<8x256x128xf32>
    %37 = arith.mulf %34, %36 : vector<8x256x128xf32>
    %c0_12 = arith.constant 0 : index
    %c0_13 = arith.constant 0 : index
    %38 = vector.load %arg13[%c0_12, %c0_13] : memref<8x128xf32, #tpu.memory_space<vmem>>, vector<8x128xf32>
    %cst_14 = arith.constant dense<0.000000e+00> : vector<8x128xf32>
    %39 = vector.multi_reduction <add>, %37, %cst_14 [1] : vector<8x256x128xf32> to vector<8x128xf32>
    %40 = arith.addf %38, %39 : vector<8x128xf32>
    %c0_15 = arith.constant 0 : index
    %c0_16 = arith.constant 0 : index
    %41 = vector.load %arg13[%c0_15, %c0_16] : memref<8x128xf32, #tpu.memory_space<vmem>>, vector<8x128xf32>
    tpu.vector_store %arg13[%c0_15, %c0_16], %40 {strides = array<i32>} : memref<8x128xf32, #tpu.memory_space<vmem>>, vector<8x128xf32>,
    %c1_i32 = arith.constant 1 : i32
    %c0_i32_17 = arith.constant 0 : i32
    %42 = arith.cmpi eq, %arg1, %c0_i32_17 : i32
    %43 = arith.extui %42 : i1 to i32
    %c0_i32_18 = arith.constant 0 : i32
    %44 = arith.cmpi ne, %43, %c0_i32_18 : i32
    scf.if %44 {
      %c0_19 = arith.constant 0 : index
      %c0_20 = arith.constant 0 : index
      %45 = vector.load %arg13[%c0_19, %c0_20] : memref<8x128xf32, #tpu.memory_space<vmem>>, vector<8x128xf32>
      %46 = arith.truncf %45 : vector<8x128xf32> to vector<8x128xbf16>
      %c0_21 = arith.constant 0 : index
      %c0_22 = arith.constant 0 : index
      %47 = vector.load %arg8[%c0_21, %c0_22] : memref<128x128xbf16, #tpu.memory_space<vmem>>, vector<128x128xbf16>
      %cst_23 = arith.constant dense<0.000000e+00> : vector<8x128xf32>
      %48 = tpu.matmul %46, %47, %cst_23 {dimension_numbers = #tpu.dot_dimension_numbers<[1], [0], [0], [1], [0, 0, 1, 1], [], []>} : vector<8x128xbf16>, vector<128x128xbf16>, vector<8x128xf32> -> vector<8x128xf32>
      %c0_24 = arith.constant 0 : index
      %c0_25 = arith.constant 0 : index
      %49 = vector.load %arg9[%c0_24, %c0_25] : memref<1x128xf32, #tpu.memory_space<vmem>>, vector<1x128xf32>
      %50 = vector.broadcast %49 : vector<1x128xf32> to vector<8x128xf32>
      %51 = arith.addf %48, %50 : vector<8x128xf32>
      %cst_26 = arith.constant 0.000000e+00 : f32
      %52 = vector.broadcast %cst_26 : f32 to vector<8x128xf32>
      %53 = arith.maximumf %51, %52 : vector<8x128xf32>
      %54 = arith.truncf %53 : vector<8x128xf32> to vector<8x128xbf16>
      %c0_27 = arith.constant 0 : index
      %c0_28 = arith.constant 0 : index
      %55 = vector.load %arg10[%c0_27, %c0_28] : memref<128x128xbf16, #tpu.memory_space<vmem>>, vector<128x128xbf16>
      %cst_29 = arith.constant dense<0.000000e+00> : vector<8x128xf32>
      %56 = tpu.matmul %54, %55, %cst_29 {dimension_numbers = #tpu.dot_dimension_numbers<[1], [0], [0], [1], [0, 0, 1, 1], [], []>} : vector<8x128xbf16>, vector<128x128xbf16>, vector<8x128xf32> -> vector<8x128xf32>
      %c0_30 = arith.constant 0 : index
      %c0_31 = arith.constant 0 : index
      %57 = vector.load %arg11[%c0_30, %c0_31] : memref<1x128xf32, #tpu.memory_space<vmem>>, vector<1x128xf32>
      %58 = vector.broadcast %57 : vector<1x128xf32> to vector<8x128xf32>
      %59 = arith.addf %56, %58 : vector<8x128xf32>
      %c0_32 = arith.constant 0 : index
      %c0_33 = arith.constant 0 : index
      %60 = vector.load %arg12[%c0_32, %c0_33] : memref<8x128xf32, #tpu.memory_space<vmem>>, vector<8x128xf32>
      tpu.vector_store %arg12[%c0_32, %c0_33], %59 {strides = array<i32>} : memref<8x128xf32, #tpu.memory_space<vmem>>, vector<8x128xf32>,
    } else {
    }
    return
  }
  func.func @transform_0(%arg0: i32, %arg1: i32) -> (i32, i32) {
    %c0_i32 = arith.constant 0 : i32
    return %arg0, %arg1 : i32, i32
  }
  func.func @transform_1(%arg0: i32, %arg1: i32) -> (i32, i32) {
    %c0_i32 = arith.constant 0 : i32
    return %arg0, %arg1 : i32, i32
  }
  func.func @transform_2(%arg0: i32, %arg1: i32) -> (i32, i32) {
    %c0_i32 = arith.constant 0 : i32
    %c0_i32_0 = arith.constant 0 : i32
    return %arg1, %c0_i32 : i32, i32
  }
  func.func @transform_3(%arg0: i32, %arg1: i32) -> (i32, i32) {
    %c0_i32 = arith.constant 0 : i32
    %c0_i32_0 = arith.constant 0 : i32
    %c0_i32_1 = arith.constant 0 : i32
    return %c0_i32, %c0_i32_0 : i32, i32
  }
  func.func @transform_4(%arg0: i32, %arg1: i32) -> (i32, i32) {
    %c0_i32 = arith.constant 0 : i32
    %c0_i32_0 = arith.constant 0 : i32
    %c0_i32_1 = arith.constant 0 : i32
    return %c0_i32, %c0_i32_0 : i32, i32
  }
  func.func @transform_5(%arg0: i32, %arg1: i32) -> (i32, i32) {
    %c0_i32 = arith.constant 0 : i32
    %c0_i32_0 = arith.constant 0 : i32
    %c0_i32_1 = arith.constant 0 : i32
    return %c0_i32, %c0_i32_0 : i32, i32
  }
  func.func @transform_6(%arg0: i32, %arg1: i32) -> (i32, i32) {
    %c0_i32 = arith.constant 0 : i32
    %c0_i32_0 = arith.constant 0 : i32
    %c0_i32_1 = arith.constant 0 : i32
    return %c0_i32, %c0_i32_0 : i32, i32
  }
  func.func @transform_7(%arg0: i32, %arg1: i32) -> (i32, i32) {
    %c0_i32 = arith.constant 0 : i32
    %c0_i32_0 = arith.constant 0 : i32
    %c0_i32_1 = arith.constant 0 : i32
    return %c0_i32, %c0_i32_0 : i32, i32
  }
  func.func @transform_8(%arg0: i32, %arg1: i32) -> (i32, i32) {
    %c0_i32 = arith.constant 0 : i32
    %c0_i32_0 = arith.constant 0 : i32
    %c0_i32_1 = arith.constant 0 : i32
    return %c0_i32, %c0_i32_0 : i32, i32
  }
  func.func @transform_9(%arg0: i32, %arg1: i32) -> (i32, i32) {
    %c0_i32 = arith.constant 0 : i32
    %c0_i32_0 = arith.constant 0 : i32
    %c0_i32_1 = arith.constant 0 : i32
    return %c0_i32, %c0_i32_0 : i32, i32
  }
  func.func @transform_10(%arg0: i32, %arg1: i32) -> (i32, i32) {
    %c0_i32 = arith.constant 0 : i32
    %c0_i32_0 = arith.constant 0 : i32
    return %arg0, %c0_i32 : i32, i32
  }
}

</mosaic_0001>

<llo_original>
// kernel: partial_encoder_forward.1
$region0: #{partial_encoder_forward.1}
  #allocation0 [shape = 'u32[]', space=smem, size = 0x4, offset = 0x4, fixed_abs, tag = 'smem constant byte address 0x4 - core index']
  #allocation1 [shape = 'u32[72,128]{1,0:T(1,128)}', space=vmem, size = 0x9000, scoped, tag = 'internal scratch']
  #allocation2 [shape = 'f32[8,128]{1,0:T(8,128)}', space=vmem, size = 0x1000, scoped, tag = 'scratch operand']
  %s0 = inlined_call_operand.vmem [shape: bf16[8,256], index: 0, kind: input, shape index: {}]
  %s1 = inlined_call_operand.vmem [shape: bf16[8,256], index: 1, kind: input, shape index: {}]
  %s2 = inlined_call_operand.vmem [shape: bf16[256,128], index: 2, kind: input, shape index: {}]
  %s3 = inlined_call_operand.vmem [shape: f32[1,128], index: 3, kind: input, shape index: {}]
  %s4 = inlined_call_operand.vmem [shape: bf16[128,128], index: 4, kind: input, shape index: {}]
  %s5 = inlined_call_operand.vmem [shape: f32[1,128], index: 5, kind: input, shape index: {}]
  %s6 = inlined_call_operand.vmem [shape: bf16[128,128], index: 6, kind: input, shape index: {}]
  %s7 = inlined_call_operand.vmem [shape: f32[1,128], index: 7, kind: input, shape index: {}]
  %s8 = inlined_call_operand.vmem [shape: bf16[128,128], index: 8, kind: input, shape index: {}]
  %s9 = inlined_call_operand.vmem [shape: f32[1,128], index: 9, kind: input, shape index: {}]
  %s10 = inlined_call_operand.vmem [shape: f32[8,128], index: 10, kind: output, shape index: {}]
  %s11 = sld [smem:[#allocation0]]
  $region58: #{partial_encoder_forward.1} parent=0
    _
  %s13 = ssub.s32 1, %s11
  %s14 = scalar_select 0, %s13, %s11
  // Predicated region
  $region2: #{partial_encoder_forward.1} parent=0 // pred_check
    _
  $region3: #{partial_encoder_forward.1} parent=0 // pred_check_branch
    %16 = sbr.rel (0) target = $region5
  $region4: #{partial_encoder_forward.1} parent=0 // pred_region
    _
  $region5: #{partial_encoder_forward.1} parent=0 // pred_fallthru
    _
  // Predicated region
  $region6: #{partial_encoder_forward.1} parent=0 // pred_check
    _
  $region7: #{partial_encoder_forward.1} parent=0 // pred_check_branch
    %18 = sbr.rel (0) target = $region9
  $region8: #{partial_encoder_forward.1} parent=0 // pred_region
    _
  $region9: #{partial_encoder_forward.1} parent=0 // pred_fallthru
    _
  // Predicated region
  $region10: #{partial_encoder_forward.1} parent=0 // pred_check
    _
  $region11: #{partial_encoder_forward.1} parent=0 // pred_check_branch
    %20 = sbr.rel (0) target = $region13
  $region12: #{partial_encoder_forward.1} parent=0 // pred_region
    _
  $region13: #{partial_encoder_forward.1} parent=0 // pred_fallthru
    _
  // Predicated region
  $region14: #{partial_encoder_forward.1} parent=0 // pred_check
    _
  $region15: #{partial_encoder_forward.1} parent=0 // pred_check_branch
    %22 = sbr.rel (0) target = $region17
  $region16: #{partial_encoder_forward.1} parent=0 // pred_region
    _
  $region17: #{partial_encoder_forward.1} parent=0 // pred_fallthru
    _
  // Predicated region
  $region18: #{partial_encoder_forward.1} parent=0 // pred_check
    _
  $region19: #{partial_encoder_forward.1} parent=0 // pred_check_branch
    %24 = sbr.rel (0) target = $region21
  $region20: #{partial_encoder_forward.1} parent=0 // pred_region
    _
  $region21: #{partial_encoder_forward.1} parent=0 // pred_fallthru
    _
  // Predicated region
  $region22: #{partial_encoder_forward.1} parent=0 // pred_check
    _
  $region23: #{partial_encoder_forward.1} parent=0 // pred_check_branch
    %26 = sbr.rel (0) target = $region25
  $region24: #{partial_encoder_forward.1} parent=0 // pred_region
    _
  $region25: #{partial_encoder_forward.1} parent=0 // pred_fallthru
    _
  // Predicated region
  $region26: #{partial_encoder_forward.1} parent=0 // pred_check
    _
  $region27: #{partial_encoder_forward.1} parent=0 // pred_check_branch
    %28 = sbr.rel (0) target = $region29
  $region28: #{partial_encoder_forward.1} parent=0 // pred_region
    _
  $region29: #{partial_encoder_forward.1} parent=0 // pred_fallthru
    _
  // Predicated region
  $region30: #{partial_encoder_forward.1} parent=0 // pred_check
    _
  $region31: #{partial_encoder_forward.1} parent=0 // pred_check_branch
    %30 = sbr.rel (0) target = $region33
  $region32: #{partial_encoder_forward.1} parent=0 // pred_region
    _
  $region33: #{partial_encoder_forward.1} parent=0 // pred_fallthru
    _
  // Predicated region
  $region34: #{partial_encoder_forward.1} parent=0 // pred_check
    _
  $region35: #{partial_encoder_forward.1} parent=0 // pred_check_branch
    %32 = sbr.rel (0) target = $region37
  $region36: #{partial_encoder_forward.1} parent=0 // pred_region
    _
  $region37: #{partial_encoder_forward.1} parent=0 // pred_fallthru
    _
  // Predicated region
  $region38: #{partial_encoder_forward.1} parent=0 // pred_check
    _
  $region39: #{partial_encoder_forward.1} parent=0 // pred_check_branch
    %34 = sbr.rel (0) target = $region41
  $region40: #{partial_encoder_forward.1} parent=0 // pred_region
    _
  $region41: #{partial_encoder_forward.1} parent=0 // pred_fallthru
    _
  %p35 = scmp.eq.s32.totalorder 0, 0
  // Predicated region
  $region42: #{partial_encoder_forward.1} parent=0 // pred_check
    %p36 = pneg %p35
  $region43: #{partial_encoder_forward.1} parent=0 // pred_check_branch
    %38 = sbr.rel (%p36) target = $region45
  $region44: #{partial_encoder_forward.1} parent=0 // pred_region
    %39 = vst [vmem:[#allocation2] sm:$0xff] 0.0
  $region45: #{partial_encoder_forward.1} parent=0 // pred_fallthru
    _
  %v40 = vld [vmem:[%s3] sm:$0x1]
  %v41 = vld [vmem:[%s4] sm:$0xf]
  %v42 = vld [vmem:[%s4 + $0x4] sm:$0xf]
  %v43 = vld [vmem:[%s4 + $0x8] sm:$0xf]
  %v44 = vld [vmem:[%s4 + $0xc] sm:$0xf]
  %v45 = vld [vmem:[%s4 + $0x10] sm:$0xf]
  %v46 = vld [vmem:[%s4 + $0x14] sm:$0xf]
  %v47 = vld [vmem:[%s4 + $0x18] sm:$0xf]
  %v48 = vld [vmem:[%s4 + $0x1c] sm:$0xf]
  %v49 = vld [vmem:[%s4 + $0x20] sm:$0xf]
  %v50 = vld [vmem:[%s4 + $0x24] sm:$0xf]
  %v51 = vld [vmem:[%s4 + $0x28] sm:$0xf]
  %v52 = vld [vmem:[%s4 + $0x2c] sm:$0xf]
  %v53 = vld [vmem:[%s4 + $0x30] sm:$0xf]
  %v54 = vld [vmem:[%s4 + $0x34] sm:$0xf]
  %v55 = vld [vmem:[%s4 + $0x38] sm:$0xf]
  %v56 = vld [vmem:[%s4 + $0x3c] sm:$0xf]
  %v57 = vld [vmem:[%s5] sm:$0x1]
  %v58 = vld [vmem:[%s0] sm:$0xff]
  %v59 = vunpack.c.l.bf16 %v58
  %v60 = vunpack.c.h.bf16 %v58
  %v61 = vld [vmem:[%s1] sm:$0xff]
  %v62 = vunpack.c.l.bf16 %v61
  %v63 = vunpack.c.h.bf16 %v61
  %v64 = vld [vmem:[%s2] sm:$0xf]
  %v65 = vld [vmem:[%s2 + $0x4] sm:$0xf]
  %v66 = vld [vmem:[%s2 + $0x8] sm:$0xf]
  %v67 = vld [vmem:[%s2 + $0xc] sm:$0xf]
  %v68 = vld [vmem:[%s2 + $0x10] sm:$0xf]
  %v69 = vld [vmem:[%s2 + $0x14] sm:$0xf]
  %v70 = vld [vmem:[%s2 + $0x18] sm:$0xf]
  %v71 = vld [vmem:[%s2 + $0x1c] sm:$0xf]
  %v72 = vld [vmem:[%s2 + $0x20] sm:$0xf]
  %v73 = vld [vmem:[%s2 + $0x24] sm:$0xf]
  %v74 = vld [vmem:[%s2 + $0x28] sm:$0xf]
  %v75 = vld [vmem:[%s2 + $0x2c] sm:$0xf]
  %v76 = vld [vmem:[%s2 + $0x30] sm:$0xf]
  %v77 = vld [vmem:[%s2 + $0x34] sm:$0xf]
  %v78 = vld [vmem:[%s2 + $0x38] sm:$0xf]
  %v79 = vld [vmem:[%s2 + $0x3c] sm:$0xf]
  %v80 = vld [vmem:[%s2 + $0x40] sm:$0xf]
  %v81 = vld [vmem:[%s2 + $0x44] sm:$0xf]
  %v82 = vld [vmem:[%s2 + $0x48] sm:$0xf]
  %v83 = vld [vmem:[%s2 + $0x4c] sm:$0xf]
  %v84 = vld [vmem:[%s2 + $0x50] sm:$0xf]
  %v85 = vld [vmem:[%s2 + $0x54] sm:$0xf]
  %v86 = vld [vmem:[%s2 + $0x58] sm:$0xf]
  %v87 = vld [vmem:[%s2 + $0x5c] sm:$0xf]
  %v88 = vld [vmem:[%s2 + $0x60] sm:$0xf]
  %v89 = vld [vmem:[%s2 + $0x64] sm:$0xf]
  %v90 = vld [vmem:[%s2 + $0x68] sm:$0xf]
  %v91 = vld [vmem:[%s2 + $0x6c] sm:$0xf]
  %v92 = vld [vmem:[%s2 + $0x70] sm:$0xf]
  %v93 = vld [vmem:[%s2 + $0x74] sm:$0xf]
  %v94 = vld [vmem:[%s2 + $0x78] sm:$0xf]
  %v95 = vld [vmem:[%s2 + $0x7c] sm:$0xf]
  %v96 = vunpack.c.l.bf16 %v64
  %v97 = vunpack.c.l.bf16 %v65
  %v98 = vunpack.c.l.bf16 %v66
  %v99 = vunpack.c.l.bf16 %v67
  %v100 = vunpack.c.l.bf16 %v68
  %v101 = vunpack.c.l.bf16 %v69
  %v102 = vunpack.c.l.bf16 %v70
  %v103 = vunpack.c.l.bf16 %v71
  %v104 = vunpack.c.l.bf16 %v72
  %v105 = vunpack.c.l.bf16 %v73
  %v106 = vunpack.c.l.bf16 %v74
  %v107 = vunpack.c.l.bf16 %v75
  %v108 = vunpack.c.l.bf16 %v76
  %v109 = vunpack.c.l.bf16 %v77
  %v110 = vunpack.c.l.bf16 %v78
  %v111 = vunpack.c.l.bf16 %v79
  %v112 = vunpack.c.l.bf16 %v80
  %v113 = vunpack.c.l.bf16 %v81
  %v114 = vunpack.c.l.bf16 %v82
  %v115 = vunpack.c.l.bf16 %v83
  %v116 = vunpack.c.l.bf16 %v84
  %v117 = vunpack.c.l.bf16 %v85
  %v118 = vunpack.c.l.bf16 %v86
  %v119 = vunpack.c.l.bf16 %v87
  %v120 = vunpack.c.l.bf16 %v88
  %v121 = vunpack.c.l.bf16 %v89
  %v122 = vunpack.c.l.bf16 %v90
  %v123 = vunpack.c.l.bf16 %v91
  %v124 = vunpack.c.l.bf16 %v92
  %v125 = vunpack.c.l.bf16 %v93
  %v126 = vunpack.c.l.bf16 %v94
  %v127 = vunpack.c.l.bf16 %v95
  %v128 = vperm.slane %v59, 0
  %v129 = vlaneseq
  %v130 = vshrl.u32 %v129, 7
  %132 = vset.pattern.permute.xlu0 %v130
  %133 = vperm.xlu0 %132, %v128
  %v134 = vpop.permute.xlu0 %133
  %v135 = vlaneseq
  %v136 = vshrl.u32 %v135, 7
  %v137 = vadd.s32 %v136, 8
  %138 = vset.pattern.permute.xlu0 %v137
  %139 = vperm.xlu0 %138, %v128
  %v140 = vpop.permute.xlu0 %139
  %v141 = vlaneseq
  %v142 = vshrl.u32 %v141, 7
  %v143 = vadd.s32 %v142, 16
  %144 = vset.pattern.permute.xlu0 %v143
  %145 = vperm.xlu0 %144, %v128
  %v146 = vpop.permute.xlu0 %145
  %v147 = vlaneseq
  %v148 = vshrl.u32 %v147, 7
  %v149 = vadd.s32 %v148, 24
  %150 = vset.pattern.permute.xlu0 %v149
  %151 = vperm.xlu0 %150, %v128
  %v152 = vpop.permute.xlu0 %151
  %v153 = vlaneseq
  %v154 = vshrl.u32 %v153, 7
  %v155 = vadd.s32 %v154, 32
  %156 = vset.pattern.permute.xlu0 %v155
  %157 = vperm.xlu0 %156, %v128
  %v158 = vpop.permute.xlu0 %157
  %v159 = vlaneseq
  %v160 = vshrl.u32 %v159, 7
  %v161 = vadd.s32 %v160, 40
  %162 = vset.pattern.permute.xlu0 %v161
  %163 = vperm.xlu0 %162, %v128
  %v164 = vpop.permute.xlu0 %163
  %v165 = vlaneseq
  %v166 = vshrl.u32 %v165, 7
  %v167 = vadd.s32 %v166, 48
  %168 = vset.pattern.permute.xlu0 %v167
  %169 = vperm.xlu0 %168, %v128
  %v170 = vpop.permute.xlu0 %169
  %v171 = vlaneseq
  %v172 = vshrl.u32 %v171, 7
  %v173 = vadd.s32 %v172, 56
  %174 = vset.pattern.permute.xlu0 %v173
  %175 = vperm.xlu0 %174, %v128
  %v176 = vpop.permute.xlu0 %175
  %v177 = vlaneseq
  %v178 = vshrl.u32 %v177, 7
  %v179 = vadd.s32 %v178, 64
  %180 = vset.pattern.permute.xlu0 %v179
  %181 = vperm.xlu0 %180, %v128
  %v182 = vpop.permute.xlu0 %181
  %v183 = vlaneseq
  %v184 = vshrl.u32 %v183, 7
  %v185 = vadd.s32 %v184, 72
  %186 = vset.pattern.permute.xlu0 %v185
  %187 = vperm.xlu0 %186, %v128
  %v188 = vpop.permute.xlu0 %187
  %v189 = vlaneseq
  %v190 = vshrl.u32 %v189, 7
  %v191 = vadd.s32 %v190, 80
  %192 = vset.pattern.permute.xlu0 %v191
  %193 = vperm.xlu0 %192, %v128
  %v194 = vpop.permute.xlu0 %193
  %v195 = vlaneseq
  %v196 = vshrl.u32 %v195, 7
  %v197 = vadd.s32 %v196, 88
  %198 = vset.pattern.permute.xlu0 %v197
  %199 = vperm.xlu0 %198, %v128
  %v200 = vpop.permute.xlu0 %199
  %v201 = vlaneseq
  %v202 = vshrl.u32 %v201, 7
  %v203 = vadd.s32 %v202, 96
  %204 = vset.pattern.permute.xlu0 %v203
  %205 = vperm.xlu0 %204, %v128
  %v206 = vpop.permute.xlu0 %205
  %v207 = vlaneseq
  %v208 = vshrl.u32 %v207, 7
  %v209 = vadd.s32 %v208, 104
  %210 = vset.pattern.permute.xlu0 %v209
  %211 = vperm.xlu0 %210, %v128
  %v212 = vpop.permute.xlu0 %211
  %v213 = vlaneseq
  %v214 = vshrl.u32 %v213, 7
  %v215 = vadd.s32 %v214, 112
  %216 = vset.pattern.permute.xlu0 %v215
  %217 = vperm.xlu0 %216, %v128
  %v218 = vpop.permute.xlu0 %217
  %v219 = vlaneseq
  %v220 = vshrl.u32 %v219, 7
  %v221 = vadd.s32 %v220, 120
  %222 = vset.pattern.permute.xlu0 %v221
  %223 = vperm.xlu0 %222, %v128
  %v224 = vpop.permute.xlu0 %223
  %v225 = vperm.slane %v60, 0
  %v226 = vlaneseq
  %v227 = vshrl.u32 %v226, 7
  %229 = vset.pattern.permute.xlu0 %v227
  %230 = vperm.xlu0 %229, %v225
  %v231 = vpop.permute.xlu0 %230
  %v232 = vlaneseq
  %v233 = vshrl.u32 %v232, 7
  %v234 = vadd.s32 %v233, 8
  %235 = vset.pattern.permute.xlu0 %v234
  %236 = vperm.xlu0 %235, %v225
  %v237 = vpop.permute.xlu0 %236
  %v238 = vlaneseq
  %v239 = vshrl.u32 %v238, 7
  %v240 = vadd.s32 %v239, 16
  %241 = vset.pattern.permute.xlu0 %v240
  %242 = vperm.xlu0 %241, %v225
  %v243 = vpop.permute.xlu0 %242
  %v244 = vlaneseq
  %v245 = vshrl.u32 %v244, 7
  %v246 = vadd.s32 %v245, 24
  %247 = vset.pattern.permute.xlu0 %v246
  %248 = vperm.xlu0 %247, %v225
  %v249 = vpop.permute.xlu0 %248
  %v250 = vlaneseq
  %v251 = vshrl.u32 %v250, 7
  %v252 = vadd.s32 %v251, 32
  %253 = vset.pattern.permute.xlu0 %v252
  %254 = vperm.xlu0 %253, %v225
  %v255 = vpop.permute.xlu0 %254
  %v256 = vlaneseq
  %v257 = vshrl.u32 %v256, 7
  %v258 = vadd.s32 %v257, 40
  %259 = vset.pattern.permute.xlu0 %v258
  %260 = vperm.xlu0 %259, %v225
  %v261 = vpop.permute.xlu0 %260
  %v262 = vlaneseq
  %v263 = vshrl.u32 %v262, 7
  %v264 = vadd.s32 %v263, 48
  %265 = vset.pattern.permute.xlu0 %v264
  %266 = vperm.xlu0 %265, %v225
  %v267 = vpop.permute.xlu0 %266
  %v268 = vlaneseq
  %v269 = vshrl.u32 %v268, 7
  %v270 = vadd.s32 %v269, 56
  %271 = vset.pattern.permute.xlu0 %v270
  %272 = vperm.xlu0 %271, %v225
  %v273 = vpop.permute.xlu0 %272
  %v274 = vlaneseq
  %v275 = vshrl.u32 %v274, 7
  %v276 = vadd.s32 %v275, 64
  %277 = vset.pattern.permute.xlu0 %v276
  %278 = vperm.xlu0 %277, %v225
  %v279 = vpop.permute.xlu0 %278
  %v280 = vlaneseq
  %v281 = vshrl.u32 %v280, 7
  %v282 = vadd.s32 %v281, 72
  %283 = vset.pattern.permute.xlu0 %v282
  %284 = vperm.xlu0 %283, %v225
  %v285 = vpop.permute.xlu0 %284
  %v286 = vlaneseq
  %v287 = vshrl.u32 %v286, 7
  %v288 = vadd.s32 %v287, 80
  %289 = vset.pattern.permute.xlu0 %v288
  %290 = vperm.xlu0 %289, %v225
  %v291 = vpop.permute.xlu0 %290
  %v292 = vlaneseq
  %v293 = vshrl.u32 %v292, 7
  %v294 = vadd.s32 %v293, 88
  %295 = vset.pattern.permute.xlu0 %v294
  %296 = vperm.xlu0 %295, %v225
  %v297 = vpop.permute.xlu0 %296
  %v298 = vlaneseq
  %v299 = vshrl.u32 %v298, 7
  %v300 = vadd.s32 %v299, 96
  %301 = vset.pattern.permute.xlu0 %v300
  %302 = vperm.xlu0 %301, %v225
  %v303 = vpop.permute.xlu0 %302
  %v304 = vlaneseq
  %v305 = vshrl.u32 %v304, 7
  %v306 = vadd.s32 %v305, 104
  %307 = vset.pattern.permute.xlu0 %v306
  %308 = vperm.xlu0 %307, %v225
  %v309 = vpop.permute.xlu0 %308
  %v310 = vlaneseq
  %v311 = vshrl.u32 %v310, 7
  %v312 = vadd.s32 %v311, 112
  %313 = vset.pattern.permute.xlu0 %v312
  %314 = vperm.xlu0 %313, %v225
  %v315 = vpop.permute.xlu0 %314
  %v316 = vlaneseq
  %v317 = vshrl.u32 %v316, 7
  %v318 = vadd.s32 %v317, 120
  %319 = vset.pattern.permute.xlu0 %v318
  %320 = vperm.xlu0 %319, %v225
  %v321 = vpop.permute.xlu0 %320
  %v322 = vperm.slane %v59, 1
  %v323 = vlaneseq
  %v324 = vshrl.u32 %v323, 7
  %326 = vset.pattern.permute.xlu0 %v324
  %327 = vperm.xlu0 %326, %v322
  %v328 = vpop.permute.xlu0 %327
  %v329 = vlaneseq
  %v330 = vshrl.u32 %v329, 7
  %v331 = vadd.s32 %v330, 8
  %332 = vset.pattern.permute.xlu0 %v331
  %333 = vperm.xlu0 %332, %v322
  %v334 = vpop.permute.xlu0 %333
  %v335 = vlaneseq
  %v336 = vshrl.u32 %v335, 7
  %v337 = vadd.s32 %v336, 16
  %338 = vset.pattern.permute.xlu0 %v337
  %339 = vperm.xlu0 %338, %v322
  %v340 = vpop.permute.xlu0 %339
  %v341 = vlaneseq
  %v342 = vshrl.u32 %v341, 7
  %v343 = vadd.s32 %v342, 24
  %344 = vset.pattern.permute.xlu0 %v343
  %345 = vperm.xlu0 %344, %v322
  %v346 = vpop.permute.xlu0 %345
  %v347 = vlaneseq
  %v348 = vshrl.u32 %v347, 7
  %v349 = vadd.s32 %v348, 32
  %350 = vset.pattern.permute.xlu0 %v349
  %351 = vperm.xlu0 %350, %v322
  %v352 = vpop.permute.xlu0 %351
  %v353 = vlaneseq
  %v354 = vshrl.u32 %v353, 7
  %v355 = vadd.s32 %v354, 40
  %356 = vset.pattern.permute.xlu0 %v355
  %357 = vperm.xlu0 %356, %v322
  %v358 = vpop.permute.xlu0 %357
  %v359 = vlaneseq
  %v360 = vshrl.u32 %v359, 7
  %v361 = vadd.s32 %v360, 48
  %362 = vset.pattern.permute.xlu0 %v361
  %363 = vperm.xlu0 %362, %v322
  %v364 = vpop.permute.xlu0 %363
  %v365 = vlaneseq
  %v366 = vshrl.u32 %v365, 7
  %v367 = vadd.s32 %v366, 56
  %368 = vset.pattern.permute.xlu0 %v367
  %369 = vperm.xlu0 %368, %v322
  %v370 = vpop.permute.xlu0 %369
  %v371 = vlaneseq
  %v372 = vshrl.u32 %v371, 7
  %v373 = vadd.s32 %v372, 64
  %374 = vset.pattern.permute.xlu0 %v373
  %375 = vperm.xlu0 %374, %v322
  %v376 = vpop.permute.xlu0 %375
  %v377 = vlaneseq
  %v378 = vshrl.u32 %v377, 7
  %v379 = vadd.s32 %v378, 72
  %380 = vset.pattern.permute.xlu0 %v379
  %381 = vperm.xlu0 %380, %v322
  %v382 = vpop.permute.xlu0 %381
  %v383 = vlaneseq
  %v384 = vshrl.u32 %v383, 7
  %v385 = vadd.s32 %v384, 80
  %386 = vset.pattern.permute.xlu0 %v385
  %387 = vperm.xlu0 %386, %v322
  %v388 = vpop.permute.xlu0 %387
  %v389 = vlaneseq
  %v390 = vshrl.u32 %v389, 7
  %v391 = vadd.s32 %v390, 88
  %392 = vset.pattern.permute.xlu0 %v391
  %393 = vperm.xlu0 %392, %v322
  %v394 = vpop.permute.xlu0 %393
  %v395 = vlaneseq
  %v396 = vshrl.u32 %v395, 7
  %v397 = vadd.s32 %v396, 96
  %398 = vset.pattern.permute.xlu0 %v397
  %399 = vperm.xlu0 %398, %v322
  %v400 = vpop.permute.xlu0 %399
  %v401 = vlaneseq
  %v402 = vshrl.u32 %v401, 7
  %v403 = vadd.s32 %v402, 104
  %404 = vset.pattern.permute.xlu0 %v403
  %405 = vperm.xlu0 %404, %v322
  %v406 = vpop.permute.xlu0 %405
  %v407 = vlaneseq
  %v408 = vshrl.u32 %v407, 7
  %v409 = vadd.s32 %v408, 112
  %410 = vset.pattern.permute.xlu0 %v409
  %411 = vperm.xlu0 %410, %v322
  %v412 = vpop.permute.xlu0 %411
  %v413 = vlaneseq
  %v414 = vshrl.u32 %v413, 7
  %v415 = vadd.s32 %v414, 120
  %416 = vset.pattern.permute.xlu0 %v415
  %417 = vperm.xlu0 %416, %v322
  %v418 = vpop.permute.xlu0 %417
  %v419 = vperm.slane %v60, 1
  %v420 = vlaneseq
  %v421 = vshrl.u32 %v420, 7
  %423 = vset.pattern.permute.xlu0 %v421
  %424 = vperm.xlu0 %423, %v419
  %v425 = vpop.permute.xlu0 %424
  %v426 = vlaneseq
  %v427 = vshrl.u32 %v426, 7
  %v428 = vadd.s32 %v427, 8
  %429 = vset.pattern.permute.xlu0 %v428
  %430 = vperm.xlu0 %429, %v419
  %v431 = vpop.permute.xlu0 %430
  %v432 = vlaneseq
  %v433 = vshrl.u32 %v432, 7
  %v434 = vadd.s32 %v433, 16
  %435 = vset.pattern.permute.xlu0 %v434
  %436 = vperm.xlu0 %435, %v419
  %v437 = vpop.permute.xlu0 %436
  %v438 = vlaneseq
  %v439 = vshrl.u32 %v438, 7
  %v440 = vadd.s32 %v439, 24
  %441 = vset.pattern.permute.xlu0 %v440
  %442 = vperm.xlu0 %441, %v419
  %v443 = vpop.permute.xlu0 %442
  %v444 = vlaneseq
  %v445 = vshrl.u32 %v444, 7
  %v446 = vadd.s32 %v445, 32
  %447 = vset.pattern.permute.xlu0 %v446
  %448 = vperm.xlu0 %447, %v419
  %v449 = vpop.permute.xlu0 %448
  %v450 = vlaneseq
  %v451 = vshrl.u32 %v450, 7
  %v452 = vadd.s32 %v451, 40
  %453 = vset.pattern.permute.xlu0 %v452
  %454 = vperm.xlu0 %453, %v419
  %v455 = vpop.permute.xlu0 %454
  %v456 = vlaneseq
  %v457 = vshrl.u32 %v456, 7
  %v458 = vadd.s32 %v457, 48
  %459 = vset.pattern.permute.xlu0 %v458
  %460 = vperm.xlu0 %459, %v419
  %v461 = vpop.permute.xlu0 %460
  %v462 = vlaneseq
  %v463 = vshrl.u32 %v462, 7
  %v464 = vadd.s32 %v463, 56
  %465 = vset.pattern.permute.xlu0 %v464
  %466 = vperm.xlu0 %465, %v419
  %v467 = vpop.permute.xlu0 %466
  %v468 = vlaneseq
  %v469 = vshrl.u32 %v468, 7
  %v470 = vadd.s32 %v469, 64
  %471 = vset.pattern.permute.xlu0 %v470
  %472 = vperm.xlu0 %471, %v419
  %v473 = vpop.permute.xlu0 %472
  %v474 = vlaneseq
  %v475 = vshrl.u32 %v474, 7
  %v476 = vadd.s32 %v475, 72
  %477 = vset.pattern.permute.xlu0 %v476
  %478 = vperm.xlu0 %477, %v419
  %v479 = vpop.permute.xlu0 %478
  %v480 = vlaneseq
  %v481 = vshrl.u32 %v480, 7
  %v482 = vadd.s32 %v481, 80
  %483 = vset.pattern.permute.xlu0 %v482
  %484 = vperm.xlu0 %483, %v419
  %v485 = vpop.permute.xlu0 %484
  %v486 = vlaneseq
  %v487 = vshrl.u32 %v486, 7
  %v488 = vadd.s32 %v487, 88
  %489 = vset.pattern.permute.xlu0 %v488
  %490 = vperm.xlu0 %489, %v419
  %v491 = vpop.permute.xlu0 %490
  %v492 = vlaneseq
  %v493 = vshrl.u32 %v492, 7
  %v494 = vadd.s32 %v493, 96
  %495 = vset.pattern.permute.xlu0 %v494
  %496 = vperm.xlu0 %495, %v419
  %v497 = vpop.permute.xlu0 %496
  %v498 = vlaneseq
  %v499 = vshrl.u32 %v498, 7
  %v500 = vadd.s32 %v499, 104
  %501 = vset.pattern.permute.xlu0 %v500
  %502 = vperm.xlu0 %501, %v419
  %v503 = vpop.permute.xlu0 %502
  %v504 = vlaneseq
  %v505 = vshrl.u32 %v504, 7
  %v506 = vadd.s32 %v505, 112
  %507 = vset.pattern.permute.xlu0 %v506
  %508 = vperm.xlu0 %507, %v419
  %v509 = vpop.permute.xlu0 %508
  %v510 = vlaneseq
  %v511 = vshrl.u32 %v510, 7
  %v512 = vadd.s32 %v511, 120
  %513 = vset.pattern.permute.xlu0 %v512
  %514 = vperm.xlu0 %513, %v419
  %v515 = vpop.permute.xlu0 %514
  %v516 = vperm.slane %v59, 2
  %v517 = vlaneseq
  %v518 = vshrl.u32 %v517, 7
  %520 = vset.pattern.permute.xlu0 %v518
  %521 = vperm.xlu0 %520, %v516
  %v522 = vpop.permute.xlu0 %521
  %v523 = vlaneseq
  %v524 = vshrl.u32 %v523, 7
  %v525 = vadd.s32 %v524, 8
  %526 = vset.pattern.permute.xlu0 %v525
  %527 = vperm.xlu0 %526, %v516
  %v528 = vpop.permute.xlu0 %527
  %v529 = vlaneseq
  %v530 = vshrl.u32 %v529, 7
  %v531 = vadd.s32 %v530, 16
  %532 = vset.pattern.permute.xlu0 %v531
  %533 = vperm.xlu0 %532, %v516
  %v534 = vpop.permute.xlu0 %533
  %v535 = vlaneseq
  %v536 = vshrl.u32 %v535, 7
  %v537 = vadd.s32 %v536, 24
  %538 = vset.pattern.permute.xlu0 %v537
  %539 = vperm.xlu0 %538, %v516
  %v540 = vpop.permute.xlu0 %539
  %v541 = vlaneseq
  %v542 = vshrl.u32 %v541, 7
  %v543 = vadd.s32 %v542, 32
  %544 = vset.pattern.permute.xlu0 %v543
  %545 = vperm.xlu0 %544, %v516
  %v546 = vpop.permute.xlu0 %545
  %v547 = vlaneseq
  %v548 = vshrl.u32 %v547, 7
  %v549 = vadd.s32 %v548, 40
  %550 = vset.pattern.permute.xlu0 %v549
  %551 = vperm.xlu0 %550, %v516
  %v552 = vpop.permute.xlu0 %551
  %v553 = vlaneseq
  %v554 = vshrl.u32 %v553, 7
  %v555 = vadd.s32 %v554, 48
  %556 = vset.pattern.permute.xlu0 %v555
  %557 = vperm.xlu0 %556, %v516
  %v558 = vpop.permute.xlu0 %557
  %v559 = vlaneseq
  %v560 = vshrl.u32 %v559, 7
  %v561 = vadd.s32 %v560, 56
  %562 = vset.pattern.permute.xlu0 %v561
  %563 = vperm.xlu0 %562, %v516
  %v564 = vpop.permute.xlu0 %563
  %v565 = vlaneseq
  %v566 = vshrl.u32 %v565, 7
  %v567 = vadd.s32 %v566, 64
  %568 = vset.pattern.permute.xlu0 %v567
  %569 = vperm.xlu0 %568, %v516
  %v570 = vpop.permute.xlu0 %569
  %v571 = vlaneseq
  %v572 = vshrl.u32 %v571, 7
  %v573 = vadd.s32 %v572, 72
  %574 = vset.pattern.permute.xlu0 %v573
  %575 = vperm.xlu0 %574, %v516
  %v576 = vpop.permute.xlu0 %575
  %v577 = vlaneseq
  %v578 = vshrl.u32 %v577, 7
  %v579 = vadd.s32 %v578, 80
  %580 = vset.pattern.permute.xlu0 %v579
  %581 = vperm.xlu0 %580, %v516
  %v582 = vpop.permute.xlu0 %581
  %v583 = vlaneseq
  %v584 = vshrl.u32 %v583, 7
  %v585 = vadd.s32 %v584, 88
  %586 = vset.pattern.permute.xlu0 %v585
  %587 = vperm.xlu0 %586, %v516
  %v588 = vpop.permute.xlu0 %587
  %v589 = vlaneseq
  %v590 = vshrl.u32 %v589, 7
  %v591 = vadd.s32 %v590, 96
  %592 = vset.pattern.permute.xlu0 %v591
  %593 = vperm.xlu0 %592, %v516
  %v594 = vpop.permute.xlu0 %593
  %v595 = vlaneseq
  %v596 = vshrl.u32 %v595, 7
  %v597 = vadd.s32 %v596, 104
  %598 = vset.pattern.permute.xlu0 %v597
  %599 = vperm.xlu0 %598, %v516
  %v600 = vpop.permute.xlu0 %599
  %v601 = vlaneseq
  %v602 = vshrl.u32 %v601, 7
  %v603 = vadd.s32 %v602, 112
  %604 = vset.pattern.permute.xlu0 %v603
  %605 = vperm.xlu0 %604, %v516
  %v606 = vpop.permute.xlu0 %605
  %v607 = vlaneseq
  %v608 = vshrl.u32 %v607, 7
  %v609 = vadd.s32 %v608, 120
  %610 = vset.pattern.permute.xlu0 %v609
  %611 = vperm.xlu0 %610, %v516
  %v612 = vpop.permute.xlu0 %611
  %v613 = vperm.slane %v60, 2
  %v614 = vlaneseq
  %v615 = vshrl.u32 %v614, 7
  %617 = vset.pattern.permute.xlu0 %v615
  %618 = vperm.xlu0 %617, %v613
  %v619 = vpop.permute.xlu0 %618
  %v620 = vlaneseq
  %v621 = vshrl.u32 %v620, 7
  %v622 = vadd.s32 %v621, 8
  %623 = vset.pattern.permute.xlu0 %v622
  %624 = vperm.xlu0 %623, %v613
  %v625 = vpop.permute.xlu0 %624
  %v626 = vlaneseq
  %v627 = vshrl.u32 %v626, 7
  %v628 = vadd.s32 %v627, 16
  %629 = vset.pattern.permute.xlu0 %v628
  %630 = vperm.xlu0 %629, %v613
  %v631 = vpop.permute.xlu0 %630
  %v632 = vlaneseq
  %v633 = vshrl.u32 %v632, 7
  %v634 = vadd.s32 %v633, 24
  %635 = vset.pattern.permute.xlu0 %v634
  %636 = vperm.xlu0 %635, %v613
  %v637 = vpop.permute.xlu0 %636
  %v638 = vlaneseq
  %v639 = vshrl.u32 %v638, 7
  %v640 = vadd.s32 %v639, 32
  %641 = vset.pattern.permute.xlu0 %v640
  %642 = vperm.xlu0 %641, %v613
  %v643 = vpop.permute.xlu0 %642
  %v644 = vlaneseq
  %v645 = vshrl.u32 %v644, 7
  %v646 = vadd.s32 %v645, 40
  %647 = vset.pattern.permute.xlu0 %v646
  %648 = vperm.xlu0 %647, %v613
  %v649 = vpop.permute.xlu0 %648
  %v650 = vlaneseq
  %v651 = vshrl.u32 %v650, 7
  %v652 = vadd.s32 %v651, 48
  %653 = vset.pattern.permute.xlu0 %v652
  %654 = vperm.xlu0 %653, %v613
  %v655 = vpop.permute.xlu0 %654
  %v656 = vlaneseq
  %v657 = vshrl.u32 %v656, 7
  %v658 = vadd.s32 %v657, 56
  %659 = vset.pattern.permute.xlu0 %v658
  %660 = vperm.xlu0 %659, %v613
  %v661 = vpop.permute.xlu0 %660
  %v662 = vlaneseq
  %v663 = vshrl.u32 %v662, 7
  %v664 = vadd.s32 %v663, 64
  %665 = vset.pattern.permute.xlu0 %v664
  %666 = vperm.xlu0 %665, %v613
  %v667 = vpop.permute.xlu0 %666
  %v668 = vlaneseq
  %v669 = vshrl.u32 %v668, 7
  %v670 = vadd.s32 %v669, 72
  %671 = vset.pattern.permute.xlu0 %v670
  %672 = vperm.xlu0 %671, %v613
  %v673 = vpop.permute.xlu0 %672
  %v674 = vlaneseq
  %v675 = vshrl.u32 %v674, 7
  %v676 = vadd.s32 %v675, 80
  %677 = vset.pattern.permute.xlu0 %v676
  %678 = vperm.xlu0 %677, %v613
  %v679 = vpop.permute.xlu0 %678
  %v680 = vlaneseq
  %v681 = vshrl.u32 %v680, 7
  %v682 = vadd.s32 %v681, 88
  %683 = vset.pattern.permute.xlu0 %v682
  %684 = vperm.xlu0 %683, %v613
  %v685 = vpop.permute.xlu0 %684
  %v686 = vlaneseq
  %v687 = vshrl.u32 %v686, 7
  %v688 = vadd.s32 %v687, 96
  %689 = vset.pattern.permute.xlu0 %v688
  %690 = vperm.xlu0 %689, %v613
  %v691 = vpop.permute.xlu0 %690
  %v692 = vlaneseq
  %v693 = vshrl.u32 %v692, 7
  %v694 = vadd.s32 %v693, 104
  %695 = vset.pattern.permute.xlu0 %v694
  %696 = vperm.xlu0 %695, %v613
  %v697 = vpop.permute.xlu0 %696
  %v698 = vlaneseq
  %v699 = vshrl.u32 %v698, 7
  %v700 = vadd.s32 %v699, 112
  %701 = vset.pattern.permute.xlu0 %v700
  %702 = vperm.xlu0 %701, %v613
  %v703 = vpop.permute.xlu0 %702
  %v704 = vlaneseq
  %v705 = vshrl.u32 %v704, 7
  %v706 = vadd.s32 %v705, 120
  %707 = vset.pattern.permute.xlu0 %v706
  %708 = vperm.xlu0 %707, %v613
  %v709 = vpop.permute.xlu0 %708
  %v710 = vperm.slane %v59, 3
  %v711 = vlaneseq
  %v712 = vshrl.u32 %v711, 7
  %714 = vset.pattern.permute.xlu0 %v712
  %715 = vperm.xlu0 %714, %v710
  %v716 = vpop.permute.xlu0 %715
  %v717 = vlaneseq
  %v718 = vshrl.u32 %v717, 7
  %v719 = vadd.s32 %v718, 8
  %720 = vset.pattern.permute.xlu0 %v719
  %721 = vperm.xlu0 %720, %v710
  %v722 = vpop.permute.xlu0 %721
  %v723 = vlaneseq
  %v724 = vshrl.u32 %v723, 7
  %v725 = vadd.s32 %v724, 16
  %726 = vset.pattern.permute.xlu0 %v725
  %727 = vperm.xlu0 %726, %v710
  %v728 = vpop.permute.xlu0 %727
  %v729 = vlaneseq
  %v730 = vshrl.u32 %v729, 7
  %v731 = vadd.s32 %v730, 24
  %732 = vset.pattern.permute.xlu0 %v731
  %733 = vperm.xlu0 %732, %v710
  %v734 = vpop.permute.xlu0 %733
  %v735 = vlaneseq
  %v736 = vshrl.u32 %v735, 7
  %v737 = vadd.s32 %v736, 32
  %738 = vset.pattern.permute.xlu0 %v737
  %739 = vperm.xlu0 %738, %v710
  %v740 = vpop.permute.xlu0 %739
  %v741 = vlaneseq
  %v742 = vshrl.u32 %v741, 7
  %v743 = vadd.s32 %v742, 40
  %744 = vset.pattern.permute.xlu0 %v743
  %745 = vperm.xlu0 %744, %v710
  %v746 = vpop.permute.xlu0 %745
  %v747 = vlaneseq
  %v748 = vshrl.u32 %v747, 7
  %v749 = vadd.s32 %v748, 48
  %750 = vset.pattern.permute.xlu0 %v749
  %751 = vperm.xlu0 %750, %v710
  %v752 = vpop.permute.xlu0 %751
  %v753 = vlaneseq
  %v754 = vshrl.u32 %v753, 7
  %v755 = vadd.s32 %v754, 56
  %756 = vset.pattern.permute.xlu0 %v755
  %757 = vperm.xlu0 %756, %v710
  %v758 = vpop.permute.xlu0 %757
  %v759 = vlaneseq
  %v760 = vshrl.u32 %v759, 7
  %v761 = vadd.s32 %v760, 64
  %762 = vset.pattern.permute.xlu0 %v761
  %763 = vperm.xlu0 %762, %v710
  %v764 = vpop.permute.xlu0 %763
  %v765 = vlaneseq
  %v766 = vshrl.u32 %v765, 7
  %v767 = vadd.s32 %v766, 72
  %768 = vset.pattern.permute.xlu0 %v767
  %769 = vperm.xlu0 %768, %v710
  %v770 = vpop.permute.xlu0 %769
  %v771 = vlaneseq
  %v772 = vshrl.u32 %v771, 7
  %v773 = vadd.s32 %v772, 80
  %774 = vset.pattern.permute.xlu0 %v773
  %775 = vperm.xlu0 %774, %v710
  %v776 = vpop.permute.xlu0 %775
  %v777 = vlaneseq
  %v778 = vshrl.u32 %v777, 7
  %v779 = vadd.s32 %v778, 88
  %780 = vset.pattern.permute.xlu0 %v779
  %781 = vperm.xlu0 %780, %v710
  %v782 = vpop.permute.xlu0 %781
  %v783 = vlaneseq
  %v784 = vshrl.u32 %v783, 7
  %v785 = vadd.s32 %v784, 96
  %786 = vset.pattern.permute.xlu0 %v785
  %787 = vperm.xlu0 %786, %v710
  %v788 = vpop.permute.xlu0 %787
  %v789 = vlaneseq
  %v790 = vshrl.u32 %v789, 7
  %v791 = vadd.s32 %v790, 104
  %792 = vset.pattern.permute.xlu0 %v791
  %793 = vperm.xlu0 %792, %v710
  %v794 = vpop.permute.xlu0 %793
  %v795 = vlaneseq
  %v796 = vshrl.u32 %v795, 7
  %v797 = vadd.s32 %v796, 112
  %798 = vset.pattern.permute.xlu0 %v797
  %799 = vperm.xlu0 %798, %v710
  %v800 = vpop.permute.xlu0 %799
  %v801 = vlaneseq
  %v802 = vshrl.u32 %v801, 7
  %v803 = vadd.s32 %v802, 120
  %804 = vset.pattern.permute.xlu0 %v803
  %805 = vperm.xlu0 %804, %v710
  %v806 = vpop.permute.xlu0 %805
  %v807 = vperm.slane %v60, 3
  %v808 = vlaneseq
  %v809 = vshrl.u32 %v808, 7
  %811 = vset.pattern.permute.xlu0 %v809
  %812 = vperm.xlu0 %811, %v807
  %v813 = vpop.permute.xlu0 %812
  %v814 = vlaneseq
  %v815 = vshrl.u32 %v814, 7
  %v816 = vadd.s32 %v815, 8
  %817 = vset.pattern.permute.xlu0 %v816
  %818 = vperm.xlu0 %817, %v807
  %v819 = vpop.permute.xlu0 %818
  %v820 = vlaneseq
  %v821 = vshrl.u32 %v820, 7
  %v822 = vadd.s32 %v821, 16
  %823 = vset.pattern.permute.xlu0 %v822
  %824 = vperm.xlu0 %823, %v807
  %v825 = vpop.permute.xlu0 %824
  %v826 = vlaneseq
  %v827 = vshrl.u32 %v826, 7
  %v828 = vadd.s32 %v827, 24
  %829 = vset.pattern.permute.xlu0 %v828
  %830 = vperm.xlu0 %829, %v807
  %v831 = vpop.permute.xlu0 %830
  %v832 = vlaneseq
  %v833 = vshrl.u32 %v832, 7
  %v834 = vadd.s32 %v833, 32
  %835 = vset.pattern.permute.xlu0 %v834
  %836 = vperm.xlu0 %835, %v807
  %v837 = vpop.permute.xlu0 %836
  %v838 = vlaneseq
  %v839 = vshrl.u32 %v838, 7
  %v840 = vadd.s32 %v839, 40
  %841 = vset.pattern.permute.xlu0 %v840
  %842 = vperm.xlu0 %841, %v807
  %v843 = vpop.permute.xlu0 %842
  %v844 = vlaneseq
  %v845 = vshrl.u32 %v844, 7
  %v846 = vadd.s32 %v845, 48
  %847 = vset.pattern.permute.xlu0 %v846
  %848 = vperm.xlu0 %847, %v807
  %v849 = vpop.permute.xlu0 %848
  %v850 = vlaneseq
  %v851 = vshrl.u32 %v850, 7
  %v852 = vadd.s32 %v851, 56
  %853 = vset.pattern.permute.xlu0 %v852
  %854 = vperm.xlu0 %853, %v807
  %v855 = vpop.permute.xlu0 %854
  %v856 = vlaneseq
  %v857 = vshrl.u32 %v856, 7
  %v858 = vadd.s32 %v857, 64
  %859 = vset.pattern.permute.xlu0 %v858
  %860 = vperm.xlu0 %859, %v807
  %v861 = vpop.permute.xlu0 %860
  %v862 = vlaneseq
  %v863 = vshrl.u32 %v862, 7
  %v864 = vadd.s32 %v863, 72
  %865 = vset.pattern.permute.xlu0 %v864
  %866 = vperm.xlu0 %865, %v807
  %v867 = vpop.permute.xlu0 %866
  %v868 = vlaneseq
  %v869 = vshrl.u32 %v868, 7
  %v870 = vadd.s32 %v869, 80
  %871 = vset.pattern.permute.xlu0 %v870
  %872 = vperm.xlu0 %871, %v807
  %v873 = vpop.permute.xlu0 %872
  %v874 = vlaneseq
  %v875 = vshrl.u32 %v874, 7
  %v876 = vadd.s32 %v875, 88
  %877 = vset.pattern.permute.xlu0 %v876
  %878 = vperm.xlu0 %877, %v807
  %v879 = vpop.permute.xlu0 %878
  %v880 = vlaneseq
  %v881 = vshrl.u32 %v880, 7
  %v882 = vadd.s32 %v881, 96
  %883 = vset.pattern.permute.xlu0 %v882
  %884 = vperm.xlu0 %883, %v807
  %v885 = vpop.permute.xlu0 %884
  %v886 = vlaneseq
  %v887 = vshrl.u32 %v886, 7
  %v888 = vadd.s32 %v887, 104
  %889 = vset.pattern.permute.xlu0 %v888
  %890 = vperm.xlu0 %889, %v807
  %v891 = vpop.permute.xlu0 %890
  %v892 = vlaneseq
  %v893 = vshrl.u32 %v892, 7
  %v894 = vadd.s32 %v893, 112
  %895 = vset.pattern.permute.xlu0 %v894
  %896 = vperm.xlu0 %895, %v807
  %v897 = vpop.permute.xlu0 %896
  %v898 = vlaneseq
  %v899 = vshrl.u32 %v898, 7
  %v900 = vadd.s32 %v899, 120
  %901 = vset.pattern.permute.xlu0 %v900
  %902 = vperm.xlu0 %901, %v807
  %v903 = vpop.permute.xlu0 %902
  %v904 = vperm.slane %v59, 4
  %v905 = vlaneseq
  %v906 = vshrl.u32 %v905, 7
  %908 = vset.pattern.permute.xlu0 %v906
  %909 = vperm.xlu0 %908, %v904
  %v910 = vpop.permute.xlu0 %909
  %v911 = vlaneseq
  %v912 = vshrl.u32 %v911, 7
  %v913 = vadd.s32 %v912, 8
  %914 = vset.pattern.permute.xlu0 %v913
  %915 = vperm.xlu0 %914, %v904
  %v916 = vpop.permute.xlu0 %915
  %v917 = vlaneseq
  %v918 = vshrl.u32 %v917, 7
  %v919 = vadd.s32 %v918, 16
  %920 = vset.pattern.permute.xlu0 %v919
  %921 = vperm.xlu0 %920, %v904
  %v922 = vpop.permute.xlu0 %921
  %v923 = vlaneseq
  %v924 = vshrl.u32 %v923, 7
  %v925 = vadd.s32 %v924, 24
  %926 = vset.pattern.permute.xlu0 %v925
  %927 = vperm.xlu0 %926, %v904
  %v928 = vpop.permute.xlu0 %927
  %v929 = vlaneseq
  %v930 = vshrl.u32 %v929, 7
  %v931 = vadd.s32 %v930, 32
  %932 = vset.pattern.permute.xlu0 %v931
  %933 = vperm.xlu0 %932, %v904
  %v934 = vpop.permute.xlu0 %933
  %v935 = vlaneseq
  %v936 = vshrl.u32 %v935, 7
  %v937 = vadd.s32 %v936, 40
  %938 = vset.pattern.permute.xlu0 %v937
  %939 = vperm.xlu0 %938, %v904
  %v940 = vpop.permute.xlu0 %939
  %v941 = vlaneseq
  %v942 = vshrl.u32 %v941, 7
  %v943 = vadd.s32 %v942, 48
  %944 = vset.pattern.permute.xlu0 %v943
  %945 = vperm.xlu0 %944, %v904
  %v946 = vpop.permute.xlu0 %945
  %v947 = vlaneseq
  %v948 = vshrl.u32 %v947, 7
  %v949 = vadd.s32 %v948, 56
  %950 = vset.pattern.permute.xlu0 %v949
  %951 = vperm.xlu0 %950, %v904
  %v952 = vpop.permute.xlu0 %951
  %v953 = vlaneseq
  %v954 = vshrl.u32 %v953, 7
  %v955 = vadd.s32 %v954, 64
  %956 = vset.pattern.permute.xlu0 %v955
  %957 = vperm.xlu0 %956, %v904
  %v958 = vpop.permute.xlu0 %957
  %v959 = vlaneseq
  %v960 = vshrl.u32 %v959, 7
  %v961 = vadd.s32 %v960, 72
  %962 = vset.pattern.permute.xlu0 %v961
  %963 = vperm.xlu0 %962, %v904
  %v964 = vpop.permute.xlu0 %963
  %v965 = vlaneseq
  %v966 = vshrl.u32 %v965, 7
  %v967 = vadd.s32 %v966, 80
  %968 = vset.pattern.permute.xlu0 %v967
  %969 = vperm.xlu0 %968, %v904
  %v970 = vpop.permute.xlu0 %969
  %v971 = vlaneseq
  %v972 = vshrl.u32 %v971, 7
  %v973 = vadd.s32 %v972, 88
  %974 = vset.pattern.permute.xlu0 %v973
  %975 = vperm.xlu0 %974, %v904
  %v976 = vpop.permute.xlu0 %975
  %v977 = vlaneseq
  %v978 = vshrl.u32 %v977, 7
  %v979 = vadd.s32 %v978, 96
  %980 = vset.pattern.permute.xlu0 %v979
  %981 = vperm.xlu0 %980, %v904
  %v982 = vpop.permute.xlu0 %981
  %v983 = vlaneseq
  %v984 = vshrl.u32 %v983, 7
  %v985 = vadd.s32 %v984, 104
  %986 = vset.pattern.permute.xlu0 %v985
  %987 = vperm.xlu0 %986, %v904
  %v988 = vpop.permute.xlu0 %987
  %v989 = vlaneseq
  %v990 = vshrl.u32 %v989, 7
  %v991 = vadd.s32 %v990, 112
  %992 = vset.pattern.permute.xlu0 %v991
  %993 = vperm.xlu0 %992, %v904
  %v994 = vpop.permute.xlu0 %993
  %v995 = vlaneseq
  %v996 = vshrl.u32 %v995, 7
  %v997 = vadd.s32 %v996, 120
  %998 = vset.pattern.permute.xlu0 %v997
  %999 = vperm.xlu0 %998, %v904
  %v1000 = vpop.permute.xlu0 %999
  %v1001 = vperm.slane %v60, 4
  %v1002 = vlaneseq
  %v1003 = vshrl.u32 %v1002, 7
  %1005 = vset.pattern.permute.xlu0 %v1003
  %1006 = vperm.xlu0 %1005, %v1001
  %v1007 = vpop.permute.xlu0 %1006
  %v1008 = vlaneseq
  %v1009 = vshrl.u32 %v1008, 7
  %v1010 = vadd.s32 %v1009, 8
  %1011 = vset.pattern.permute.xlu0 %v1010
  %1012 = vperm.xlu0 %1011, %v1001
  %v1013 = vpop.permute.xlu0 %1012
  %v1014 = vlaneseq
  %v1015 = vshrl.u32 %v1014, 7
  %v1016 = vadd.s32 %v1015, 16
  %1017 = vset.pattern.permute.xlu0 %v1016
  %1018 = vperm.xlu0 %1017, %v1001
  %v1019 = vpop.permute.xlu0 %1018
  %v1020 = vlaneseq
  %v1021 = vshrl.u32 %v1020, 7
  %v1022 = vadd.s32 %v1021, 24
  %1023 = vset.pattern.permute.xlu0 %v1022
  %1024 = vperm.xlu0 %1023, %v1001
  %v1025 = vpop.permute.xlu0 %1024
  %v1026 = vlaneseq
  %v1027 = vshrl.u32 %v1026, 7
  %v1028 = vadd.s32 %v1027, 32
  %1029 = vset.pattern.permute.xlu0 %v1028
  %1030 = vperm.xlu0 %1029, %v1001
  %v1031 = vpop.permute.xlu0 %1030
  %v1032 = vlaneseq
  %v1033 = vshrl.u32 %v1032, 7
  %v1034 = vadd.s32 %v1033, 40
  %1035 = vset.pattern.permute.xlu0 %v1034
  %1036 = vperm.xlu0 %1035, %v1001
  %v1037 = vpop.permute.xlu0 %1036
  %v1038 = vlaneseq
  %v1039 = vshrl.u32 %v1038, 7
  %v1040 = vadd.s32 %v1039, 48
  %1041 = vset.pattern.permute.xlu0 %v1040
  %1042 = vperm.xlu0 %1041, %v1001
  %v1043 = vpop.permute.xlu0 %1042
  %v1044 = vlaneseq
  %v1045 = vshrl.u32 %v1044, 7
  %v1046 = vadd.s32 %v1045, 56
  %1047 = vset.pattern.permute.xlu0 %v1046
  %1048 = vperm.xlu0 %1047, %v1001
  %v1049 = vpop.permute.xlu0 %1048
  %v1050 = vlaneseq
  %v1051 = vshrl.u32 %v1050, 7
  %v1052 = vadd.s32 %v1051, 64
  %1053 = vset.pattern.permute.xlu0 %v1052
  %1054 = vperm.xlu0 %1053, %v1001
  %v1055 = vpop.permute.xlu0 %1054
  %v1056 = vlaneseq
  %v1057 = vshrl.u32 %v1056, 7
  %v1058 = vadd.s32 %v1057, 72
  %1059 = vset.pattern.permute.xlu0 %v1058
  %1060 = vperm.xlu0 %1059, %v1001
  %v1061 = vpop.permute.xlu0 %1060
  %v1062 = vlaneseq
  %v1063 = vshrl.u32 %v1062, 7
  %v1064 = vadd.s32 %v1063, 80
  %1065 = vset.pattern.permute.xlu0 %v1064
  %1066 = vperm.xlu0 %1065, %v1001
  %v1067 = vpop.permute.xlu0 %1066
  %v1068 = vlaneseq
  %v1069 = vshrl.u32 %v1068, 7
  %v1070 = vadd.s32 %v1069, 88
  %1071 = vset.pattern.permute.xlu0 %v1070
  %1072 = vperm.xlu0 %1071, %v1001
  %v1073 = vpop.permute.xlu0 %1072
  %v1074 = vlaneseq
  %v1075 = vshrl.u32 %v1074, 7
  %v1076 = vadd.s32 %v1075, 96
  %1077 = vset.pattern.permute.xlu0 %v1076
  %1078 = vperm.xlu0 %1077, %v1001
  %v1079 = vpop.permute.xlu0 %1078
  %v1080 = vlaneseq
  %v1081 = vshrl.u32 %v1080, 7
  %v1082 = vadd.s32 %v1081, 104
  %1083 = vset.pattern.permute.xlu0 %v1082
  %1084 = vperm.xlu0 %1083, %v1001
  %v1085 = vpop.permute.xlu0 %1084
  %v1086 = vlaneseq
  %v1087 = vshrl.u32 %v1086, 7
  %v1088 = vadd.s32 %v1087, 112
  %1089 = vset.pattern.permute.xlu0 %v1088
  %1090 = vperm.xlu0 %1089, %v1001
  %v1091 = vpop.permute.xlu0 %1090
  %v1092 = vlaneseq
  %v1093 = vshrl.u32 %v1092, 7
  %v1094 = vadd.s32 %v1093, 120
  %1095 = vset.pattern.permute.xlu0 %v1094
  %1096 = vperm.xlu0 %1095, %v1001
  %v1097 = vpop.permute.xlu0 %1096
  %v1098 = vperm.slane %v59, 5
  %v1099 = vlaneseq
  %v1100 = vshrl.u32 %v1099, 7
  %1102 = vset.pattern.permute.xlu0 %v1100
  %1103 = vperm.xlu0 %1102, %v1098
  %v1104 = vpop.permute.xlu0 %1103
  %v1105 = vlaneseq
  %v1106 = vshrl.u32 %v1105, 7
  %v1107 = vadd.s32 %v1106, 8
  %1108 = vset.pattern.permute.xlu0 %v1107
  %1109 = vperm.xlu0 %1108, %v1098
  %v1110 = vpop.permute.xlu0 %1109
  %v1111 = vlaneseq
  %v1112 = vshrl.u32 %v1111, 7
  %v1113 = vadd.s32 %v1112, 16
  %1114 = vset.pattern.permute.xlu0 %v1113
  %1115 = vperm.xlu0 %1114, %v1098
  %v1116 = vpop.permute.xlu0 %1115
  %v1117 = vlaneseq
  %v1118 = vshrl.u32 %v1117, 7
  %v1119 = vadd.s32 %v1118, 24
  %1120 = vset.pattern.permute.xlu0 %v1119
  %1121 = vperm.xlu0 %1120, %v1098
  %v1122 = vpop.permute.xlu0 %1121
  %v1123 = vlaneseq
  %v1124 = vshrl.u32 %v1123, 7
  %v1125 = vadd.s32 %v1124, 32
  %1126 = vset.pattern.permute.xlu0 %v1125
  %1127 = vperm.xlu0 %1126, %v1098
  %v1128 = vpop.permute.xlu0 %1127
  %v1129 = vlaneseq
  %v1130 = vshrl.u32 %v1129, 7
  %v1131 = vadd.s32 %v1130, 40
  %1132 = vset.pattern.permute.xlu0 %v1131
  %1133 = vperm.xlu0 %1132, %v1098
  %v1134 = vpop.permute.xlu0 %1133
  %v1135 = vlaneseq
  %v1136 = vshrl.u32 %v1135, 7
  %v1137 = vadd.s32 %v1136, 48
  %1138 = vset.pattern.permute.xlu0 %v1137
  %1139 = vperm.xlu0 %1138, %v1098
  %v1140 = vpop.permute.xlu0 %1139
  %v1141 = vlaneseq
  %v1142 = vshrl.u32 %v1141, 7
  %v1143 = vadd.s32 %v1142, 56
  %1144 = vset.pattern.permute.xlu0 %v1143
  %1145 = vperm.xlu0 %1144, %v1098
  %v1146 = vpop.permute.xlu0 %1145
  %v1147 = vlaneseq
  %v1148 = vshrl.u32 %v1147, 7
  %v1149 = vadd.s32 %v1148, 64
  %1150 = vset.pattern.permute.xlu0 %v1149
  %1151 = vperm.xlu0 %1150, %v1098
  %v1152 = vpop.permute.xlu0 %1151
  %v1153 = vlaneseq
  %v1154 = vshrl.u32 %v1153, 7
  %v1155 = vadd.s32 %v1154, 72
  %1156 = vset.pattern.permute.xlu0 %v1155
  %1157 = vperm.xlu0 %1156, %v1098
  %v1158 = vpop.permute.xlu0 %1157
  %v1159 = vlaneseq
  %v1160 = vshrl.u32 %v1159, 7
  %v1161 = vadd.s32 %v1160, 80
  %1162 = vset.pattern.permute.xlu0 %v1161
  %1163 = vperm.xlu0 %1162, %v1098
  %v1164 = vpop.permute.xlu0 %1163
  %v1165 = vlaneseq
  %v1166 = vshrl.u32 %v1165, 7
  %v1167 = vadd.s32 %v1166, 88
  %1168 = vset.pattern.permute.xlu0 %v1167
  %1169 = vperm.xlu0 %1168, %v1098
  %v1170 = vpop.permute.xlu0 %1169
  %v1171 = vlaneseq
  %v1172 = vshrl.u32 %v1171, 7
  %v1173 = vadd.s32 %v1172, 96
  %1174 = vset.pattern.permute.xlu0 %v1173
  %1175 = vperm.xlu0 %1174, %v1098
  %v1176 = vpop.permute.xlu0 %1175
  %v1177 = vlaneseq
  %v1178 = vshrl.u32 %v1177, 7
  %v1179 = vadd.s32 %v1178, 104
  %1180 = vset.pattern.permute.xlu0 %v1179
  %1181 = vperm.xlu0 %1180, %v1098
  %v1182 = vpop.permute.xlu0 %1181
  %v1183 = vlaneseq
  %v1184 = vshrl.u32 %v1183, 7
  %v1185 = vadd.s32 %v1184, 112
  %1186 = vset.pattern.permute.xlu0 %v1185
  %1187 = vperm.xlu0 %1186, %v1098
  %v1188 = vpop.permute.xlu0 %1187
  %v1189 = vlaneseq
  %v1190 = vshrl.u32 %v1189, 7
  %v1191 = vadd.s32 %v1190, 120
  %1192 = vset.pattern.permute.xlu0 %v1191
  %1193 = vperm.xlu0 %1192, %v1098
  %v1194 = vpop.permute.xlu0 %1193
  %v1195 = vperm.slane %v60, 5
  %v1196 = vlaneseq
  %v1197 = vshrl.u32 %v1196, 7
  %1199 = vset.pattern.permute.xlu0 %v1197
  %1200 = vperm.xlu0 %1199, %v1195
  %v1201 = vpop.permute.xlu0 %1200
  %v1202 = vlaneseq
  %v1203 = vshrl.u32 %v1202, 7
  %v1204 = vadd.s32 %v1203, 8
  %1205 = vset.pattern.permute.xlu0 %v1204
  %1206 = vperm.xlu0 %1205, %v1195
  %v1207 = vpop.permute.xlu0 %1206
  %v1208 = vlaneseq
  %v1209 = vshrl.u32 %v1208, 7
  %v1210 = vadd.s32 %v1209, 16
  %1211 = vset.pattern.permute.xlu0 %v1210
  %1212 = vperm.xlu0 %1211, %v1195
  %v1213 = vpop.permute.xlu0 %1212
  %v1214 = vlaneseq
  %v1215 = vshrl.u32 %v1214, 7
  %v1216 = vadd.s32 %v1215, 24
  %1217 = vset.pattern.permute.xlu0 %v1216
  %1218 = vperm.xlu0 %1217, %v1195
  %v1219 = vpop.permute.xlu0 %1218
  %v1220 = vlaneseq
  %v1221 = vshrl.u32 %v1220, 7
  %v1222 = vadd.s32 %v1221, 32
  %1223 = vset.pattern.permute.xlu0 %v1222
  %1224 = vperm.xlu0 %1223, %v1195
  %v1225 = vpop.permute.xlu0 %1224
  %v1226 = vlaneseq
  %v1227 = vshrl.u32 %v1226, 7
  %v1228 = vadd.s32 %v1227, 40
  %1229 = vset.pattern.permute.xlu0 %v1228
  %1230 = vperm.xlu0 %1229, %v1195
  %v1231 = vpop.permute.xlu0 %1230
  %v1232 = vlaneseq
  %v1233 = vshrl.u32 %v1232, 7
  %v1234 = vadd.s32 %v1233, 48
  %1235 = vset.pattern.permute.xlu0 %v1234
  %1236 = vperm.xlu0 %1235, %v1195
  %v1237 = vpop.permute.xlu0 %1236
  %v1238 = vlaneseq
  %v1239 = vshrl.u32 %v1238, 7
  %v1240 = vadd.s32 %v1239, 56
  %1241 = vset.pattern.permute.xlu0 %v1240
  %1242 = vperm.xlu0 %1241, %v1195
  %v1243 = vpop.permute.xlu0 %1242
  %v1244 = vlaneseq
  %v1245 = vshrl.u32 %v1244, 7
  %v1246 = vadd.s32 %v1245, 64
  %1247 = vset.pattern.permute.xlu0 %v1246
  %1248 = vperm.xlu0 %1247, %v1195
  %v1249 = vpop.permute.xlu0 %1248
  %v1250 = vlaneseq
  %v1251 = vshrl.u32 %v1250, 7
  %v1252 = vadd.s32 %v1251, 72
  %1253 = vset.pattern.permute.xlu0 %v1252
  %1254 = vperm.xlu0 %1253, %v1195
  %v1255 = vpop.permute.xlu0 %1254
  %v1256 = vlaneseq
  %v1257 = vshrl.u32 %v1256, 7
  %v1258 = vadd.s32 %v1257, 80
  %1259 = vset.pattern.permute.xlu0 %v1258
  %1260 = vperm.xlu0 %1259, %v1195
  %v1261 = vpop.permute.xlu0 %1260
  %v1262 = vlaneseq
  %v1263 = vshrl.u32 %v1262, 7
  %v1264 = vadd.s32 %v1263, 88
  %1265 = vset.pattern.permute.xlu0 %v1264
  %1266 = vperm.xlu0 %1265, %v1195
  %v1267 = vpop.permute.xlu0 %1266
  %v1268 = vlaneseq
  %v1269 = vshrl.u32 %v1268, 7
  %v1270 = vadd.s32 %v1269, 96
  %1271 = vset.pattern.permute.xlu0 %v1270
  %1272 = vperm.xlu0 %1271, %v1195
  %v1273 = vpop.permute.xlu0 %1272
  %v1274 = vlaneseq
  %v1275 = vshrl.u32 %v1274, 7
  %v1276 = vadd.s32 %v1275, 104
  %1277 = vset.pattern.permute.xlu0 %v1276
  %1278 = vperm.xlu0 %1277, %v1195
  %v1279 = vpop.permute.xlu0 %1278
  %v1280 = vlaneseq
  %v1281 = vshrl.u32 %v1280, 7
  %v1282 = vadd.s32 %v1281, 112
  %1283 = vset.pattern.permute.xlu0 %v1282
  %1284 = vperm.xlu0 %1283, %v1195
  %v1285 = vpop.permute.xlu0 %1284
  %v1286 = vlaneseq
  %v1287 = vshrl.u32 %v1286, 7
  %v1288 = vadd.s32 %v1287, 120
  %1289 = vset.pattern.permute.xlu0 %v1288
  %1290 = vperm.xlu0 %1289, %v1195
  %v1291 = vpop.permute.xlu0 %1290
  %v1292 = vperm.slane %v59, 6
  %v1293 = vlaneseq
  %v1294 = vshrl.u32 %v1293, 7
  %1296 = vset.pattern.permute.xlu0 %v1294
  %1297 = vperm.xlu0 %1296, %v1292
  %v1298 = vpop.permute.xlu0 %1297
  %v1299 = vlaneseq
  %v1300 = vshrl.u32 %v1299, 7
  %v1301 = vadd.s32 %v1300, 8
  %1302 = vset.pattern.permute.xlu0 %v1301
  %1303 = vperm.xlu0 %1302, %v1292
  %v1304 = vpop.permute.xlu0 %1303
  %v1305 = vlaneseq
  %v1306 = vshrl.u32 %v1305, 7
  %v1307 = vadd.s32 %v1306, 16
  %1308 = vset.pattern.permute.xlu0 %v1307
  %1309 = vperm.xlu0 %1308, %v1292
  %v1310 = vpop.permute.xlu0 %1309
  %v1311 = vlaneseq
  %v1312 = vshrl.u32 %v1311, 7
  %v1313 = vadd.s32 %v1312, 24
  %1314 = vset.pattern.permute.xlu0 %v1313
  %1315 = vperm.xlu0 %1314, %v1292
  %v1316 = vpop.permute.xlu0 %1315
  %v1317 = vlaneseq
  %v1318 = vshrl.u32 %v1317, 7
  %v1319 = vadd.s32 %v1318, 32
  %1320 = vset.pattern.permute.xlu0 %v1319
  %1321 = vperm.xlu0 %1320, %v1292
  %v1322 = vpop.permute.xlu0 %1321
  %v1323 = vlaneseq
  %v1324 = vshrl.u32 %v1323, 7
  %v1325 = vadd.s32 %v1324, 40
  %1326 = vset.pattern.permute.xlu0 %v1325
  %1327 = vperm.xlu0 %1326, %v1292
  %v1328 = vpop.permute.xlu0 %1327
  %v1329 = vlaneseq
  %v1330 = vshrl.u32 %v1329, 7
  %v1331 = vadd.s32 %v1330, 48
  %1332 = vset.pattern.permute.xlu0 %v1331
  %1333 = vperm.xlu0 %1332, %v1292
  %v1334 = vpop.permute.xlu0 %1333
  %v1335 = vlaneseq
  %v1336 = vshrl.u32 %v1335, 7
  %v1337 = vadd.s32 %v1336, 56
  %1338 = vset.pattern.permute.xlu0 %v1337
  %1339 = vperm.xlu0 %1338, %v1292
  %v1340 = vpop.permute.xlu0 %1339
  %v1341 = vlaneseq
  %v1342 = vshrl.u32 %v1341, 7
  %v1343 = vadd.s32 %v1342, 64
  %1344 = vset.pattern.permute.xlu0 %v1343
  %1345 = vperm.xlu0 %1344, %v1292
  %v1346 = vpop.permute.xlu0 %1345
  %v1347 = vlaneseq
  %v1348 = vshrl.u32 %v1347, 7
  %v1349 = vadd.s32 %v1348, 72
  %1350 = vset.pattern.permute.xlu0 %v1349
  %1351 = vperm.xlu0 %1350, %v1292
  %v1352 = vpop.permute.xlu0 %1351
  %v1353 = vlaneseq
  %v1354 = vshrl.u32 %v1353, 7
  %v1355 = vadd.s32 %v1354, 80
  %1356 = vset.pattern.permute.xlu0 %v1355
  %1357 = vperm.xlu0 %1356, %v1292
  %v1358 = vpop.permute.xlu0 %1357
  %v1359 = vlaneseq
  %v1360 = vshrl.u32 %v1359, 7
  %v1361 = vadd.s32 %v1360, 88
  %1362 = vset.pattern.permute.xlu0 %v1361
  %1363 = vperm.xlu0 %1362, %v1292
  %v1364 = vpop.permute.xlu0 %1363
  %v1365 = vlaneseq
  %v1366 = vshrl.u32 %v1365, 7
  %v1367 = vadd.s32 %v1366, 96
  %1368 = vset.pattern.permute.xlu0 %v1367
  %1369 = vperm.xlu0 %1368, %v1292
  %v1370 = vpop.permute.xlu0 %1369
  %v1371 = vlaneseq
  %v1372 = vshrl.u32 %v1371, 7
  %v1373 = vadd.s32 %v1372, 104
  %1374 = vset.pattern.permute.xlu0 %v1373
  %1375 = vperm.xlu0 %1374, %v1292
  %v1376 = vpop.permute.xlu0 %1375
  %v1377 = vlaneseq
  %v1378 = vshrl.u32 %v1377, 7
  %v1379 = vadd.s32 %v1378, 112
  %1380 = vset.pattern.permute.xlu0 %v1379
  %1381 = vperm.xlu0 %1380, %v1292
  %v1382 = vpop.permute.xlu0 %1381
  %v1383 = vlaneseq
  %v1384 = vshrl.u32 %v1383, 7
  %v1385 = vadd.s32 %v1384, 120
  %1386 = vset.pattern.permute.xlu0 %v1385
  %1387 = vperm.xlu0 %1386, %v1292
  %v1388 = vpop.permute.xlu0 %1387
  %v1389 = vperm.slane %v60, 6
  %v1390 = vlaneseq
  %v1391 = vshrl.u32 %v1390, 7
  %1393 = vset.pattern.permute.xlu0 %v1391
  %1394 = vperm.xlu0 %1393, %v1389
  %v1395 = vpop.permute.xlu0 %1394
  %v1396 = vlaneseq
  %v1397 = vshrl.u32 %v1396, 7
  %v1398 = vadd.s32 %v1397, 8
  %1399 = vset.pattern.permute.xlu0 %v1398
  %1400 = vperm.xlu0 %1399, %v1389
  %v1401 = vpop.permute.xlu0 %1400
  %v1402 = vlaneseq
  %v1403 = vshrl.u32 %v1402, 7
  %v1404 = vadd.s32 %v1403, 16
  %1405 = vset.pattern.permute.xlu0 %v1404
  %1406 = vperm.xlu0 %1405, %v1389
  %v1407 = vpop.permute.xlu0 %1406
  %v1408 = vlaneseq
  %v1409 = vshrl.u32 %v1408, 7
  %v1410 = vadd.s32 %v1409, 24
  %1411 = vset.pattern.permute.xlu0 %v1410
  %1412 = vperm.xlu0 %1411, %v1389
  %v1413 = vpop.permute.xlu0 %1412
  %v1414 = vlaneseq
  %v1415 = vshrl.u32 %v1414, 7
  %v1416 = vadd.s32 %v1415, 32
  %1417 = vset.pattern.permute.xlu0 %v1416
  %1418 = vperm.xlu0 %1417, %v1389
  %v1419 = vpop.permute.xlu0 %1418
  %v1420 = vlaneseq
  %v1421 = vshrl.u32 %v1420, 7
  %v1422 = vadd.s32 %v1421, 40
  %1423 = vset.pattern.permute.xlu0 %v1422
  %1424 = vperm.xlu0 %1423, %v1389
  %v1425 = vpop.permute.xlu0 %1424
  %v1426 = vlaneseq
  %v1427 = vshrl.u32 %v1426, 7
  %v1428 = vadd.s32 %v1427, 48
  %1429 = vset.pattern.permute.xlu0 %v1428
  %1430 = vperm.xlu0 %1429, %v1389
  %v1431 = vpop.permute.xlu0 %1430
  %v1432 = vlaneseq
  %v1433 = vshrl.u32 %v1432, 7
  %v1434 = vadd.s32 %v1433, 56
  %1435 = vset.pattern.permute.xlu0 %v1434
  %1436 = vperm.xlu0 %1435, %v1389
  %v1437 = vpop.permute.xlu0 %1436
  %v1438 = vlaneseq
  %v1439 = vshrl.u32 %v1438, 7
  %v1440 = vadd.s32 %v1439, 64
  %1441 = vset.pattern.permute.xlu0 %v1440
  %1442 = vperm.xlu0 %1441, %v1389
  %v1443 = vpop.permute.xlu0 %1442
  %v1444 = vlaneseq
  %v1445 = vshrl.u32 %v1444, 7
  %v1446 = vadd.s32 %v1445, 72
  %1447 = vset.pattern.permute.xlu0 %v1446
  %1448 = vperm.xlu0 %1447, %v1389
  %v1449 = vpop.permute.xlu0 %1448
  %v1450 = vlaneseq
  %v1451 = vshrl.u32 %v1450, 7
  %v1452 = vadd.s32 %v1451, 80
  %1453 = vset.pattern.permute.xlu0 %v1452
  %1454 = vperm.xlu0 %1453, %v1389
  %v1455 = vpop.permute.xlu0 %1454
  %v1456 = vlaneseq
  %v1457 = vshrl.u32 %v1456, 7
  %v1458 = vadd.s32 %v1457, 88
  %1459 = vset.pattern.permute.xlu0 %v1458
  %1460 = vperm.xlu0 %1459, %v1389
  %v1461 = vpop.permute.xlu0 %1460
  %v1462 = vlaneseq
  %v1463 = vshrl.u32 %v1462, 7
  %v1464 = vadd.s32 %v1463, 96
  %1465 = vset.pattern.permute.xlu0 %v1464
  %1466 = vperm.xlu0 %1465, %v1389
  %v1467 = vpop.permute.xlu0 %1466
  %v1468 = vlaneseq
  %v1469 = vshrl.u32 %v1468, 7
  %v1470 = vadd.s32 %v1469, 104
  %1471 = vset.pattern.permute.xlu0 %v1470
  %1472 = vperm.xlu0 %1471, %v1389
  %v1473 = vpop.permute.xlu0 %1472
  %v1474 = vlaneseq
  %v1475 = vshrl.u32 %v1474, 7
  %v1476 = vadd.s32 %v1475, 112
  %1477 = vset.pattern.permute.xlu0 %v1476
  %1478 = vperm.xlu0 %1477, %v1389
  %v1479 = vpop.permute.xlu0 %1478
  %v1480 = vlaneseq
  %v1481 = vshrl.u32 %v1480, 7
  %v1482 = vadd.s32 %v1481, 120
  %1483 = vset.pattern.permute.xlu0 %v1482
  %1484 = vperm.xlu0 %1483, %v1389
  %v1485 = vpop.permute.xlu0 %1484
  %v1486 = vperm.slane %v59, 7
  %v1487 = vlaneseq
  %v1488 = vshrl.u32 %v1487, 7
  %1490 = vset.pattern.permute.xlu0 %v1488
  %1491 = vperm.xlu0 %1490, %v1486
  %v1492 = vpop.permute.xlu0 %1491
  %v1493 = vlaneseq
  %v1494 = vshrl.u32 %v1493, 7
  %v1495 = vadd.s32 %v1494, 8
  %1496 = vset.pattern.permute.xlu0 %v1495
  %1497 = vperm.xlu0 %1496, %v1486
  %v1498 = vpop.permute.xlu0 %1497
  %v1499 = vlaneseq
  %v1500 = vshrl.u32 %v1499, 7
  %v1501 = vadd.s32 %v1500, 16
  %1502 = vset.pattern.permute.xlu0 %v1501
  %1503 = vperm.xlu0 %1502, %v1486
  %v1504 = vpop.permute.xlu0 %1503
  %v1505 = vlaneseq
  %v1506 = vshrl.u32 %v1505, 7
  %v1507 = vadd.s32 %v1506, 24
  %1508 = vset.pattern.permute.xlu0 %v1507
  %1509 = vperm.xlu0 %1508, %v1486
  %v1510 = vpop.permute.xlu0 %1509
  %v1511 = vlaneseq
  %v1512 = vshrl.u32 %v1511, 7
  %v1513 = vadd.s32 %v1512, 32
  %1514 = vset.pattern.permute.xlu0 %v1513
  %1515 = vperm.xlu0 %1514, %v1486
  %v1516 = vpop.permute.xlu0 %1515
  %v1517 = vlaneseq
  %v1518 = vshrl.u32 %v1517, 7
  %v1519 = vadd.s32 %v1518, 40
  %1520 = vset.pattern.permute.xlu0 %v1519
  %1521 = vperm.xlu0 %1520, %v1486
  %v1522 = vpop.permute.xlu0 %1521
  %v1523 = vlaneseq
  %v1524 = vshrl.u32 %v1523, 7
  %v1525 = vadd.s32 %v1524, 48
  %1526 = vset.pattern.permute.xlu0 %v1525
  %1527 = vperm.xlu0 %1526, %v1486
  %v1528 = vpop.permute.xlu0 %1527
  %v1529 = vlaneseq
  %v1530 = vshrl.u32 %v1529, 7
  %v1531 = vadd.s32 %v1530, 56
  %1532 = vset.pattern.permute.xlu0 %v1531
  %1533 = vperm.xlu0 %1532, %v1486
  %v1534 = vpop.permute.xlu0 %1533
  %v1535 = vlaneseq
  %v1536 = vshrl.u32 %v1535, 7
  %v1537 = vadd.s32 %v1536, 64
  %1538 = vset.pattern.permute.xlu0 %v1537
  %1539 = vperm.xlu0 %1538, %v1486
  %v1540 = vpop.permute.xlu0 %1539
  %v1541 = vlaneseq
  %v1542 = vshrl.u32 %v1541, 7
  %v1543 = vadd.s32 %v1542, 72
  %1544 = vset.pattern.permute.xlu0 %v1543
  %1545 = vperm.xlu0 %1544, %v1486
  %v1546 = vpop.permute.xlu0 %1545
  %v1547 = vlaneseq
  %v1548 = vshrl.u32 %v1547, 7
  %v1549 = vadd.s32 %v1548, 80
  %1550 = vset.pattern.permute.xlu0 %v1549
  %1551 = vperm.xlu0 %1550, %v1486
  %v1552 = vpop.permute.xlu0 %1551
  %v1553 = vlaneseq
  %v1554 = vshrl.u32 %v1553, 7
  %v1555 = vadd.s32 %v1554, 88
  %1556 = vset.pattern.permute.xlu0 %v1555
  %1557 = vperm.xlu0 %1556, %v1486
  %v1558 = vpop.permute.xlu0 %1557
  %v1559 = vlaneseq
  %v1560 = vshrl.u32 %v1559, 7
  %v1561 = vadd.s32 %v1560, 96
  %1562 = vset.pattern.permute.xlu0 %v1561
  %1563 = vperm.xlu0 %1562, %v1486
  %v1564 = vpop.permute.xlu0 %1563
  %v1565 = vlaneseq
  %v1566 = vshrl.u32 %v1565, 7
  %v1567 = vadd.s32 %v1566, 104
  %1568 = vset.pattern.permute.xlu0 %v1567
  %1569 = vperm.xlu0 %1568, %v1486
  %v1570 = vpop.permute.xlu0 %1569
  %v1571 = vlaneseq
  %v1572 = vshrl.u32 %v1571, 7
  %v1573 = vadd.s32 %v1572, 112
  %1574 = vset.pattern.permute.xlu0 %v1573
  %1575 = vperm.xlu0 %1574, %v1486
  %v1576 = vpop.permute.xlu0 %1575
  %v1577 = vlaneseq
  %v1578 = vshrl.u32 %v1577, 7
  %v1579 = vadd.s32 %v1578, 120
  %1580 = vset.pattern.permute.xlu0 %v1579
  %1581 = vperm.xlu0 %1580, %v1486
  %v1582 = vpop.permute.xlu0 %1581
  %v1583 = vperm.slane %v60, 7
  %v1584 = vlaneseq
  %v1585 = vshrl.u32 %v1584, 7
  %1587 = vset.pattern.permute.xlu0 %v1585
  %1588 = vperm.xlu0 %1587, %v1583
  %v1589 = vpop.permute.xlu0 %1588
  %v1590 = vlaneseq
  %v1591 = vshrl.u32 %v1590, 7
  %v1592 = vadd.s32 %v1591, 8
  %1593 = vset.pattern.permute.xlu0 %v1592
  %1594 = vperm.xlu0 %1593, %v1583
  %v1595 = vpop.permute.xlu0 %1594
  %v1596 = vlaneseq
  %v1597 = vshrl.u32 %v1596, 7
  %v1598 = vadd.s32 %v1597, 16
  %1599 = vset.pattern.permute.xlu0 %v1598
  %1600 = vperm.xlu0 %1599, %v1583
  %v1601 = vpop.permute.xlu0 %1600
  %v1602 = vlaneseq
  %v1603 = vshrl.u32 %v1602, 7
  %v1604 = vadd.s32 %v1603, 24
  %1605 = vset.pattern.permute.xlu0 %v1604
  %1606 = vperm.xlu0 %1605, %v1583
  %v1607 = vpop.permute.xlu0 %1606
  %v1608 = vlaneseq
  %v1609 = vshrl.u32 %v1608, 7
  %v1610 = vadd.s32 %v1609, 32
  %1611 = vset.pattern.permute.xlu0 %v1610
  %1612 = vperm.xlu0 %1611, %v1583
  %v1613 = vpop.permute.xlu0 %1612
  %v1614 = vlaneseq
  %v1615 = vshrl.u32 %v1614, 7
  %v1616 = vadd.s32 %v1615, 40
  %1617 = vset.pattern.permute.xlu0 %v1616
  %1618 = vperm.xlu0 %1617, %v1583
  %v1619 = vpop.permute.xlu0 %1618
  %v1620 = vlaneseq
  %v1621 = vshrl.u32 %v1620, 7
  %v1622 = vadd.s32 %v1621, 48
  %1623 = vset.pattern.permute.xlu0 %v1622
  %1624 = vperm.xlu0 %1623, %v1583
  %v1625 = vpop.permute.xlu0 %1624
  %v1626 = vlaneseq
  %v1627 = vshrl.u32 %v1626, 7
  %v1628 = vadd.s32 %v1627, 56
  %1629 = vset.pattern.permute.xlu0 %v1628
  %1630 = vperm.xlu0 %1629, %v1583
  %v1631 = vpop.permute.xlu0 %1630
  %v1632 = vlaneseq
  %v1633 = vshrl.u32 %v1632, 7
  %v1634 = vadd.s32 %v1633, 64
  %1635 = vset.pattern.permute.xlu0 %v1634
  %1636 = vperm.xlu0 %1635, %v1583
  %v1637 = vpop.permute.xlu0 %1636
  %v1638 = vlaneseq
  %v1639 = vshrl.u32 %v1638, 7
  %v1640 = vadd.s32 %v1639, 72
  %1641 = vset.pattern.permute.xlu0 %v1640
  %1642 = vperm.xlu0 %1641, %v1583
  %v1643 = vpop.permute.xlu0 %1642
  %v1644 = vlaneseq
  %v1645 = vshrl.u32 %v1644, 7
  %v1646 = vadd.s32 %v1645, 80
  %1647 = vset.pattern.permute.xlu0 %v1646
  %1648 = vperm.xlu0 %1647, %v1583
  %v1649 = vpop.permute.xlu0 %1648
  %v1650 = vlaneseq
  %v1651 = vshrl.u32 %v1650, 7
  %v1652 = vadd.s32 %v1651, 88
  %1653 = vset.pattern.permute.xlu0 %v1652
  %1654 = vperm.xlu0 %1653, %v1583
  %v1655 = vpop.permute.xlu0 %1654
  %v1656 = vlaneseq
  %v1657 = vshrl.u32 %v1656, 7
  %v1658 = vadd.s32 %v1657, 96
  %1659 = vset.pattern.permute.xlu0 %v1658
  %1660 = vperm.xlu0 %1659, %v1583
  %v1661 = vpop.permute.xlu0 %1660
  %v1662 = vlaneseq
  %v1663 = vshrl.u32 %v1662, 7
  %v1664 = vadd.s32 %v1663, 104
  %1665 = vset.pattern.permute.xlu0 %v1664
  %1666 = vperm.xlu0 %1665, %v1583
  %v1667 = vpop.permute.xlu0 %1666
  %v1668 = vlaneseq
  %v1669 = vshrl.u32 %v1668, 7
  %v1670 = vadd.s32 %v1669, 112
  %1671 = vset.pattern.permute.xlu0 %v1670
  %1672 = vperm.xlu0 %1671, %v1583
  %v1673 = vpop.permute.xlu0 %1672
  %v1674 = vlaneseq
  %v1675 = vshrl.u32 %v1674, 7
  %v1676 = vadd.s32 %v1675, 120
  %1677 = vset.pattern.permute.xlu0 %v1676
  %1678 = vperm.xlu0 %1677, %v1583
  %v1679 = vpop.permute.xlu0 %1678
  %v1681 = vperm.slane %v40, 0
  %v1683 = vmul.f32 %v134, %v1681
  %v1684 = vmul.f32 %v140, %v1681
  %v1685 = vmul.f32 %v146, %v1681
  %v1686 = vmul.f32 %v152, %v1681
  %v1687 = vmul.f32 %v158, %v1681
  %v1688 = vmul.f32 %v164, %v1681
  %v1689 = vmul.f32 %v170, %v1681
  %v1690 = vmul.f32 %v176, %v1681
  %v1691 = vmul.f32 %v182, %v1681
  %v1692 = vmul.f32 %v188, %v1681
  %v1693 = vmul.f32 %v194, %v1681
  %v1694 = vmul.f32 %v200, %v1681
  %v1695 = vmul.f32 %v206, %v1681
  %v1696 = vmul.f32 %v212, %v1681
  %v1697 = vmul.f32 %v218, %v1681
  %v1698 = vmul.f32 %v224, %v1681
  %v1699 = vmul.f32 %v231, %v1681
  %v1700 = vmul.f32 %v237, %v1681
  %v1701 = vmul.f32 %v243, %v1681
  %v1702 = vmul.f32 %v249, %v1681
  %v1703 = vmul.f32 %v255, %v1681
  %v1704 = vmul.f32 %v261, %v1681
  %v1705 = vmul.f32 %v267, %v1681
  %v1706 = vmul.f32 %v273, %v1681
  %v1707 = vmul.f32 %v279, %v1681
  %v1708 = vmul.f32 %v285, %v1681
  %v1709 = vmul.f32 %v291, %v1681
  %v1710 = vmul.f32 %v297, %v1681
  %v1711 = vmul.f32 %v303, %v1681
  %v1712 = vmul.f32 %v309, %v1681
  %v1713 = vmul.f32 %v315, %v1681
  %v1714 = vmul.f32 %v321, %v1681
  %v1715 = vmul.f32 %v328, %v1681
  %v1716 = vmul.f32 %v334, %v1681
  %v1717 = vmul.f32 %v340, %v1681
  %v1718 = vmul.f32 %v346, %v1681
  %v1719 = vmul.f32 %v352, %v1681
  %v1720 = vmul.f32 %v358, %v1681
  %v1721 = vmul.f32 %v364, %v1681
  %v1722 = vmul.f32 %v370, %v1681
  %v1723 = vmul.f32 %v376, %v1681
  %v1724 = vmul.f32 %v382, %v1681
  %v1725 = vmul.f32 %v388, %v1681
  %v1726 = vmul.f32 %v394, %v1681
  %v1727 = vmul.f32 %v400, %v1681
  %v1728 = vmul.f32 %v406, %v1681
  %v1729 = vmul.f32 %v412, %v1681
  %v1730 = vmul.f32 %v418, %v1681
  %v1731 = vmul.f32 %v425, %v1681
  %v1732 = vmul.f32 %v431, %v1681
  %v1733 = vmul.f32 %v437, %v1681
  %v1734 = vmul.f32 %v443, %v1681
  %v1735 = vmul.f32 %v449, %v1681
  %v1736 = vmul.f32 %v455, %v1681
  %v1737 = vmul.f32 %v461, %v1681
  %v1738 = vmul.f32 %v467, %v1681
  %v1739 = vmul.f32 %v473, %v1681
  %v1740 = vmul.f32 %v479, %v1681
  %v1741 = vmul.f32 %v485, %v1681
  %v1742 = vmul.f32 %v491, %v1681
  %v1743 = vmul.f32 %v497, %v1681
  %v1744 = vmul.f32 %v503, %v1681
  %v1745 = vmul.f32 %v509, %v1681
  %v1746 = vmul.f32 %v515, %v1681
  %v1747 = vmul.f32 %v522, %v1681
  %v1748 = vmul.f32 %v528, %v1681
  %v1749 = vmul.f32 %v534, %v1681
  %v1750 = vmul.f32 %v540, %v1681
  %v1751 = vmul.f32 %v546, %v1681
  %v1752 = vmul.f32 %v552, %v1681
  %v1753 = vmul.f32 %v558, %v1681
  %v1754 = vmul.f32 %v564, %v1681
  %v1755 = vmul.f32 %v570, %v1681
  %v1756 = vmul.f32 %v576, %v1681
  %v1757 = vmul.f32 %v582, %v1681
  %v1758 = vmul.f32 %v588, %v1681
  %v1759 = vmul.f32 %v594, %v1681
  %v1760 = vmul.f32 %v600, %v1681
  %v1761 = vmul.f32 %v606, %v1681
  %v1762 = vmul.f32 %v612, %v1681
  %v1763 = vmul.f32 %v619, %v1681
  %v1764 = vmul.f32 %v625, %v1681
  %v1765 = vmul.f32 %v631, %v1681
  %v1766 = vmul.f32 %v637, %v1681
  %v1767 = vmul.f32 %v643, %v1681
  %v1768 = vmul.f32 %v649, %v1681
  %v1769 = vmul.f32 %v655, %v1681
  %v1770 = vmul.f32 %v661, %v1681
  %v1771 = vmul.f32 %v667, %v1681
  %v1772 = vmul.f32 %v673, %v1681
  %v1773 = vmul.f32 %v679, %v1681
  %v1774 = vmul.f32 %v685, %v1681
  %v1775 = vmul.f32 %v691, %v1681
  %v1776 = vmul.f32 %v697, %v1681
  %v1777 = vmul.f32 %v703, %v1681
  %v1778 = vmul.f32 %v709, %v1681
  %v1779 = vmul.f32 %v716, %v1681
  %v1780 = vmul.f32 %v722, %v1681
  %v1781 = vmul.f32 %v728, %v1681
  %v1782 = vmul.f32 %v734, %v1681
  %v1783 = vmul.f32 %v740, %v1681
  %v1784 = vmul.f32 %v746, %v1681
  %v1785 = vmul.f32 %v752, %v1681
  %v1786 = vmul.f32 %v758, %v1681
  %v1787 = vmul.f32 %v764, %v1681
  %v1788 = vmul.f32 %v770, %v1681
  %v1789 = vmul.f32 %v776, %v1681
  %v1790 = vmul.f32 %v782, %v1681
  %v1791 = vmul.f32 %v788, %v1681
  %v1792 = vmul.f32 %v794, %v1681
  %v1793 = vmul.f32 %v800, %v1681
  %v1794 = vmul.f32 %v806, %v1681
  %v1795 = vmul.f32 %v813, %v1681
  %v1796 = vmul.f32 %v819, %v1681
  %v1797 = vmul.f32 %v825, %v1681
  %v1798 = vmul.f32 %v831, %v1681
  %v1799 = vmul.f32 %v837, %v1681
  %v1800 = vmul.f32 %v843, %v1681
  %v1801 = vmul.f32 %v849, %v1681
  %v1802 = vmul.f32 %v855, %v1681
  %v1803 = vmul.f32 %v861, %v1681
  %v1804 = vmul.f32 %v867, %v1681
  %v1805 = vmul.f32 %v873, %v1681
  %v1806 = vmul.f32 %v879, %v1681
  %v1807 = vmul.f32 %v885, %v1681
  %v1808 = vmul.f32 %v891, %v1681
  %v1809 = vmul.f32 %v897, %v1681
  %v1810 = vmul.f32 %v903, %v1681
  %v1811 = vmul.f32 %v910, %v1681
  %v1812 = vmul.f32 %v916, %v1681
  %v1813 = vmul.f32 %v922, %v1681
  %v1814 = vmul.f32 %v928, %v1681
  %v1815 = vmul.f32 %v934, %v1681
  %v1816 = vmul.f32 %v940, %v1681
  %v1817 = vmul.f32 %v946, %v1681
  %v1818 = vmul.f32 %v952, %v1681
  %v1819 = vmul.f32 %v958, %v1681
  %v1820 = vmul.f32 %v964, %v1681
  %v1821 = vmul.f32 %v970, %v1681
  %v1822 = vmul.f32 %v976, %v1681
  %v1823 = vmul.f32 %v982, %v1681
  %v1824 = vmul.f32 %v988, %v1681
  %v1825 = vmul.f32 %v994, %v1681
  %v1826 = vmul.f32 %v1000, %v1681
  %v1827 = vmul.f32 %v1007, %v1681
  %v1828 = vmul.f32 %v1013, %v1681
  %v1829 = vmul.f32 %v1019, %v1681
  %v1830 = vmul.f32 %v1025, %v1681
  %v1831 = vmul.f32 %v1031, %v1681
  %v1832 = vmul.f32 %v1037, %v1681
  %v1833 = vmul.f32 %v1043, %v1681
  %v1834 = vmul.f32 %v1049, %v1681
  %v1835 = vmul.f32 %v1055, %v1681
  %v1836 = vmul.f32 %v1061, %v1681
  %v1837 = vmul.f32 %v1067, %v1681
  %v1838 = vmul.f32 %v1073, %v1681
  %v1839 = vmul.f32 %v1079, %v1681
  %v1840 = vmul.f32 %v1085, %v1681
  %v1841 = vmul.f32 %v1091, %v1681
  %v1842 = vmul.f32 %v1097, %v1681
  %v1843 = vmul.f32 %v1104, %v1681
  %v1844 = vmul.f32 %v1110, %v1681
  %v1845 = vmul.f32 %v1116, %v1681
  %v1846 = vmul.f32 %v1122, %v1681
  %v1847 = vmul.f32 %v1128, %v1681
  %v1848 = vmul.f32 %v1134, %v1681
  %v1849 = vmul.f32 %v1140, %v1681
  %v1850 = vmul.f32 %v1146, %v1681
  %v1851 = vmul.f32 %v1152, %v1681
  %v1852 = vmul.f32 %v1158, %v1681
  %v1853 = vmul.f32 %v1164, %v1681
  %v1854 = vmul.f32 %v1170, %v1681
  %v1855 = vmul.f32 %v1176, %v1681
  %v1856 = vmul.f32 %v1182, %v1681
  %v1857 = vmul.f32 %v1188, %v1681
  %v1858 = vmul.f32 %v1194, %v1681
  %v1859 = vmul.f32 %v1201, %v1681
  %v1860 = vmul.f32 %v1207, %v1681
  %v1861 = vmul.f32 %v1213, %v1681
  %v1862 = vmul.f32 %v1219, %v1681
  %v1863 = vmul.f32 %v1225, %v1681
  %v1864 = vmul.f32 %v1231, %v1681
  %v1865 = vmul.f32 %v1237, %v1681
  %v1866 = vmul.f32 %v1243, %v1681
  %v1867 = vmul.f32 %v1249, %v1681
  %v1868 = vmul.f32 %v1255, %v1681
  %v1869 = vmul.f32 %v1261, %v1681
  %v1870 = vmul.f32 %v1267, %v1681
  %v1871 = vmul.f32 %v1273, %v1681
  %v1872 = vmul.f32 %v1279, %v1681
  %v1873 = vmul.f32 %v1285, %v1681
  %v1874 = vmul.f32 %v1291, %v1681
  %v1875 = vmul.f32 %v1298, %v1681
  %v1876 = vmul.f32 %v1304, %v1681
  %v1877 = vmul.f32 %v1310, %v1681
  %v1878 = vmul.f32 %v1316, %v1681
  %v1879 = vmul.f32 %v1322, %v1681
  %v1880 = vmul.f32 %v1328, %v1681
  %v1881 = vmul.f32 %v1334, %v1681
  %v1882 = vmul.f32 %v1340, %v1681
  %v1883 = vmul.f32 %v1346, %v1681
  %v1884 = vmul.f32 %v1352, %v1681
  %v1885 = vmul.f32 %v1358, %v1681
  %v1886 = vmul.f32 %v1364, %v1681
  %v1887 = vmul.f32 %v1370, %v1681
  %v1888 = vmul.f32 %v1376, %v1681
  %v1889 = vmul.f32 %v1382, %v1681
  %v1890 = vmul.f32 %v1388, %v1681
  %v1891 = vmul.f32 %v1395, %v1681
  %v1892 = vmul.f32 %v1401, %v1681
  %v1893 = vmul.f32 %v1407, %v1681
  %v1894 = vmul.f32 %v1413, %v1681
  %v1895 = vmul.f32 %v1419, %v1681
  %v1896 = vmul.f32 %v1425, %v1681
  %v1897 = vmul.f32 %v1431, %v1681
  %v1898 = vmul.f32 %v1437, %v1681
  %v1899 = vmul.f32 %v1443, %v1681
  %v1900 = vmul.f32 %v1449, %v1681
  %v1901 = vmul.f32 %v1455, %v1681
  %v1902 = vmul.f32 %v1461, %v1681
  %v1903 = vmul.f32 %v1467, %v1681
  %v1904 = vmul.f32 %v1473, %v1681
  %v1905 = vmul.f32 %v1479, %v1681
  %v1906 = vmul.f32 %v1485, %v1681
  %v1907 = vmul.f32 %v1492, %v1681
  %v1908 = vmul.f32 %v1498, %v1681
  %v1909 = vmul.f32 %v1504, %v1681
  %v1910 = vmul.f32 %v1510, %v1681
  %v1911 = vmul.f32 %v1516, %v1681
  %v1912 = vmul.f32 %v1522, %v1681
  %v1913 = vmul.f32 %v1528, %v1681
  %v1914 = vmul.f32 %v1534, %v1681
  %v1915 = vmul.f32 %v1540, %v1681
  %v1916 = vmul.f32 %v1546, %v1681
  %v1917 = vmul.f32 %v1552, %v1681
  %v1918 = vmul.f32 %v1558, %v1681
  %v1919 = vmul.f32 %v1564, %v1681
  %v1920 = vmul.f32 %v1570, %v1681
  %v1921 = vmul.f32 %v1576, %v1681
  %v1922 = vmul.f32 %v1582, %v1681
  %v1923 = vmul.f32 %v1589, %v1681
  %v1924 = vmul.f32 %v1595, %v1681
  %v1925 = vmul.f32 %v1601, %v1681
  %v1926 = vmul.f32 %v1607, %v1681
  %v1927 = vmul.f32 %v1613, %v1681
  %v1928 = vmul.f32 %v1619, %v1681
  %v1929 = vmul.f32 %v1625, %v1681
  %v1930 = vmul.f32 %v1631, %v1681
  %v1931 = vmul.f32 %v1637, %v1681
  %v1932 = vmul.f32 %v1643, %v1681
  %v1933 = vmul.f32 %v1649, %v1681
  %v1934 = vmul.f32 %v1655, %v1681
  %v1935 = vmul.f32 %v1661, %v1681
  %v1936 = vmul.f32 %v1667, %v1681
  %v1937 = vmul.f32 %v1673, %v1681
  %v1938 = vmul.f32 %v1679, %v1681
  %v1939 = vadd.f32 %v1683, %v96
  %v1940 = vadd.f32 %v1684, %v97
  %v1941 = vadd.f32 %v1685, %v98
  %v1942 = vadd.f32 %v1686, %v99
  %v1943 = vadd.f32 %v1687, %v100
  %v1944 = vadd.f32 %v1688, %v101
  %v1945 = vadd.f32 %v1689, %v102
  %v1946 = vadd.f32 %v1690, %v103
  %v1947 = vadd.f32 %v1691, %v104
  %v1948 = vadd.f32 %v1692, %v105
  %v1949 = vadd.f32 %v1693, %v106
  %v1950 = vadd.f32 %v1694, %v107
  %v1951 = vadd.f32 %v1695, %v108
  %v1952 = vadd.f32 %v1696, %v109
  %v1953 = vadd.f32 %v1697, %v110
  %v1954 = vadd.f32 %v1698, %v111
  %v1955 = vadd.f32 %v1699, %v112
  %v1956 = vadd.f32 %v1700, %v113
  %v1957 = vadd.f32 %v1701, %v114
  %v1958 = vadd.f32 %v1702, %v115
  %v1959 = vadd.f32 %v1703, %v116
  %v1960 = vadd.f32 %v1704, %v117
  %v1961 = vadd.f32 %v1705, %v118
  %v1962 = vadd.f32 %v1706, %v119
  %v1963 = vadd.f32 %v1707, %v120
  %v1964 = vadd.f32 %v1708, %v121
  %v1965 = vadd.f32 %v1709, %v122
  %v1966 = vadd.f32 %v1710, %v123
  %v1967 = vadd.f32 %v1711, %v124
  %v1968 = vadd.f32 %v1712, %v125
  %v1969 = vadd.f32 %v1713, %v126
  %v1970 = vadd.f32 %v1714, %v127
  %v1971 = vadd.f32 %v1715, %v96
  %v1972 = vadd.f32 %v1716, %v97
  %v1973 = vadd.f32 %v1717, %v98
  %v1974 = vadd.f32 %v1718, %v99
  %v1975 = vadd.f32 %v1719, %v100
  %v1976 = vadd.f32 %v1720, %v101
  %v1977 = vadd.f32 %v1721, %v102
  %v1978 = vadd.f32 %v1722, %v103
  %v1979 = vadd.f32 %v1723, %v104
  %v1980 = vadd.f32 %v1724, %v105
  %v1981 = vadd.f32 %v1725, %v106
  %v1982 = vadd.f32 %v1726, %v107
  %v1983 = vadd.f32 %v1727, %v108
  %v1984 = vadd.f32 %v1728, %v109
  %v1985 = vadd.f32 %v1729, %v110
  %v1986 = vadd.f32 %v1730, %v111
  %v1987 = vadd.f32 %v1731, %v112
  %v1988 = vadd.f32 %v1732, %v113
  %v1989 = vadd.f32 %v1733, %v114
  %v1990 = vadd.f32 %v1734, %v115
  %v1991 = vadd.f32 %v1735, %v116
  %v1992 = vadd.f32 %v1736, %v117
  %v1993 = vadd.f32 %v1737, %v118
  %v1994 = vadd.f32 %v1738, %v119
  %v1995 = vadd.f32 %v1739, %v120
  %v1996 = vadd.f32 %v1740, %v121
  %v1997 = vadd.f32 %v1741, %v122
  %v1998 = vadd.f32 %v1742, %v123
  %v1999 = vadd.f32 %v1743, %v124
  %v2000 = vadd.f32 %v1744, %v125
  %v2001 = vadd.f32 %v1745, %v126
  %v2002 = vadd.f32 %v1746, %v127
  %v2003 = vadd.f32 %v1747, %v96
  %v2004 = vadd.f32 %v1748, %v97
  %v2005 = vadd.f32 %v1749, %v98
  %v2006 = vadd.f32 %v1750, %v99
  %v2007 = vadd.f32 %v1751, %v100
  %v2008 = vadd.f32 %v1752, %v101
  %v2009 = vadd.f32 %v1753, %v102
  %v2010 = vadd.f32 %v1754, %v103
  %v2011 = vadd.f32 %v1755, %v104
  %v2012 = vadd.f32 %v1756, %v105
  %v2013 = vadd.f32 %v1757, %v106
  %v2014 = vadd.f32 %v1758, %v107
  %v2015 = vadd.f32 %v1759, %v108
  %v2016 = vadd.f32 %v1760, %v109
  %v2017 = vadd.f32 %v1761, %v110
  %v2018 = vadd.f32 %v1762, %v111
  %v2019 = vadd.f32 %v1763, %v112
  %v2020 = vadd.f32 %v1764, %v113
  %v2021 = vadd.f32 %v1765, %v114
  %v2022 = vadd.f32 %v1766, %v115
  %v2023 = vadd.f32 %v1767, %v116
  %v2024 = vadd.f32 %v1768, %v117
  %v2025 = vadd.f32 %v1769, %v118
  %v2026 = vadd.f32 %v1770, %v119
  %v2027 = vadd.f32 %v1771, %v120
  %v2028 = vadd.f32 %v1772, %v121
  %v2029 = vadd.f32 %v1773, %v122
  %v2030 = vadd.f32 %v1774, %v123
  %v2031 = vadd.f32 %v1775, %v124
  %v2032 = vadd.f32 %v1776, %v125
  %v2033 = vadd.f32 %v1777, %v126
  %v2034 = vadd.f32 %v1778, %v127
  %v2035 = vadd.f32 %v1779, %v96
  %v2036 = vadd.f32 %v1780, %v97
  %v2037 = vadd.f32 %v1781, %v98
  %v2038 = vadd.f32 %v1782, %v99
  %v2039 = vadd.f32 %v1783, %v100
  %v2040 = vadd.f32 %v1784, %v101
  %v2041 = vadd.f32 %v1785, %v102
  %v2042 = vadd.f32 %v1786, %v103
  %v2043 = vadd.f32 %v1787, %v104
  %v2044 = vadd.f32 %v1788, %v105
  %v2045 = vadd.f32 %v1789, %v106
  %v2046 = vadd.f32 %v1790, %v107
  %v2047 = vadd.f32 %v1791, %v108
  %v2048 = vadd.f32 %v1792, %v109
  %v2049 = vadd.f32 %v1793, %v110
  %v2050 = vadd.f32 %v1794, %v111
  %v2051 = vadd.f32 %v1795, %v112
  %v2052 = vadd.f32 %v1796, %v113
  %v2053 = vadd.f32 %v1797, %v114
  %v2054 = vadd.f32 %v1798, %v115
  %v2055 = vadd.f32 %v1799, %v116
  %v2056 = vadd.f32 %v1800, %v117
  %v2057 = vadd.f32 %v1801, %v118
  %v2058 = vadd.f32 %v1802, %v119
  %v2059 = vadd.f32 %v1803, %v120
  %v2060 = vadd.f32 %v1804, %v121
  %v2061 = vadd.f32 %v1805, %v122
  %v2062 = vadd.f32 %v1806, %v123
  %v2063 = vadd.f32 %v1807, %v124
  %v2064 = vadd.f32 %v1808, %v125
  %v2065 = vadd.f32 %v1809, %v126
  %v2066 = vadd.f32 %v1810, %v127
  %v2067 = vadd.f32 %v1811, %v96
  %v2068 = vadd.f32 %v1812, %v97
  %v2069 = vadd.f32 %v1813, %v98
  %v2070 = vadd.f32 %v1814, %v99
  %v2071 = vadd.f32 %v1815, %v100
  %v2072 = vadd.f32 %v1816, %v101
  %v2073 = vadd.f32 %v1817, %v102
  %v2074 = vadd.f32 %v1818, %v103
  %v2075 = vadd.f32 %v1819, %v104
  %v2076 = vadd.f32 %v1820, %v105
  %v2077 = vadd.f32 %v1821, %v106
  %v2078 = vadd.f32 %v1822, %v107
  %v2079 = vadd.f32 %v1823, %v108
  %v2080 = vadd.f32 %v1824, %v109
  %v2081 = vadd.f32 %v1825, %v110
  %v2082 = vadd.f32 %v1826, %v111
  %v2083 = vadd.f32 %v1827, %v112
  %v2084 = vadd.f32 %v1828, %v113
  %v2085 = vadd.f32 %v1829, %v114
  %v2086 = vadd.f32 %v1830, %v115
  %v2087 = vadd.f32 %v1831, %v116
  %v2088 = vadd.f32 %v1832, %v117
  %v2089 = vadd.f32 %v1833, %v118
  %v2090 = vadd.f32 %v1834, %v119
  %v2091 = vadd.f32 %v1835, %v120
  %v2092 = vadd.f32 %v1836, %v121
  %v2093 = vadd.f32 %v1837, %v122
  %v2094 = vadd.f32 %v1838, %v123
  %v2095 = vadd.f32 %v1839, %v124
  %v2096 = vadd.f32 %v1840, %v125
  %v2097 = vadd.f32 %v1841, %v126
  %v2098 = vadd.f32 %v1842, %v127
  %v2099 = vadd.f32 %v1843, %v96
  %v2100 = vadd.f32 %v1844, %v97
  %v2101 = vadd.f32 %v1845, %v98
  %v2102 = vadd.f32 %v1846, %v99
  %v2103 = vadd.f32 %v1847, %v100
  %v2104 = vadd.f32 %v1848, %v101
  %v2105 = vadd.f32 %v1849, %v102
  %v2106 = vadd.f32 %v1850, %v103
  %v2107 = vadd.f32 %v1851, %v104
  %v2108 = vadd.f32 %v1852, %v105
  %v2109 = vadd.f32 %v1853, %v106
  %v2110 = vadd.f32 %v1854, %v107
  %v2111 = vadd.f32 %v1855, %v108
  %v2112 = vadd.f32 %v1856, %v109
  %v2113 = vadd.f32 %v1857, %v110
  %v2114 = vadd.f32 %v1858, %v111
  %v2115 = vadd.f32 %v1859, %v112
  %v2116 = vadd.f32 %v1860, %v113
  %v2117 = vadd.f32 %v1861, %v114
  %v2118 = vadd.f32 %v1862, %v115
  %v2119 = vadd.f32 %v1863, %v116
  %v2120 = vadd.f32 %v1864, %v117
  %v2121 = vadd.f32 %v1865, %v118
  %v2122 = vadd.f32 %v1866, %v119
  %v2123 = vadd.f32 %v1867, %v120
  %v2124 = vadd.f32 %v1868, %v121
  %v2125 = vadd.f32 %v1869, %v122
  %v2126 = vadd.f32 %v1870, %v123
  %v2127 = vadd.f32 %v1871, %v124
  %v2128 = vadd.f32 %v1872, %v125
  %v2129 = vadd.f32 %v1873, %v126
  %v2130 = vadd.f32 %v1874, %v127
  %v2131 = vadd.f32 %v1875, %v96
  %v2132 = vadd.f32 %v1876, %v97
  %v2133 = vadd.f32 %v1877, %v98
  %v2134 = vadd.f32 %v1878, %v99
  %v2135 = vadd.f32 %v1879, %v100
  %v2136 = vadd.f32 %v1880, %v101
  %v2137 = vadd.f32 %v1881, %v102
  %v2138 = vadd.f32 %v1882, %v103
  %v2139 = vadd.f32 %v1883, %v104
  %v2140 = vadd.f32 %v1884, %v105
  %v2141 = vadd.f32 %v1885, %v106
  %v2142 = vadd.f32 %v1886, %v107
  %v2143 = vadd.f32 %v1887, %v108
  %v2144 = vadd.f32 %v1888, %v109
  %v2145 = vadd.f32 %v1889, %v110
  %v2146 = vadd.f32 %v1890, %v111
  %v2147 = vadd.f32 %v1891, %v112
  %v2148 = vadd.f32 %v1892, %v113
  %v2149 = vadd.f32 %v1893, %v114
  %v2150 = vadd.f32 %v1894, %v115
  %v2151 = vadd.f32 %v1895, %v116
  %v2152 = vadd.f32 %v1896, %v117
  %v2153 = vadd.f32 %v1897, %v118
  %v2154 = vadd.f32 %v1898, %v119
  %v2155 = vadd.f32 %v1899, %v120
  %v2156 = vadd.f32 %v1900, %v121
  %v2157 = vadd.f32 %v1901, %v122
  %v2158 = vadd.f32 %v1902, %v123
  %v2159 = vadd.f32 %v1903, %v124
  %v2160 = vadd.f32 %v1904, %v125
  %v2161 = vadd.f32 %v1905, %v126
  %v2162 = vadd.f32 %v1906, %v127
  %v2163 = vadd.f32 %v1907, %v96
  %v2164 = vadd.f32 %v1908, %v97
  %v2165 = vadd.f32 %v1909, %v98
  %v2166 = vadd.f32 %v1910, %v99
  %v2167 = vadd.f32 %v1911, %v100
  %v2168 = vadd.f32 %v1912, %v101
  %v2169 = vadd.f32 %v1913, %v102
  %v2170 = vadd.f32 %v1914, %v103
  %v2171 = vadd.f32 %v1915, %v104
  %v2172 = vadd.f32 %v1916, %v105
  %v2173 = vadd.f32 %v1917, %v106
  %v2174 = vadd.f32 %v1918, %v107
  %v2175 = vadd.f32 %v1919, %v108
  %v2176 = vadd.f32 %v1920, %v109
  %v2177 = vadd.f32 %v1921, %v110
  %v2178 = vadd.f32 %v1922, %v111
  %v2179 = vadd.f32 %v1923, %v112
  %v2180 = vadd.f32 %v1924, %v113
  %v2181 = vadd.f32 %v1925, %v114
  %v2182 = vadd.f32 %v1926, %v115
  %v2183 = vadd.f32 %v1927, %v116
  %v2184 = vadd.f32 %v1928, %v117
  %v2185 = vadd.f32 %v1929, %v118
  %v2186 = vadd.f32 %v1930, %v119
  %v2187 = vadd.f32 %v1931, %v120
  %v2188 = vadd.f32 %v1932, %v121
  %v2189 = vadd.f32 %v1933, %v122
  %v2190 = vadd.f32 %v1934, %v123
  %v2191 = vadd.f32 %v1935, %v124
  %v2192 = vadd.f32 %v1936, %v125
  %v2193 = vadd.f32 %v1937, %v126
  %v2194 = vadd.f32 %v1938, %v127
  %v2195 = vmax.f32 %v1939, 0.0
  %v2196 = vmax.f32 %v1940, 0.0
  %v2197 = vmax.f32 %v1941, 0.0
  %v2198 = vmax.f32 %v1942, 0.0
  %v2199 = vmax.f32 %v1943, 0.0
  %v2200 = vmax.f32 %v1944, 0.0
  %v2201 = vmax.f32 %v1945, 0.0
  %v2202 = vmax.f32 %v1946, 0.0
  %v2203 = vmax.f32 %v1947, 0.0
  %v2204 = vmax.f32 %v1948, 0.0
  %v2205 = vmax.f32 %v1949, 0.0
  %v2206 = vmax.f32 %v1950, 0.0
  %v2207 = vmax.f32 %v1951, 0.0
  %v2208 = vmax.f32 %v1952, 0.0
  %v2209 = vmax.f32 %v1953, 0.0
  %v2210 = vmax.f32 %v1954, 0.0
  %v2211 = vmax.f32 %v1955, 0.0
  %v2212 = vmax.f32 %v1956, 0.0
  %v2213 = vmax.f32 %v1957, 0.0
  %v2214 = vmax.f32 %v1958, 0.0
  %v2215 = vmax.f32 %v1959, 0.0
  %v2216 = vmax.f32 %v1960, 0.0
  %v2217 = vmax.f32 %v1961, 0.0
  %v2218 = vmax.f32 %v1962, 0.0
  %v2219 = vmax.f32 %v1963, 0.0
  %v2220 = vmax.f32 %v1964, 0.0
  %v2221 = vmax.f32 %v1965, 0.0
  %v2222 = vmax.f32 %v1966, 0.0
  %v2223 = vmax.f32 %v1967, 0.0
  %v2224 = vmax.f32 %v1968, 0.0
  %v2225 = vmax.f32 %v1969, 0.0
  %v2226 = vmax.f32 %v1970, 0.0
  %v2227 = vmax.f32 %v1971, 0.0
  %v2228 = vmax.f32 %v1972, 0.0
  %v2229 = vmax.f32 %v1973, 0.0
  %v2230 = vmax.f32 %v1974, 0.0
  %v2231 = vmax.f32 %v1975, 0.0
  %v2232 = vmax.f32 %v1976, 0.0
  %v2233 = vmax.f32 %v1977, 0.0
  %v2234 = vmax.f32 %v1978, 0.0
  %v2235 = vmax.f32 %v1979, 0.0
  %v2236 = vmax.f32 %v1980, 0.0
  %v2237 = vmax.f32 %v1981, 0.0
  %v2238 = vmax.f32 %v1982, 0.0
  %v2239 = vmax.f32 %v1983, 0.0
  %v2240 = vmax.f32 %v1984, 0.0
  %v2241 = vmax.f32 %v1985, 0.0
  %v2242 = vmax.f32 %v1986, 0.0
  %v2243 = vmax.f32 %v1987, 0.0
  %v2244 = vmax.f32 %v1988, 0.0
  %v2245 = vmax.f32 %v1989, 0.0
  %v2246 = vmax.f32 %v1990, 0.0
  %v2247 = vmax.f32 %v1991, 0.0
  %v2248 = vmax.f32 %v1992, 0.0
  %v2249 = vmax.f32 %v1993, 0.0
  %v2250 = vmax.f32 %v1994, 0.0
  %v2251 = vmax.f32 %v1995, 0.0
  %v2252 = vmax.f32 %v1996, 0.0
  %v2253 = vmax.f32 %v1997, 0.0
  %v2254 = vmax.f32 %v1998, 0.0
  %v2255 = vmax.f32 %v1999, 0.0
  %v2256 = vmax.f32 %v2000, 0.0
  %v2257 = vmax.f32 %v2001, 0.0
  %v2258 = vmax.f32 %v2002, 0.0
  %v2259 = vmax.f32 %v2003, 0.0
  %v2260 = vmax.f32 %v2004, 0.0
  %v2261 = vmax.f32 %v2005, 0.0
  %v2262 = vmax.f32 %v2006, 0.0
  %v2263 = vmax.f32 %v2007, 0.0
  %v2264 = vmax.f32 %v2008, 0.0
  %v2265 = vmax.f32 %v2009, 0.0
  %v2266 = vmax.f32 %v2010, 0.0
  %v2267 = vmax.f32 %v2011, 0.0
  %v2268 = vmax.f32 %v2012, 0.0
  %v2269 = vmax.f32 %v2013, 0.0
  %v2270 = vmax.f32 %v2014, 0.0
  %v2271 = vmax.f32 %v2015, 0.0
  %v2272 = vmax.f32 %v2016, 0.0
  %v2273 = vmax.f32 %v2017, 0.0
  %v2274 = vmax.f32 %v2018, 0.0
  %v2275 = vmax.f32 %v2019, 0.0
  %v2276 = vmax.f32 %v2020, 0.0
  %v2277 = vmax.f32 %v2021, 0.0
  %v2278 = vmax.f32 %v2022, 0.0
  %v2279 = vmax.f32 %v2023, 0.0
  %v2280 = vmax.f32 %v2024, 0.0
  %v2281 = vmax.f32 %v2025, 0.0
  %v2282 = vmax.f32 %v2026, 0.0
  %v2283 = vmax.f32 %v2027, 0.0
  %v2284 = vmax.f32 %v2028, 0.0
  %v2285 = vmax.f32 %v2029, 0.0
  %v2286 = vmax.f32 %v2030, 0.0
  %v2287 = vmax.f32 %v2031, 0.0
  %v2288 = vmax.f32 %v2032, 0.0
  %v2289 = vmax.f32 %v2033, 0.0
  %v2290 = vmax.f32 %v2034, 0.0
  %v2291 = vmax.f32 %v2035, 0.0
  %v2292 = vmax.f32 %v2036, 0.0
  %v2293 = vmax.f32 %v2037, 0.0
  %v2294 = vmax.f32 %v2038, 0.0
  %v2295 = vmax.f32 %v2039, 0.0
  %v2296 = vmax.f32 %v2040, 0.0
  %v2297 = vmax.f32 %v2041, 0.0
  %v2298 = vmax.f32 %v2042, 0.0
  %v2299 = vmax.f32 %v2043, 0.0
  %v2300 = vmax.f32 %v2044, 0.0
  %v2301 = vmax.f32 %v2045, 0.0
  %v2302 = vmax.f32 %v2046, 0.0
  %v2303 = vmax.f32 %v2047, 0.0
  %v2304 = vmax.f32 %v2048, 0.0
  %v2305 = vmax.f32 %v2049, 0.0
  %v2306 = vmax.f32 %v2050, 0.0
  %v2307 = vmax.f32 %v2051, 0.0
  %v2308 = vmax.f32 %v2052, 0.0
  %v2309 = vmax.f32 %v2053, 0.0
  %v2310 = vmax.f32 %v2054, 0.0
  %v2311 = vmax.f32 %v2055, 0.0
  %v2312 = vmax.f32 %v2056, 0.0
  %v2313 = vmax.f32 %v2057, 0.0
  %v2314 = vmax.f32 %v2058, 0.0
  %v2315 = vmax.f32 %v2059, 0.0
  %v2316 = vmax.f32 %v2060, 0.0
  %v2317 = vmax.f32 %v2061, 0.0
  %v2318 = vmax.f32 %v2062, 0.0
  %v2319 = vmax.f32 %v2063, 0.0
  %v2320 = vmax.f32 %v2064, 0.0
  %v2321 = vmax.f32 %v2065, 0.0
  %v2322 = vmax.f32 %v2066, 0.0
  %v2323 = vmax.f32 %v2067, 0.0
  %v2324 = vmax.f32 %v2068, 0.0
  %v2325 = vmax.f32 %v2069, 0.0
  %v2326 = vmax.f32 %v2070, 0.0
  %v2327 = vmax.f32 %v2071, 0.0
  %v2328 = vmax.f32 %v2072, 0.0
  %v2329 = vmax.f32 %v2073, 0.0
  %v2330 = vmax.f32 %v2074, 0.0
  %v2331 = vmax.f32 %v2075, 0.0
  %v2332 = vmax.f32 %v2076, 0.0
  %v2333 = vmax.f32 %v2077, 0.0
  %v2334 = vmax.f32 %v2078, 0.0
  %v2335 = vmax.f32 %v2079, 0.0
  %v2336 = vmax.f32 %v2080, 0.0
  %v2337 = vmax.f32 %v2081, 0.0
  %v2338 = vmax.f32 %v2082, 0.0
  %v2339 = vmax.f32 %v2083, 0.0
  %v2340 = vmax.f32 %v2084, 0.0
  %v2341 = vmax.f32 %v2085, 0.0
  %v2342 = vmax.f32 %v2086, 0.0
  %v2343 = vmax.f32 %v2087, 0.0
  %v2344 = vmax.f32 %v2088, 0.0
  %v2345 = vmax.f32 %v2089, 0.0
  %v2346 = vmax.f32 %v2090, 0.0
  %v2347 = vmax.f32 %v2091, 0.0
  %v2348 = vmax.f32 %v2092, 0.0
  %v2349 = vmax.f32 %v2093, 0.0
  %v2350 = vmax.f32 %v2094, 0.0
  %v2351 = vmax.f32 %v2095, 0.0
  %v2352 = vmax.f32 %v2096, 0.0
  %v2353 = vmax.f32 %v2097, 0.0
  %v2354 = vmax.f32 %v2098, 0.0
  %v2355 = vmax.f32 %v2099, 0.0
  %v2356 = vmax.f32 %v2100, 0.0
  %v2357 = vmax.f32 %v2101, 0.0
  %v2358 = vmax.f32 %v2102, 0.0
  %v2359 = vmax.f32 %v2103, 0.0
  %v2360 = vmax.f32 %v2104, 0.0
  %v2361 = vmax.f32 %v2105, 0.0
  %v2362 = vmax.f32 %v2106, 0.0
  %v2363 = vmax.f32 %v2107, 0.0
  %v2364 = vmax.f32 %v2108, 0.0
  %v2365 = vmax.f32 %v2109, 0.0
  %v2366 = vmax.f32 %v2110, 0.0
  %v2367 = vmax.f32 %v2111, 0.0
  %v2368 = vmax.f32 %v2112, 0.0
  %v2369 = vmax.f32 %v2113, 0.0
  %v2370 = vmax.f32 %v2114, 0.0
  %v2371 = vmax.f32 %v2115, 0.0
  %v2372 = vmax.f32 %v2116, 0.0
  %v2373 = vmax.f32 %v2117, 0.0
  %v2374 = vmax.f32 %v2118, 0.0
  %v2375 = vmax.f32 %v2119, 0.0
  %v2376 = vmax.f32 %v2120, 0.0
  %v2377 = vmax.f32 %v2121, 0.0
  %v2378 = vmax.f32 %v2122, 0.0
  %v2379 = vmax.f32 %v2123, 0.0
  %v2380 = vmax.f32 %v2124, 0.0
  %v2381 = vmax.f32 %v2125, 0.0
  %v2382 = vmax.f32 %v2126, 0.0
  %v2383 = vmax.f32 %v2127, 0.0
  %v2384 = vmax.f32 %v2128, 0.0
  %v2385 = vmax.f32 %v2129, 0.0
  %v2386 = vmax.f32 %v2130, 0.0
  %v2387 = vmax.f32 %v2131, 0.0
  %v2388 = vmax.f32 %v2132, 0.0
  %v2389 = vmax.f32 %v2133, 0.0
  %v2390 = vmax.f32 %v2134, 0.0
  %v2391 = vmax.f32 %v2135, 0.0
  %v2392 = vmax.f32 %v2136, 0.0
  %v2393 = vmax.f32 %v2137, 0.0
  %v2394 = vmax.f32 %v2138, 0.0
  %v2395 = vmax.f32 %v2139, 0.0
  %v2396 = vmax.f32 %v2140, 0.0
  %v2397 = vmax.f32 %v2141, 0.0
  %v2398 = vmax.f32 %v2142, 0.0
  %v2399 = vmax.f32 %v2143, 0.0
  %v2400 = vmax.f32 %v2144, 0.0
  %v2401 = vmax.f32 %v2145, 0.0
  %v2402 = vmax.f32 %v2146, 0.0
  %v2403 = vmax.f32 %v2147, 0.0
  %v2404 = vmax.f32 %v2148, 0.0
  %v2405 = vmax.f32 %v2149, 0.0
  %v2406 = vmax.f32 %v2150, 0.0
  %v2407 = vmax.f32 %v2151, 0.0
  %v2408 = vmax.f32 %v2152, 0.0
  %v2409 = vmax.f32 %v2153, 0.0
  %v2410 = vmax.f32 %v2154, 0.0
  %v2411 = vmax.f32 %v2155, 0.0
  %v2412 = vmax.f32 %v2156, 0.0
  %v2413 = vmax.f32 %v2157, 0.0
  %v2414 = vmax.f32 %v2158, 0.0
  %v2415 = vmax.f32 %v2159, 0.0
  %v2416 = vmax.f32 %v2160, 0.0
  %v2417 = vmax.f32 %v2161, 0.0
  %v2418 = vmax.f32 %v2162, 0.0
  %v2419 = vmax.f32 %v2163, 0.0
  %v2420 = vmax.f32 %v2164, 0.0
  %v2421 = vmax.f32 %v2165, 0.0
  %v2422 = vmax.f32 %v2166, 0.0
  %v2423 = vmax.f32 %v2167, 0.0
  %v2424 = vmax.f32 %v2168, 0.0
  %v2425 = vmax.f32 %v2169, 0.0
  %v2426 = vmax.f32 %v2170, 0.0
  %v2427 = vmax.f32 %v2171, 0.0
  %v2428 = vmax.f32 %v2172, 0.0
  %v2429 = vmax.f32 %v2173, 0.0
  %v2430 = vmax.f32 %v2174, 0.0
  %v2431 = vmax.f32 %v2175, 0.0
  %v2432 = vmax.f32 %v2176, 0.0
  %v2433 = vmax.f32 %v2177, 0.0
  %v2434 = vmax.f32 %v2178, 0.0
  %v2435 = vmax.f32 %v2179, 0.0
  %v2436 = vmax.f32 %v2180, 0.0
  %v2437 = vmax.f32 %v2181, 0.0
  %v2438 = vmax.f32 %v2182, 0.0
  %v2439 = vmax.f32 %v2183, 0.0
  %v2440 = vmax.f32 %v2184, 0.0
  %v2441 = vmax.f32 %v2185, 0.0
  %v2442 = vmax.f32 %v2186, 0.0
  %v2443 = vmax.f32 %v2187, 0.0
  %v2444 = vmax.f32 %v2188, 0.0
  %v2445 = vmax.f32 %v2189, 0.0
  %v2446 = vmax.f32 %v2190, 0.0
  %v2447 = vmax.f32 %v2191, 0.0
  %v2448 = vmax.f32 %v2192, 0.0
  %v2449 = vmax.f32 %v2193, 0.0
  %v2450 = vmax.f32 %v2194, 0.0
  %v2451 = vpack.c.bf16 %v2196, %v2195
  %v2452 = vpack.c.bf16 %v2198, %v2197
  %v2453 = vpack.c.bf16 %v2200, %v2199
  %v2454 = vpack.c.bf16 %v2202, %v2201
  %v2455 = vpack.c.bf16 %v2204, %v2203
  %v2456 = vpack.c.bf16 %v2206, %v2205
  %v2457 = vpack.c.bf16 %v2208, %v2207
  %v2458 = vpack.c.bf16 %v2210, %v2209
  %v2459 = vpack.c.bf16 %v2212, %v2211
  %v2460 = vpack.c.bf16 %v2214, %v2213
  %v2461 = vpack.c.bf16 %v2216, %v2215
  %v2462 = vpack.c.bf16 %v2218, %v2217
  %v2463 = vpack.c.bf16 %v2220, %v2219
  %v2464 = vpack.c.bf16 %v2222, %v2221
  %v2465 = vpack.c.bf16 %v2224, %v2223
  %v2466 = vpack.c.bf16 %v2226, %v2225
  %v2467 = vpack.c.bf16 %v2228, %v2227
  %v2468 = vpack.c.bf16 %v2230, %v2229
  %v2469 = vpack.c.bf16 %v2232, %v2231
  %v2470 = vpack.c.bf16 %v2234, %v2233
  %v2471 = vpack.c.bf16 %v2236, %v2235
  %v2472 = vpack.c.bf16 %v2238, %v2237
  %v2473 = vpack.c.bf16 %v2240, %v2239
  %v2474 = vpack.c.bf16 %v2242, %v2241
  %v2475 = vpack.c.bf16 %v2244, %v2243
  %v2476 = vpack.c.bf16 %v2246, %v2245
  %v2477 = vpack.c.bf16 %v2248, %v2247
  %v2478 = vpack.c.bf16 %v2250, %v2249
  %v2479 = vpack.c.bf16 %v2252, %v2251
  %v2480 = vpack.c.bf16 %v2254, %v2253
  %v2481 = vpack.c.bf16 %v2256, %v2255
  %v2482 = vpack.c.bf16 %v2258, %v2257
  %v2483 = vpack.c.bf16 %v2260, %v2259
  %v2484 = vpack.c.bf16 %v2262, %v2261
  %v2485 = vpack.c.bf16 %v2264, %v2263
  %v2486 = vpack.c.bf16 %v2266, %v2265
  %v2487 = vpack.c.bf16 %v2268, %v2267
  %v2488 = vpack.c.bf16 %v2270, %v2269
  %v2489 = vpack.c.bf16 %v2272, %v2271
  %v2490 = vpack.c.bf16 %v2274, %v2273
  %v2491 = vpack.c.bf16 %v2276, %v2275
  %v2492 = vpack.c.bf16 %v2278, %v2277
  %v2493 = vpack.c.bf16 %v2280, %v2279
  %v2494 = vpack.c.bf16 %v2282, %v2281
  %v2495 = vpack.c.bf16 %v2284, %v2283
  %v2496 = vpack.c.bf16 %v2286, %v2285
  %v2497 = vpack.c.bf16 %v2288, %v2287
  %v2498 = vpack.c.bf16 %v2290, %v2289
  %v2499 = vpack.c.bf16 %v2292, %v2291
  %v2500 = vpack.c.bf16 %v2294, %v2293
  %v2501 = vpack.c.bf16 %v2296, %v2295
  %v2502 = vpack.c.bf16 %v2298, %v2297
  %v2503 = vpack.c.bf16 %v2300, %v2299
  %v2504 = vpack.c.bf16 %v2302, %v2301
  %v2505 = vpack.c.bf16 %v2304, %v2303
  %v2506 = vpack.c.bf16 %v2306, %v2305
  %v2507 = vpack.c.bf16 %v2308, %v2307
  %v2508 = vpack.c.bf16 %v2310, %v2309
  %v2509 = vpack.c.bf16 %v2312, %v2311
  %v2510 = vpack.c.bf16 %v2314, %v2313
  %v2511 = vpack.c.bf16 %v2316, %v2315
  %v2512 = vpack.c.bf16 %v2318, %v2317
  %v2513 = vpack.c.bf16 %v2320, %v2319
  %v2514 = vpack.c.bf16 %v2322, %v2321
  %v2515 = vpack.c.bf16 %v2324, %v2323
  %v2516 = vpack.c.bf16 %v2326, %v2325
  %v2517 = vpack.c.bf16 %v2328, %v2327
  %v2518 = vpack.c.bf16 %v2330, %v2329
  %v2519 = vpack.c.bf16 %v2332, %v2331
  %v2520 = vpack.c.bf16 %v2334, %v2333
  %v2521 = vpack.c.bf16 %v2336, %v2335
  %v2522 = vpack.c.bf16 %v2338, %v2337
  %v2523 = vpack.c.bf16 %v2340, %v2339
  %v2524 = vpack.c.bf16 %v2342, %v2341
  %v2525 = vpack.c.bf16 %v2344, %v2343
  %v2526 = vpack.c.bf16 %v2346, %v2345
  %v2527 = vpack.c.bf16 %v2348, %v2347
  %v2528 = vpack.c.bf16 %v2350, %v2349
  %v2529 = vpack.c.bf16 %v2352, %v2351
  %v2530 = vpack.c.bf16 %v2354, %v2353
  %v2531 = vpack.c.bf16 %v2356, %v2355
  %v2532 = vpack.c.bf16 %v2358, %v2357
  %v2533 = vpack.c.bf16 %v2360, %v2359
  %v2534 = vpack.c.bf16 %v2362, %v2361
  %v2535 = vpack.c.bf16 %v2364, %v2363
  %v2536 = vpack.c.bf16 %v2366, %v2365
  %v2537 = vpack.c.bf16 %v2368, %v2367
  %v2538 = vpack.c.bf16 %v2370, %v2369
  %v2539 = vpack.c.bf16 %v2372, %v2371
  %v2540 = vpack.c.bf16 %v2374, %v2373
  %v2541 = vpack.c.bf16 %v2376, %v2375
  %v2542 = vpack.c.bf16 %v2378, %v2377
  %v2543 = vpack.c.bf16 %v2380, %v2379
  %v2544 = vpack.c.bf16 %v2382, %v2381
  %v2545 = vpack.c.bf16 %v2384, %v2383
  %v2546 = vpack.c.bf16 %v2386, %v2385
  %v2547 = vpack.c.bf16 %v2388, %v2387
  %v2548 = vpack.c.bf16 %v2390, %v2389
  %v2549 = vpack.c.bf16 %v2392, %v2391
  %v2550 = vpack.c.bf16 %v2394, %v2393
  %v2551 = vpack.c.bf16 %v2396, %v2395
  %v2552 = vpack.c.bf16 %v2398, %v2397
  %v2553 = vpack.c.bf16 %v2400, %v2399
  %v2554 = vpack.c.bf16 %v2402, %v2401
  %v2555 = vpack.c.bf16 %v2404, %v2403
  %v2556 = vpack.c.bf16 %v2406, %v2405
  %v2557 = vpack.c.bf16 %v2408, %v2407
  %v2558 = vpack.c.bf16 %v2410, %v2409
  %v2559 = vpack.c.bf16 %v2412, %v2411
  %v2560 = vpack.c.bf16 %v2414, %v2413
  %v2561 = vpack.c.bf16 %v2416, %v2415
  %v2562 = vpack.c.bf16 %v2418, %v2417
  %v2563 = vpack.c.bf16 %v2420, %v2419
  %v2564 = vpack.c.bf16 %v2422, %v2421
  %v2565 = vpack.c.bf16 %v2424, %v2423
  %v2566 = vpack.c.bf16 %v2426, %v2425
  %v2567 = vpack.c.bf16 %v2428, %v2427
  %v2568 = vpack.c.bf16 %v2430, %v2429
  %v2569 = vpack.c.bf16 %v2432, %v2431
  %v2570 = vpack.c.bf16 %v2434, %v2433
  %v2571 = vpack.c.bf16 %v2436, %v2435
  %v2572 = vpack.c.bf16 %v2438, %v2437
  %v2573 = vpack.c.bf16 %v2440, %v2439
  %v2574 = vpack.c.bf16 %v2442, %v2441
  %v2575 = vpack.c.bf16 %v2444, %v2443
  %v2576 = vpack.c.bf16 %v2446, %v2445
  %v2577 = vpack.c.bf16 %v2448, %v2447
  %v2578 = vpack.c.bf16 %v2450, %v2449
  %v2580 = vperm.slane %v57, 0
  %v2598 = vunpack.c.l.b16 %v41
  %v2599 = vunpack.c.l.b16 %v42
  %v2600 = vunpack.c.l.b16 %v43
  %v2601 = vunpack.c.l.b16 %v44
  %v2602 = vunpack.c.l.b16 %v45
  %v2603 = vunpack.c.l.b16 %v46
  %v2604 = vunpack.c.l.b16 %v47
  %v2605 = vunpack.c.l.b16 %v48
  %v2606 = vunpack.c.l.b16 %v49
  %v2607 = vunpack.c.l.b16 %v50
  %v2608 = vunpack.c.l.b16 %v51
  %v2609 = vunpack.c.l.b16 %v52
  %v2610 = vunpack.c.l.b16 %v53
  %v2611 = vunpack.c.l.b16 %v54
  %v2612 = vunpack.c.l.b16 %v55
  %v2613 = vunpack.c.l.b16 %v56
  %v2614 = vpack.c.b16 %v2599, %v2598
  %v2615 = vpack.c.b16 %v2601, %v2600
  %v2616 = vpack.c.b16 %v2603, %v2602
  %v2617 = vpack.c.b16 %v2605, %v2604
  %v2618 = vpack.c.b16 %v2607, %v2606
  %v2619 = vpack.c.b16 %v2609, %v2608
  %v2620 = vpack.c.b16 %v2611, %v2610
  %v2621 = vpack.c.b16 %v2613, %v2612
  %2630 = vmatpush.bf16.msra.mxu0 %v2621
  %2631 = vmatpush.bf16.msra.mxu0 %v2620
  %2632 = vmatpush.bf16.msra.mxu0 %v2619
  %2633 = vmatpush.bf16.msra.mxu0 %v2618
  %2634 = vmatpush.bf16.msra.mxu0 %v2617
  %2635 = vmatpush.bf16.msra.mxu0 %v2616
  %2636 = vmatpush.bf16.msra.mxu0 %v2615
  %2637 = vmatpush.bf16.msra.mxu0 %v2614
  %2638 = vmatmul.bf16.gmra.mxu0 %v2451
  %v2639 = vpop.f32.mrf.mxu0
  %v2640 = vadd.f32 %v2580, %v2639
  %v2641 = vpop.f32.mrf.mxu0
  %v2642 = vadd.f32 %v2580, %v2641
  %2643 = vmatmul.bf16.gmra.mxu0 %v2452
  %v2644 = vpop.f32.mrf.mxu0
  %v2645 = vadd.f32 %v2580, %v2644
  %v2646 = vpop.f32.mrf.mxu0
  %v2647 = vadd.f32 %v2580, %v2646
  %2648 = vmatmul.bf16.gmra.mxu0 %v2453
  %v2649 = vpop.f32.mrf.mxu0
  %v2650 = vadd.f32 %v2580, %v2649
  %v2651 = vpop.f32.mrf.mxu0
  %v2652 = vadd.f32 %v2580, %v2651
  %2653 = vmatmul.bf16.gmra.mxu0 %v2454
  %v2654 = vpop.f32.mrf.mxu0
  %v2655 = vadd.f32 %v2580, %v2654
  %v2656 = vpop.f32.mrf.mxu0
  %v2657 = vadd.f32 %v2580, %v2656
  %2658 = vmatmul.bf16.gmra.mxu0 %v2455
  %v2659 = vpop.f32.mrf.mxu0
  %v2660 = vadd.f32 %v2580, %v2659
  %v2661 = vpop.f32.mrf.mxu0
  %v2662 = vadd.f32 %v2580, %v2661
  %2663 = vmatmul.bf16.gmra.mxu0 %v2456
  %v2664 = vpop.f32.mrf.mxu0
  %v2665 = vadd.f32 %v2580, %v2664
  %v2666 = vpop.f32.mrf.mxu0
  %v2667 = vadd.f32 %v2580, %v2666
  %2668 = vmatmul.bf16.gmra.mxu0 %v2457
  %v2669 = vpop.f32.mrf.mxu0
  %v2670 = vadd.f32 %v2580, %v2669
  %v2671 = vpop.f32.mrf.mxu0
  %v2672 = vadd.f32 %v2580, %v2671
  %2673 = vmatmul.bf16.gmra.mxu0 %v2458
  %v2674 = vpop.f32.mrf.mxu0
  %v2675 = vadd.f32 %v2580, %v2674
  %v2676 = vpop.f32.mrf.mxu0
  %v2677 = vadd.f32 %v2580, %v2676
  %2678 = vmatmul.bf16.gmra.mxu0 %v2459
  %v2679 = vpop.f32.mrf.mxu0
  %v2680 = vadd.f32 %v2580, %v2679
  %v2681 = vpop.f32.mrf.mxu0
  %v2682 = vadd.f32 %v2580, %v2681
  %2683 = vmatmul.bf16.gmra.mxu0 %v2460
  %v2684 = vpop.f32.mrf.mxu0
  %v2685 = vadd.f32 %v2580, %v2684
  %v2686 = vpop.f32.mrf.mxu0
  %v2687 = vadd.f32 %v2580, %v2686
  %2688 = vmatmul.bf16.gmra.mxu0 %v2461
  %v2689 = vpop.f32.mrf.mxu0
  %v2690 = vadd.f32 %v2580, %v2689
  %v2691 = vpop.f32.mrf.mxu0
  %v2692 = vadd.f32 %v2580, %v2691
  %2693 = vmatmul.bf16.gmra.mxu0 %v2462
  %v2694 = vpop.f32.mrf.mxu0
  %v2695 = vadd.f32 %v2580, %v2694
  %v2696 = vpop.f32.mrf.mxu0
  %v2697 = vadd.f32 %v2580, %v2696
  %2698 = vmatmul.bf16.gmra.mxu0 %v2463
  %v2699 = vpop.f32.mrf.mxu0
  %v2700 = vadd.f32 %v2580, %v2699
  %v2701 = vpop.f32.mrf.mxu0
  %v2702 = vadd.f32 %v2580, %v2701
  %2703 = vmatmul.bf16.gmra.mxu0 %v2464
  %v2704 = vpop.f32.mrf.mxu0
  %v2705 = vadd.f32 %v2580, %v2704
  %v2706 = vpop.f32.mrf.mxu0
  %v2707 = vadd.f32 %v2580, %v2706
  %2708 = vmatmul.bf16.gmra.mxu0 %v2465
  %v2709 = vpop.f32.mrf.mxu0
  %v2710 = vadd.f32 %v2580, %v2709
  %v2711 = vpop.f32.mrf.mxu0
  %v2712 = vadd.f32 %v2580, %v2711
  %2713 = vmatmul.bf16.gmra.mxu0 %v2466
  %v2714 = vpop.f32.mrf.mxu0
  %v2715 = vadd.f32 %v2580, %v2714
  %v2716 = vpop.f32.mrf.mxu0
  %v2717 = vadd.f32 %v2580, %v2716
  %2718 = vmatmul.bf16.gmra.mxu0 %v2467
  %v2719 = vpop.f32.mrf.mxu0
  %v2720 = vadd.f32 %v2580, %v2719
  %v2721 = vpop.f32.mrf.mxu0
  %v2722 = vadd.f32 %v2580, %v2721
  %2723 = vmatmul.bf16.gmra.mxu0 %v2468
  %v2724 = vpop.f32.mrf.mxu0
  %v2725 = vadd.f32 %v2580, %v2724
  %v2726 = vpop.f32.mrf.mxu0
  %v2727 = vadd.f32 %v2580, %v2726
  %2728 = vmatmul.bf16.gmra.mxu0 %v2469
  %v2729 = vpop.f32.mrf.mxu0
  %v2730 = vadd.f32 %v2580, %v2729
  %v2731 = vpop.f32.mrf.mxu0
  %v2732 = vadd.f32 %v2580, %v2731
  %2733 = vmatmul.bf16.gmra.mxu0 %v2470
  %v2734 = vpop.f32.mrf.mxu0
  %v2735 = vadd.f32 %v2580, %v2734
  %v2736 = vpop.f32.mrf.mxu0
  %v2737 = vadd.f32 %v2580, %v2736
  %2738 = vmatmul.bf16.gmra.mxu0 %v2471
  %v2739 = vpop.f32.mrf.mxu0
  %v2740 = vadd.f32 %v2580, %v2739
  %v2741 = vpop.f32.mrf.mxu0
  %v2742 = vadd.f32 %v2580, %v2741
  %2743 = vmatmul.bf16.gmra.mxu0 %v2472
  %v2744 = vpop.f32.mrf.mxu0
  %v2745 = vadd.f32 %v2580, %v2744
  %v2746 = vpop.f32.mrf.mxu0
  %v2747 = vadd.f32 %v2580, %v2746
  %2748 = vmatmul.bf16.gmra.mxu0 %v2473
  %v2749 = vpop.f32.mrf.mxu0
  %v2750 = vadd.f32 %v2580, %v2749
  %v2751 = vpop.f32.mrf.mxu0
  %v2752 = vadd.f32 %v2580, %v2751
  %2753 = vmatmul.bf16.gmra.mxu0 %v2474
  %v2754 = vpop.f32.mrf.mxu0
  %v2755 = vadd.f32 %v2580, %v2754
  %v2756 = vpop.f32.mrf.mxu0
  %v2757 = vadd.f32 %v2580, %v2756
  %2758 = vmatmul.bf16.gmra.mxu0 %v2475
  %v2759 = vpop.f32.mrf.mxu0
  %v2760 = vadd.f32 %v2580, %v2759
  %v2761 = vpop.f32.mrf.mxu0
  %v2762 = vadd.f32 %v2580, %v2761
  %2763 = vmatmul.bf16.gmra.mxu0 %v2476
  %v2764 = vpop.f32.mrf.mxu0
  %v2765 = vadd.f32 %v2580, %v2764
  %v2766 = vpop.f32.mrf.mxu0
  %v2767 = vadd.f32 %v2580, %v2766
  %2768 = vmatmul.bf16.gmra.mxu0 %v2477
  %v2769 = vpop.f32.mrf.mxu0
  %v2770 = vadd.f32 %v2580, %v2769
  %v2771 = vpop.f32.mrf.mxu0
  %v2772 = vadd.f32 %v2580, %v2771
  %2773 = vmatmul.bf16.gmra.mxu0 %v2478
  %v2774 = vpop.f32.mrf.mxu0
  %v2775 = vadd.f32 %v2580, %v2774
  %v2776 = vpop.f32.mrf.mxu0
  %v2777 = vadd.f32 %v2580, %v2776
  %2778 = vmatmul.bf16.gmra.mxu0 %v2479
  %v2779 = vpop.f32.mrf.mxu0
  %v2780 = vadd.f32 %v2580, %v2779
  %v2781 = vpop.f32.mrf.mxu0
  %v2782 = vadd.f32 %v2580, %v2781
  %2783 = vmatmul.bf16.gmra.mxu0 %v2480
  %v2784 = vpop.f32.mrf.mxu0
  %v2785 = vadd.f32 %v2580, %v2784
  %v2786 = vpop.f32.mrf.mxu0
  %v2787 = vadd.f32 %v2580, %v2786
  %2788 = vmatmul.bf16.gmra.mxu0 %v2481
  %v2789 = vpop.f32.mrf.mxu0
  %v2790 = vadd.f32 %v2580, %v2789
  %v2791 = vpop.f32.mrf.mxu0
  %v2792 = vadd.f32 %v2580, %v2791
  %2793 = vmatmul.bf16.gmra.mxu0 %v2482
  %v2794 = vpop.f32.mrf.mxu0
  %v2795 = vadd.f32 %v2580, %v2794
  %v2796 = vpop.f32.mrf.mxu0
  %v2797 = vadd.f32 %v2580, %v2796
  %2798 = vmatmul.bf16.gmra.mxu0 %v2483
  %v2799 = vpop.f32.mrf.mxu0
  %v2800 = vadd.f32 %v2580, %v2799
  %v2801 = vpop.f32.mrf.mxu0
  %v2802 = vadd.f32 %v2580, %v2801
  %2803 = vmatmul.bf16.gmra.mxu0 %v2484
  %v2804 = vpop.f32.mrf.mxu0
  %v2805 = vadd.f32 %v2580, %v2804
  %v2806 = vpop.f32.mrf.mxu0
  %v2807 = vadd.f32 %v2580, %v2806
  %2808 = vmatmul.bf16.gmra.mxu0 %v2485
  %v2809 = vpop.f32.mrf.mxu0
  %v2810 = vadd.f32 %v2580, %v2809
  %v2811 = vpop.f32.mrf.mxu0
  %v2812 = vadd.f32 %v2580, %v2811
  %2813 = vmatmul.bf16.gmra.mxu0 %v2486
  %v2814 = vpop.f32.mrf.mxu0
  %v2815 = vadd.f32 %v2580, %v2814
  %v2816 = vpop.f32.mrf.mxu0
  %v2817 = vadd.f32 %v2580, %v2816
  %2818 = vmatmul.bf16.gmra.mxu0 %v2487
  %v2819 = vpop.f32.mrf.mxu0
  %v2820 = vadd.f32 %v2580, %v2819
  %v2821 = vpop.f32.mrf.mxu0
  %v2822 = vadd.f32 %v2580, %v2821
  %2823 = vmatmul.bf16.gmra.mxu0 %v2488
  %v2824 = vpop.f32.mrf.mxu0
  %v2825 = vadd.f32 %v2580, %v2824
  %v2826 = vpop.f32.mrf.mxu0
  %v2827 = vadd.f32 %v2580, %v2826
  %2828 = vmatmul.bf16.gmra.mxu0 %v2489
  %v2829 = vpop.f32.mrf.mxu0
  %v2830 = vadd.f32 %v2580, %v2829
  %v2831 = vpop.f32.mrf.mxu0
  %v2832 = vadd.f32 %v2580, %v2831
  %2833 = vmatmul.bf16.gmra.mxu0 %v2490
  %v2834 = vpop.f32.mrf.mxu0
  %v2835 = vadd.f32 %v2580, %v2834
  %v2836 = vpop.f32.mrf.mxu0
  %v2837 = vadd.f32 %v2580, %v2836
  %2838 = vmatmul.bf16.gmra.mxu0 %v2491
  %v2839 = vpop.f32.mrf.mxu0
  %v2840 = vadd.f32 %v2580, %v2839
  %v2841 = vpop.f32.mrf.mxu0
  %v2842 = vadd.f32 %v2580, %v2841
  %2843 = vmatmul.bf16.gmra.mxu0 %v2492
  %v2844 = vpop.f32.mrf.mxu0
  %v2845 = vadd.f32 %v2580, %v2844
  %v2846 = vpop.f32.mrf.mxu0
  %v2847 = vadd.f32 %v2580, %v2846
  %2848 = vmatmul.bf16.gmra.mxu0 %v2493
  %v2849 = vpop.f32.mrf.mxu0
  %v2850 = vadd.f32 %v2580, %v2849
  %v2851 = vpop.f32.mrf.mxu0
  %v2852 = vadd.f32 %v2580, %v2851
  %2853 = vmatmul.bf16.gmra.mxu0 %v2494
  %v2854 = vpop.f32.mrf.mxu0
  %v2855 = vadd.f32 %v2580, %v2854
  %v2856 = vpop.f32.mrf.mxu0
  %v2857 = vadd.f32 %v2580, %v2856
  %2858 = vmatmul.bf16.gmra.mxu0 %v2495
  %v2859 = vpop.f32.mrf.mxu0
  %v2860 = vadd.f32 %v2580, %v2859
  %v2861 = vpop.f32.mrf.mxu0
  %v2862 = vadd.f32 %v2580, %v2861
  %2863 = vmatmul.bf16.gmra.mxu0 %v2496
  %v2864 = vpop.f32.mrf.mxu0
  %v2865 = vadd.f32 %v2580, %v2864
  %v2866 = vpop.f32.mrf.mxu0
  %v2867 = vadd.f32 %v2580, %v2866
  %2868 = vmatmul.bf16.gmra.mxu0 %v2497
  %v2869 = vpop.f32.mrf.mxu0
  %v2870 = vadd.f32 %v2580, %v2869
  %v2871 = vpop.f32.mrf.mxu0
  %v2872 = vadd.f32 %v2580, %v2871
  %2873 = vmatmul.bf16.gmra.mxu0 %v2498
  %v2874 = vpop.f32.mrf.mxu0
  %v2875 = vadd.f32 %v2580, %v2874
  %v2876 = vpop.f32.mrf.mxu0
  %v2877 = vadd.f32 %v2580, %v2876
  %2878 = vmatmul.bf16.gmra.mxu0 %v2499
  %v2879 = vpop.f32.mrf.mxu0
  %v2880 = vadd.f32 %v2580, %v2879
  %v2881 = vpop.f32.mrf.mxu0
  %v2882 = vadd.f32 %v2580, %v2881
  %2883 = vmatmul.bf16.gmra.mxu0 %v2500
  %v2884 = vpop.f32.mrf.mxu0
  %v2885 = vadd.f32 %v2580, %v2884
  %v2886 = vpop.f32.mrf.mxu0
  %v2887 = vadd.f32 %v2580, %v2886
  %2888 = vmatmul.bf16.gmra.mxu0 %v2501
  %v2889 = vpop.f32.mrf.mxu0
  %v2890 = vadd.f32 %v2580, %v2889
  %v2891 = vpop.f32.mrf.mxu0
  %v2892 = vadd.f32 %v2580, %v2891
  %2893 = vmatmul.bf16.gmra.mxu0 %v2502
  %v2894 = vpop.f32.mrf.mxu0
  %v2895 = vadd.f32 %v2580, %v2894
  %v2896 = vpop.f32.mrf.mxu0
  %v2897 = vadd.f32 %v2580, %v2896
  %2898 = vmatmul.bf16.gmra.mxu0 %v2503
  %v2899 = vpop.f32.mrf.mxu0
  %v2900 = vadd.f32 %v2580, %v2899
  %v2901 = vpop.f32.mrf.mxu0
  %v2902 = vadd.f32 %v2580, %v2901
  %2903 = vmatmul.bf16.gmra.mxu0 %v2504
  %v2904 = vpop.f32.mrf.mxu0
  %v2905 = vadd.f32 %v2580, %v2904
  %v2906 = vpop.f32.mrf.mxu0
  %v2907 = vadd.f32 %v2580, %v2906
  %2908 = vmatmul.bf16.gmra.mxu0 %v2505
  %v2909 = vpop.f32.mrf.mxu0
  %v2910 = vadd.f32 %v2580, %v2909
  %v2911 = vpop.f32.mrf.mxu0
  %v2912 = vadd.f32 %v2580, %v2911
  %2913 = vmatmul.bf16.gmra.mxu0 %v2506
  %v2914 = vpop.f32.mrf.mxu0
  %v2915 = vadd.f32 %v2580, %v2914
  %v2916 = vpop.f32.mrf.mxu0
  %v2917 = vadd.f32 %v2580, %v2916
  %2918 = vmatmul.bf16.gmra.mxu0 %v2507
  %v2919 = vpop.f32.mrf.mxu0
  %v2920 = vadd.f32 %v2580, %v2919
  %v2921 = vpop.f32.mrf.mxu0
  %v2922 = vadd.f32 %v2580, %v2921
  %2923 = vmatmul.bf16.gmra.mxu0 %v2508
  %v2924 = vpop.f32.mrf.mxu0
  %v2925 = vadd.f32 %v2580, %v2924
  %v2926 = vpop.f32.mrf.mxu0
  %v2927 = vadd.f32 %v2580, %v2926
  %2928 = vmatmul.bf16.gmra.mxu0 %v2509
  %v2929 = vpop.f32.mrf.mxu0
  %v2930 = vadd.f32 %v2580, %v2929
  %v2931 = vpop.f32.mrf.mxu0
  %v2932 = vadd.f32 %v2580, %v2931
  %2933 = vmatmul.bf16.gmra.mxu0 %v2510
  %v2934 = vpop.f32.mrf.mxu0
  %v2935 = vadd.f32 %v2580, %v2934
  %v2936 = vpop.f32.mrf.mxu0
  %v2937 = vadd.f32 %v2580, %v2936
  %2938 = vmatmul.bf16.gmra.mxu0 %v2511
  %v2939 = vpop.f32.mrf.mxu0
  %v2940 = vadd.f32 %v2580, %v2939
  %v2941 = vpop.f32.mrf.mxu0
  %v2942 = vadd.f32 %v2580, %v2941
  %2943 = vmatmul.bf16.gmra.mxu0 %v2512
  %v2944 = vpop.f32.mrf.mxu0
  %v2945 = vadd.f32 %v2580, %v2944
  %v2946 = vpop.f32.mrf.mxu0
  %v2947 = vadd.f32 %v2580, %v2946
  %2948 = vmatmul.bf16.gmra.mxu0 %v2513
  %v2949 = vpop.f32.mrf.mxu0
  %v2950 = vadd.f32 %v2580, %v2949
  %v2951 = vpop.f32.mrf.mxu0
  %v2952 = vadd.f32 %v2580, %v2951
  %2953 = vmatmul.bf16.gmra.mxu0 %v2514
  %v2954 = vpop.f32.mrf.mxu0
  %v2955 = vadd.f32 %v2580, %v2954
  %v2956 = vpop.f32.mrf.mxu0
  %v2957 = vadd.f32 %v2580, %v2956
  %2958 = vmatmul.bf16.gmra.mxu0 %v2515
  %v2959 = vpop.f32.mrf.mxu0
  %v2960 = vadd.f32 %v2580, %v2959
  %v2961 = vpop.f32.mrf.mxu0
  %v2962 = vadd.f32 %v2580, %v2961
  %2963 = vmatmul.bf16.gmra.mxu0 %v2516
  %v2964 = vpop.f32.mrf.mxu0
  %v2965 = vadd.f32 %v2580, %v2964
  %v2966 = vpop.f32.mrf.mxu0
  %v2967 = vadd.f32 %v2580, %v2966
  %2968 = vmatmul.bf16.gmra.mxu0 %v2517
  %v2969 = vpop.f32.mrf.mxu0
  %v2970 = vadd.f32 %v2580, %v2969
  %v2971 = vpop.f32.mrf.mxu0
  %v2972 = vadd.f32 %v2580, %v2971
  %2973 = vmatmul.bf16.gmra.mxu0 %v2518
  %v2974 = vpop.f32.mrf.mxu0
  %v2975 = vadd.f32 %v2580, %v2974
  %v2976 = vpop.f32.mrf.mxu0
  %v2977 = vadd.f32 %v2580, %v2976
  %2978 = vmatmul.bf16.gmra.mxu0 %v2519
  %v2979 = vpop.f32.mrf.mxu0
  %v2980 = vadd.f32 %v2580, %v2979
  %v2981 = vpop.f32.mrf.mxu0
  %v2982 = vadd.f32 %v2580, %v2981
  %2983 = vmatmul.bf16.gmra.mxu0 %v2520
  %v2984 = vpop.f32.mrf.mxu0
  %v2985 = vadd.f32 %v2580, %v2984
  %v2986 = vpop.f32.mrf.mxu0
  %v2987 = vadd.f32 %v2580, %v2986
  %2988 = vmatmul.bf16.gmra.mxu0 %v2521
  %v2989 = vpop.f32.mrf.mxu0
  %v2990 = vadd.f32 %v2580, %v2989
  %v2991 = vpop.f32.mrf.mxu0
  %v2992 = vadd.f32 %v2580, %v2991
  %2993 = vmatmul.bf16.gmra.mxu0 %v2522
  %v2994 = vpop.f32.mrf.mxu0
  %v2995 = vadd.f32 %v2580, %v2994
  %v2996 = vpop.f32.mrf.mxu0
  %v2997 = vadd.f32 %v2580, %v2996
  %2998 = vmatmul.bf16.gmra.mxu0 %v2523
  %v2999 = vpop.f32.mrf.mxu0
  %v3000 = vadd.f32 %v2580, %v2999
  %v3001 = vpop.f32.mrf.mxu0
  %v3002 = vadd.f32 %v2580, %v3001
  %3003 = vmatmul.bf16.gmra.mxu0 %v2524
  %v3004 = vpop.f32.mrf.mxu0
  %v3005 = vadd.f32 %v2580, %v3004
  %v3006 = vpop.f32.mrf.mxu0
  %v3007 = vadd.f32 %v2580, %v3006
  %3008 = vmatmul.bf16.gmra.mxu0 %v2525
  %v3009 = vpop.f32.mrf.mxu0
  %v3010 = vadd.f32 %v2580, %v3009
  %v3011 = vpop.f32.mrf.mxu0
  %v3012 = vadd.f32 %v2580, %v3011
  %3013 = vmatmul.bf16.gmra.mxu0 %v2526
  %v3014 = vpop.f32.mrf.mxu0
  %v3015 = vadd.f32 %v2580, %v3014
  %v3016 = vpop.f32.mrf.mxu0
  %v3017 = vadd.f32 %v2580, %v3016
  %3018 = vmatmul.bf16.gmra.mxu0 %v2527
  %v3019 = vpop.f32.mrf.mxu0
  %v3020 = vadd.f32 %v2580, %v3019
  %v3021 = vpop.f32.mrf.mxu0
  %v3022 = vadd.f32 %v2580, %v3021
  %3023 = vmatmul.bf16.gmra.mxu0 %v2528
  %v3024 = vpop.f32.mrf.mxu0
  %v3025 = vadd.f32 %v2580, %v3024
  %v3026 = vpop.f32.mrf.mxu0
  %v3027 = vadd.f32 %v2580, %v3026
  %3028 = vmatmul.bf16.gmra.mxu0 %v2529
  %v3029 = vpop.f32.mrf.mxu0
  %v3030 = vadd.f32 %v2580, %v3029
  %v3031 = vpop.f32.mrf.mxu0
  %v3032 = vadd.f32 %v2580, %v3031
  %3033 = vmatmul.bf16.gmra.mxu0 %v2530
  %v3034 = vpop.f32.mrf.mxu0
  %v3035 = vadd.f32 %v2580, %v3034
  %v3036 = vpop.f32.mrf.mxu0
  %v3037 = vadd.f32 %v2580, %v3036
  %3038 = vmatmul.bf16.gmra.mxu0 %v2531
  %v3039 = vpop.f32.mrf.mxu0
  %v3040 = vadd.f32 %v2580, %v3039
  %v3041 = vpop.f32.mrf.mxu0
  %v3042 = vadd.f32 %v2580, %v3041
  %3043 = vmatmul.bf16.gmra.mxu0 %v2532
  %v3044 = vpop.f32.mrf.mxu0
  %v3045 = vadd.f32 %v2580, %v3044
  %v3046 = vpop.f32.mrf.mxu0
  %v3047 = vadd.f32 %v2580, %v3046
  %3048 = vmatmul.bf16.gmra.mxu0 %v2533
  %v3049 = vpop.f32.mrf.mxu0
  %v3050 = vadd.f32 %v2580, %v3049
  %v3051 = vpop.f32.mrf.mxu0
  %v3052 = vadd.f32 %v2580, %v3051
  %3053 = vmatmul.bf16.gmra.mxu0 %v2534
  %v3054 = vpop.f32.mrf.mxu0
  %v3055 = vadd.f32 %v2580, %v3054
  %v3056 = vpop.f32.mrf.mxu0
  %v3057 = vadd.f32 %v2580, %v3056
  %3058 = vmatmul.bf16.gmra.mxu0 %v2535
  %v3059 = vpop.f32.mrf.mxu0
  %v3060 = vadd.f32 %v2580, %v3059
  %v3061 = vpop.f32.mrf.mxu0
  %v3062 = vadd.f32 %v2580, %v3061
  %3063 = vmatmul.bf16.gmra.mxu0 %v2536
  %v3064 = vpop.f32.mrf.mxu0
  %v3065 = vadd.f32 %v2580, %v3064
  %v3066 = vpop.f32.mrf.mxu0
  %v3067 = vadd.f32 %v2580, %v3066
  %3068 = vmatmul.bf16.gmra.mxu0 %v2537
  %v3069 = vpop.f32.mrf.mxu0
  %v3070 = vadd.f32 %v2580, %v3069
  %v3071 = vpop.f32.mrf.mxu0
  %v3072 = vadd.f32 %v2580, %v3071
  %3073 = vmatmul.bf16.gmra.mxu0 %v2538
  %v3074 = vpop.f32.mrf.mxu0
  %v3075 = vadd.f32 %v2580, %v3074
  %v3076 = vpop.f32.mrf.mxu0
  %v3077 = vadd.f32 %v2580, %v3076
  %3078 = vmatmul.bf16.gmra.mxu0 %v2539
  %v3079 = vpop.f32.mrf.mxu0
  %v3080 = vadd.f32 %v2580, %v3079
  %v3081 = vpop.f32.mrf.mxu0
  %v3082 = vadd.f32 %v2580, %v3081
  %3083 = vmatmul.bf16.gmra.mxu0 %v2540
  %v3084 = vpop.f32.mrf.mxu0
  %v3085 = vadd.f32 %v2580, %v3084
  %v3086 = vpop.f32.mrf.mxu0
  %v3087 = vadd.f32 %v2580, %v3086
  %3088 = vmatmul.bf16.gmra.mxu0 %v2541
  %v3089 = vpop.f32.mrf.mxu0
  %v3090 = vadd.f32 %v2580, %v3089
  %v3091 = vpop.f32.mrf.mxu0
  %v3092 = vadd.f32 %v2580, %v3091
  %3093 = vmatmul.bf16.gmra.mxu0 %v2542
  %v3094 = vpop.f32.mrf.mxu0
  %v3095 = vadd.f32 %v2580, %v3094
  %v3096 = vpop.f32.mrf.mxu0
  %v3097 = vadd.f32 %v2580, %v3096
  %3098 = vmatmul.bf16.gmra.mxu0 %v2543
  %v3099 = vpop.f32.mrf.mxu0
  %v3100 = vadd.f32 %v2580, %v3099
  %v3101 = vpop.f32.mrf.mxu0
  %v3102 = vadd.f32 %v2580, %v3101
  %3103 = vmatmul.bf16.gmra.mxu0 %v2544
  %v3104 = vpop.f32.mrf.mxu0
  %v3105 = vadd.f32 %v2580, %v3104
  %v3106 = vpop.f32.mrf.mxu0
  %v3107 = vadd.f32 %v2580, %v3106
  %3108 = vmatmul.bf16.gmra.mxu0 %v2545
  %v3109 = vpop.f32.mrf.mxu0
  %v3110 = vadd.f32 %v2580, %v3109
  %v3111 = vpop.f32.mrf.mxu0
  %v3112 = vadd.f32 %v2580, %v3111
  %3113 = vmatmul.bf16.gmra.mxu0 %v2546
  %v3114 = vpop.f32.mrf.mxu0
  %v3115 = vadd.f32 %v2580, %v3114
  %v3116 = vpop.f32.mrf.mxu0
  %v3117 = vadd.f32 %v2580, %v3116
  %3118 = vmatmul.bf16.gmra.mxu0 %v2547
  %v3119 = vpop.f32.mrf.mxu0
  %v3120 = vadd.f32 %v2580, %v3119
  %v3121 = vpop.f32.mrf.mxu0
  %v3122 = vadd.f32 %v2580, %v3121
  %3123 = vmatmul.bf16.gmra.mxu0 %v2548
  %v3124 = vpop.f32.mrf.mxu0
  %v3125 = vadd.f32 %v2580, %v3124
  %v3126 = vpop.f32.mrf.mxu0
  %v3127 = vadd.f32 %v2580, %v3126
  %3128 = vmatmul.bf16.gmra.mxu0 %v2549
  %v3129 = vpop.f32.mrf.mxu0
  %v3130 = vadd.f32 %v2580, %v3129
  %v3131 = vpop.f32.mrf.mxu0
  %v3132 = vadd.f32 %v2580, %v3131
  %3133 = vmatmul.bf16.gmra.mxu0 %v2550
  %v3134 = vpop.f32.mrf.mxu0
  %v3135 = vadd.f32 %v2580, %v3134
  %v3136 = vpop.f32.mrf.mxu0
  %v3137 = vadd.f32 %v2580, %v3136
  %3138 = vmatmul.bf16.gmra.mxu0 %v2551
  %v3139 = vpop.f32.mrf.mxu0
  %v3140 = vadd.f32 %v2580, %v3139
  %v3141 = vpop.f32.mrf.mxu0
  %v3142 = vadd.f32 %v2580, %v3141
  %3143 = vmatmul.bf16.gmra.mxu0 %v2552
  %v3144 = vpop.f32.mrf.mxu0
  %v3145 = vadd.f32 %v2580, %v3144
  %v3146 = vpop.f32.mrf.mxu0
  %v3147 = vadd.f32 %v2580, %v3146
  %3148 = vmatmul.bf16.gmra.mxu0 %v2553
  %v3149 = vpop.f32.mrf.mxu0
  %v3150 = vadd.f32 %v2580, %v3149
  %v3151 = vpop.f32.mrf.mxu0
  %v3152 = vadd.f32 %v2580, %v3151
  %3153 = vmatmul.bf16.gmra.mxu0 %v2554
  %v3154 = vpop.f32.mrf.mxu0
  %v3155 = vadd.f32 %v2580, %v3154
  %v3156 = vpop.f32.mrf.mxu0
  %v3157 = vadd.f32 %v2580, %v3156
  %3158 = vmatmul.bf16.gmra.mxu0 %v2555
  %v3159 = vpop.f32.mrf.mxu0
  %v3160 = vadd.f32 %v2580, %v3159
  %v3161 = vpop.f32.mrf.mxu0
  %v3162 = vadd.f32 %v2580, %v3161
  %3163 = vmatmul.bf16.gmra.mxu0 %v2556
  %v3164 = vpop.f32.mrf.mxu0
  %v3165 = vadd.f32 %v2580, %v3164
  %v3166 = vpop.f32.mrf.mxu0
  %v3167 = vadd.f32 %v2580, %v3166
  %3168 = vmatmul.bf16.gmra.mxu0 %v2557
  %v3169 = vpop.f32.mrf.mxu0
  %v3170 = vadd.f32 %v2580, %v3169
  %v3171 = vpop.f32.mrf.mxu0
  %v3172 = vadd.f32 %v2580, %v3171
  %3173 = vmatmul.bf16.gmra.mxu0 %v2558
  %v3174 = vpop.f32.mrf.mxu0
  %v3175 = vadd.f32 %v2580, %v3174
  %v3176 = vpop.f32.mrf.mxu0
  %v3177 = vadd.f32 %v2580, %v3176
  %3178 = vmatmul.bf16.gmra.mxu0 %v2559
  %v3179 = vpop.f32.mrf.mxu0
  %v3180 = vadd.f32 %v2580, %v3179
  %v3181 = vpop.f32.mrf.mxu0
  %v3182 = vadd.f32 %v2580, %v3181
  %3183 = vmatmul.bf16.gmra.mxu0 %v2560
  %v3184 = vpop.f32.mrf.mxu0
  %v3185 = vadd.f32 %v2580, %v3184
  %v3186 = vpop.f32.mrf.mxu0
  %v3187 = vadd.f32 %v2580, %v3186
  %3188 = vmatmul.bf16.gmra.mxu0 %v2561
  %v3189 = vpop.f32.mrf.mxu0
  %v3190 = vadd.f32 %v2580, %v3189
  %v3191 = vpop.f32.mrf.mxu0
  %v3192 = vadd.f32 %v2580, %v3191
  %3193 = vmatmul.bf16.gmra.mxu0 %v2562
  %v3194 = vpop.f32.mrf.mxu0
  %v3195 = vadd.f32 %v2580, %v3194
  %v3196 = vpop.f32.mrf.mxu0
  %v3197 = vadd.f32 %v2580, %v3196
  %3198 = vmatmul.bf16.gmra.mxu0 %v2563
  %v3199 = vpop.f32.mrf.mxu0
  %v3200 = vadd.f32 %v2580, %v3199
  %v3201 = vpop.f32.mrf.mxu0
  %v3202 = vadd.f32 %v2580, %v3201
  %3203 = vmatmul.bf16.gmra.mxu0 %v2564
  %v3204 = vpop.f32.mrf.mxu0
  %v3205 = vadd.f32 %v2580, %v3204
  %v3206 = vpop.f32.mrf.mxu0
  %v3207 = vadd.f32 %v2580, %v3206
  %3208 = vmatmul.bf16.gmra.mxu0 %v2565
  %v3209 = vpop.f32.mrf.mxu0
  %v3210 = vadd.f32 %v2580, %v3209
  %v3211 = vpop.f32.mrf.mxu0
  %v3212 = vadd.f32 %v2580, %v3211
  %3213 = vmatmul.bf16.gmra.mxu0 %v2566
  %v3214 = vpop.f32.mrf.mxu0
  %v3215 = vadd.f32 %v2580, %v3214
  %v3216 = vpop.f32.mrf.mxu0
  %v3217 = vadd.f32 %v2580, %v3216
  %3218 = vmatmul.bf16.gmra.mxu0 %v2567
  %v3219 = vpop.f32.mrf.mxu0
  %v3220 = vadd.f32 %v2580, %v3219
  %v3221 = vpop.f32.mrf.mxu0
  %v3222 = vadd.f32 %v2580, %v3221
  %3223 = vmatmul.bf16.gmra.mxu0 %v2568
  %v3224 = vpop.f32.mrf.mxu0
  %v3225 = vadd.f32 %v2580, %v3224
  %v3226 = vpop.f32.mrf.mxu0
  %v3227 = vadd.f32 %v2580, %v3226
  %3228 = vmatmul.bf16.gmra.mxu0 %v2569
  %v3229 = vpop.f32.mrf.mxu0
  %v3230 = vadd.f32 %v2580, %v3229
  %v3231 = vpop.f32.mrf.mxu0
  %v3232 = vadd.f32 %v2580, %v3231
  %3233 = vmatmul.bf16.gmra.mxu0 %v2570
  %v3234 = vpop.f32.mrf.mxu0
  %v3235 = vadd.f32 %v2580, %v3234
  %v3236 = vpop.f32.mrf.mxu0
  %v3237 = vadd.f32 %v2580, %v3236
  %3238 = vmatmul.bf16.gmra.mxu0 %v2571
  %v3239 = vpop.f32.mrf.mxu0
  %v3240 = vadd.f32 %v2580, %v3239
  %v3241 = vpop.f32.mrf.mxu0
  %v3242 = vadd.f32 %v2580, %v3241
  %3243 = vmatmul.bf16.gmra.mxu0 %v2572
  %v3244 = vpop.f32.mrf.mxu0
  %v3245 = vadd.f32 %v2580, %v3244
  %v3246 = vpop.f32.mrf.mxu0
  %v3247 = vadd.f32 %v2580, %v3246
  %3248 = vmatmul.bf16.gmra.mxu0 %v2573
  %v3249 = vpop.f32.mrf.mxu0
  %v3250 = vadd.f32 %v2580, %v3249
  %v3251 = vpop.f32.mrf.mxu0
  %v3252 = vadd.f32 %v2580, %v3251
  %3253 = vmatmul.bf16.gmra.mxu0 %v2574
  %v3254 = vpop.f32.mrf.mxu0
  %v3255 = vadd.f32 %v2580, %v3254
  %v3256 = vpop.f32.mrf.mxu0
  %v3257 = vadd.f32 %v2580, %v3256
  %3258 = vmatmul.bf16.gmra.mxu0 %v2575
  %v3259 = vpop.f32.mrf.mxu0
  %v3260 = vadd.f32 %v2580, %v3259
  %v3261 = vpop.f32.mrf.mxu0
  %v3262 = vadd.f32 %v2580, %v3261
  %3263 = vmatmul.bf16.gmra.mxu0 %v2576
  %v3264 = vpop.f32.mrf.mxu0
  %v3265 = vadd.f32 %v2580, %v3264
  %v3266 = vpop.f32.mrf.mxu0
  %v3267 = vadd.f32 %v2580, %v3266
  %3268 = vmatmul.bf16.gmra.mxu0 %v2577
  %v3269 = vpop.f32.mrf.mxu0
  %v3270 = vadd.f32 %v2580, %v3269
  %v3271 = vpop.f32.mrf.mxu0
  %v3272 = vadd.f32 %v2580, %v3271
  %3273 = vmatmul.bf16.gmra.mxu0 %v2578
  %v3274 = vpop.f32.mrf.mxu0
  %v3275 = vadd.f32 %v2580, %v3274
  %v3276 = vpop.f32.mrf.mxu0
  %v3277 = vadd.f32 %v2580, %v3276
  %3278 = vdwg.mxu0
  %v3279 = vmax.f32 %v2640, 0.0
  %v3280 = vmax.f32 %v2642, 0.0
  %v3281 = vmax.f32 %v2645, 0.0
  %v3282 = vmax.f32 %v2647, 0.0
  %v3283 = vmax.f32 %v2650, 0.0
  %v3284 = vmax.f32 %v2652, 0.0
  %v3285 = vmax.f32 %v2655, 0.0
  %v3286 = vmax.f32 %v2657, 0.0
  %v3287 = vmax.f32 %v2660, 0.0
  %v3288 = vmax.f32 %v2662, 0.0
  %v3289 = vmax.f32 %v2665, 0.0
  %v3290 = vmax.f32 %v2667, 0.0
  %v3291 = vmax.f32 %v2670, 0.0
  %v3292 = vmax.f32 %v2672, 0.0
  %v3293 = vmax.f32 %v2675, 0.0
  %v3294 = vmax.f32 %v2677, 0.0
  %v3295 = vmax.f32 %v2680, 0.0
  %v3296 = vmax.f32 %v2682, 0.0
  %v3297 = vmax.f32 %v2685, 0.0
  %v3298 = vmax.f32 %v2687, 0.0
  %v3299 = vmax.f32 %v2690, 0.0
  %v3300 = vmax.f32 %v2692, 0.0
  %v3301 = vmax.f32 %v2695, 0.0
  %v3302 = vmax.f32 %v2697, 0.0
  %v3303 = vmax.f32 %v2700, 0.0
  %v3304 = vmax.f32 %v2702, 0.0
  %v3305 = vmax.f32 %v2705, 0.0
  %v3306 = vmax.f32 %v2707, 0.0
  %v3307 = vmax.f32 %v2710, 0.0
  %v3308 = vmax.f32 %v2712, 0.0
  %v3309 = vmax.f32 %v2715, 0.0
  %v3310 = vmax.f32 %v2717, 0.0
  %v3311 = vmax.f32 %v2720, 0.0
  %v3312 = vmax.f32 %v2722, 0.0
  %v3313 = vmax.f32 %v2725, 0.0
  %v3314 = vmax.f32 %v2727, 0.0
  %v3315 = vmax.f32 %v2730, 0.0
  %v3316 = vmax.f32 %v2732, 0.0
  %v3317 = vmax.f32 %v2735, 0.0
  %v3318 = vmax.f32 %v2737, 0.0
  %v3319 = vmax.f32 %v2740, 0.0
  %v3320 = vmax.f32 %v2742, 0.0
  %v3321 = vmax.f32 %v2745, 0.0
  %v3322 = vmax.f32 %v2747, 0.0
  %v3323 = vmax.f32 %v2750, 0.0
  %v3324 = vmax.f32 %v2752, 0.0
  %v3325 = vmax.f32 %v2755, 0.0
  %v3326 = vmax.f32 %v2757, 0.0
  %v3327 = vmax.f32 %v2760, 0.0
  %v3328 = vmax.f32 %v2762, 0.0
  %v3329 = vmax.f32 %v2765, 0.0
  %v3330 = vmax.f32 %v2767, 0.0
  %v3331 = vmax.f32 %v2770, 0.0
  %v3332 = vmax.f32 %v2772, 0.0
  %v3333 = vmax.f32 %v2775, 0.0
  %v3334 = vmax.f32 %v2777, 0.0
  %v3335 = vmax.f32 %v2780, 0.0
  %v3336 = vmax.f32 %v2782, 0.0
  %v3337 = vmax.f32 %v2785, 0.0
  %v3338 = vmax.f32 %v2787, 0.0
  %v3339 = vmax.f32 %v2790, 0.0
  %v3340 = vmax.f32 %v2792, 0.0
  %v3341 = vmax.f32 %v2795, 0.0
  %v3342 = vmax.f32 %v2797, 0.0
  %v3343 = vmax.f32 %v2800, 0.0
  %v3344 = vmax.f32 %v2802, 0.0
  %v3345 = vmax.f32 %v2805, 0.0
  %v3346 = vmax.f32 %v2807, 0.0
  %v3347 = vmax.f32 %v2810, 0.0
  %v3348 = vmax.f32 %v2812, 0.0
  %v3349 = vmax.f32 %v2815, 0.0
  %v3350 = vmax.f32 %v2817, 0.0
  %v3351 = vmax.f32 %v2820, 0.0
  %v3352 = vmax.f32 %v2822, 0.0
  %v3353 = vmax.f32 %v2825, 0.0
  %v3354 = vmax.f32 %v2827, 0.0
  %v3355 = vmax.f32 %v2830, 0.0
  %v3356 = vmax.f32 %v2832, 0.0
  %v3357 = vmax.f32 %v2835, 0.0
  %v3358 = vmax.f32 %v2837, 0.0
  %v3359 = vmax.f32 %v2840, 0.0
  %v3360 = vmax.f32 %v2842, 0.0
  %v3361 = vmax.f32 %v2845, 0.0
  %v3362 = vmax.f32 %v2847, 0.0
  %v3363 = vmax.f32 %v2850, 0.0
  %v3364 = vmax.f32 %v2852, 0.0
  %v3365 = vmax.f32 %v2855, 0.0
  %v3366 = vmax.f32 %v2857, 0.0
  %v3367 = vmax.f32 %v2860, 0.0
  %v3368 = vmax.f32 %v2862, 0.0
  %v3369 = vmax.f32 %v2865, 0.0
  %v3370 = vmax.f32 %v2867, 0.0
  %v3371 = vmax.f32 %v2870, 0.0
  %v3372 = vmax.f32 %v2872, 0.0
  %v3373 = vmax.f32 %v2875, 0.0
  %v3374 = vmax.f32 %v2877, 0.0
  %v3375 = vmax.f32 %v2880, 0.0
  %v3376 = vmax.f32 %v2882, 0.0
  %v3377 = vmax.f32 %v2885, 0.0
  %v3378 = vmax.f32 %v2887, 0.0
  %v3379 = vmax.f32 %v2890, 0.0
  %v3380 = vmax.f32 %v2892, 0.0
  %v3381 = vmax.f32 %v2895, 0.0
  %v3382 = vmax.f32 %v2897, 0.0
  %v3383 = vmax.f32 %v2900, 0.0
  %v3384 = vmax.f32 %v2902, 0.0
  %v3385 = vmax.f32 %v2905, 0.0
  %v3386 = vmax.f32 %v2907, 0.0
  %v3387 = vmax.f32 %v2910, 0.0
  %v3388 = vmax.f32 %v2912, 0.0
  %v3389 = vmax.f32 %v2915, 0.0
  %v3390 = vmax.f32 %v2917, 0.0
  %v3391 = vmax.f32 %v2920, 0.0
  %v3392 = vmax.f32 %v2922, 0.0
  %v3393 = vmax.f32 %v2925, 0.0
  %v3394 = vmax.f32 %v2927, 0.0
  %v3395 = vmax.f32 %v2930, 0.0
  %v3396 = vmax.f32 %v2932, 0.0
  %v3397 = vmax.f32 %v2935, 0.0
  %v3398 = vmax.f32 %v2937, 0.0
  %v3399 = vmax.f32 %v2940, 0.0
  %v3400 = vmax.f32 %v2942, 0.0
  %v3401 = vmax.f32 %v2945, 0.0
  %v3402 = vmax.f32 %v2947, 0.0
  %v3403 = vmax.f32 %v2950, 0.0
  %v3404 = vmax.f32 %v2952, 0.0
  %v3405 = vmax.f32 %v2955, 0.0
  %v3406 = vmax.f32 %v2957, 0.0
  %v3407 = vmax.f32 %v2960, 0.0
  %v3408 = vmax.f32 %v2962, 0.0
  %v3409 = vmax.f32 %v2965, 0.0
  %v3410 = vmax.f32 %v2967, 0.0
  %v3411 = vmax.f32 %v2970, 0.0
  %v3412 = vmax.f32 %v2972, 0.0
  %v3413 = vmax.f32 %v2975, 0.0
  %v3414 = vmax.f32 %v2977, 0.0
  %v3415 = vmax.f32 %v2980, 0.0
  %v3416 = vmax.f32 %v2982, 0.0
  %v3417 = vmax.f32 %v2985, 0.0
  %v3418 = vmax.f32 %v2987, 0.0
  %v3419 = vmax.f32 %v2990, 0.0
  %v3420 = vmax.f32 %v2992, 0.0
  %v3421 = vmax.f32 %v2995, 0.0
  %v3422 = vmax.f32 %v2997, 0.0
  %v3423 = vmax.f32 %v3000, 0.0
  %v3424 = vmax.f32 %v3002, 0.0
  %v3425 = vmax.f32 %v3005, 0.0
  %v3426 = vmax.f32 %v3007, 0.0
  %v3427 = vmax.f32 %v3010, 0.0
  %v3428 = vmax.f32 %v3012, 0.0
  %v3429 = vmax.f32 %v3015, 0.0
  %v3430 = vmax.f32 %v3017, 0.0
  %v3431 = vmax.f32 %v3020, 0.0
  %v3432 = vmax.f32 %v3022, 0.0
  %v3433 = vmax.f32 %v3025, 0.0
  %v3434 = vmax.f32 %v3027, 0.0
  %v3435 = vmax.f32 %v3030, 0.0
  %v3436 = vmax.f32 %v3032, 0.0
  %v3437 = vmax.f32 %v3035, 0.0
  %v3438 = vmax.f32 %v3037, 0.0
  %v3439 = vmax.f32 %v3040, 0.0
  %v3440 = vmax.f32 %v3042, 0.0
  %v3441 = vmax.f32 %v3045, 0.0
  %v3442 = vmax.f32 %v3047, 0.0
  %v3443 = vmax.f32 %v3050, 0.0
  %v3444 = vmax.f32 %v3052, 0.0
  %v3445 = vmax.f32 %v3055, 0.0
  %v3446 = vmax.f32 %v3057, 0.0
  %v3447 = vmax.f32 %v3060, 0.0
  %v3448 = vmax.f32 %v3062, 0.0
  %v3449 = vmax.f32 %v3065, 0.0
  %v3450 = vmax.f32 %v3067, 0.0
  %v3451 = vmax.f32 %v3070, 0.0
  %v3452 = vmax.f32 %v3072, 0.0
  %v3453 = vmax.f32 %v3075, 0.0
  %v3454 = vmax.f32 %v3077, 0.0
  %v3455 = vmax.f32 %v3080, 0.0
  %v3456 = vmax.f32 %v3082, 0.0
  %v3457 = vmax.f32 %v3085, 0.0
  %v3458 = vmax.f32 %v3087, 0.0
  %v3459 = vmax.f32 %v3090, 0.0
  %v3460 = vmax.f32 %v3092, 0.0
  %v3461 = vmax.f32 %v3095, 0.0
  %v3462 = vmax.f32 %v3097, 0.0
  %v3463 = vmax.f32 %v3100, 0.0
  %v3464 = vmax.f32 %v3102, 0.0
  %v3465 = vmax.f32 %v3105, 0.0
  %v3466 = vmax.f32 %v3107, 0.0
  %v3467 = vmax.f32 %v3110, 0.0
  %v3468 = vmax.f32 %v3112, 0.0
  %v3469 = vmax.f32 %v3115, 0.0
  %v3470 = vmax.f32 %v3117, 0.0
  %v3471 = vmax.f32 %v3120, 0.0
  %v3472 = vmax.f32 %v3122, 0.0
  %v3473 = vmax.f32 %v3125, 0.0
  %v3474 = vmax.f32 %v3127, 0.0
  %v3475 = vmax.f32 %v3130, 0.0
  %v3476 = vmax.f32 %v3132, 0.0
  %v3477 = vmax.f32 %v3135, 0.0
  %v3478 = vmax.f32 %v3137, 0.0
  %v3479 = vmax.f32 %v3140, 0.0
  %v3480 = vmax.f32 %v3142, 0.0
  %v3481 = vmax.f32 %v3145, 0.0
  %v3482 = vmax.f32 %v3147, 0.0
  %v3483 = vmax.f32 %v3150, 0.0
  %v3484 = vmax.f32 %v3152, 0.0
  %v3485 = vmax.f32 %v3155, 0.0
  %v3486 = vmax.f32 %v3157, 0.0
  %v3487 = vmax.f32 %v3160, 0.0
  %v3488 = vmax.f32 %v3162, 0.0
  %v3489 = vmax.f32 %v3165, 0.0
  %v3490 = vmax.f32 %v3167, 0.0
  %v3491 = vmax.f32 %v3170, 0.0
  %v3492 = vmax.f32 %v3172, 0.0
  %v3493 = vmax.f32 %v3175, 0.0
  %v3494 = vmax.f32 %v3177, 0.0
  %v3495 = vmax.f32 %v3180, 0.0
  %v3496 = vmax.f32 %v3182, 0.0
  %v3497 = vmax.f32 %v3185, 0.0
  %v3498 = vmax.f32 %v3187, 0.0
  %v3499 = vmax.f32 %v3190, 0.0
  %v3500 = vmax.f32 %v3192, 0.0
  %v3501 = vmax.f32 %v3195, 0.0
  %v3502 = vmax.f32 %v3197, 0.0
  %v3503 = vmax.f32 %v3200, 0.0
  %v3504 = vmax.f32 %v3202, 0.0
  %v3505 = vmax.f32 %v3205, 0.0
  %v3506 = vmax.f32 %v3207, 0.0
  %v3507 = vmax.f32 %v3210, 0.0
  %v3508 = vmax.f32 %v3212, 0.0
  %v3509 = vmax.f32 %v3215, 0.0
  %v3510 = vmax.f32 %v3217, 0.0
  %v3511 = vmax.f32 %v3220, 0.0
  %v3512 = vmax.f32 %v3222, 0.0
  %v3513 = vmax.f32 %v3225, 0.0
  %v3514 = vmax.f32 %v3227, 0.0
  %v3515 = vmax.f32 %v3230, 0.0
  %v3516 = vmax.f32 %v3232, 0.0
  %v3517 = vmax.f32 %v3235, 0.0
  %v3518 = vmax.f32 %v3237, 0.0
  %v3519 = vmax.f32 %v3240, 0.0
  %v3520 = vmax.f32 %v3242, 0.0
  %v3521 = vmax.f32 %v3245, 0.0
  %v3522 = vmax.f32 %v3247, 0.0
  %v3523 = vmax.f32 %v3250, 0.0
  %v3524 = vmax.f32 %v3252, 0.0
  %v3525 = vmax.f32 %v3255, 0.0
  %v3526 = vmax.f32 %v3257, 0.0
  %v3527 = vmax.f32 %v3260, 0.0
  %v3528 = vmax.f32 %v3262, 0.0
  %v3529 = vmax.f32 %v3265, 0.0
  %v3530 = vmax.f32 %v3267, 0.0
  %v3531 = vmax.f32 %v3270, 0.0
  %v3532 = vmax.f32 %v3272, 0.0
  %v3533 = vmax.f32 %v3275, 0.0
  %v3534 = vmax.f32 %v3277, 0.0
  %v3535 = vperm.slane %v62, 0
  %v3536 = vlaneseq
  %v3537 = vshrl.u32 %v3536, 7
  %3539 = vset.pattern.permute.xlu0 %v3537
  %3540 = vperm.xlu0 %3539, %v3535
  %v3541 = vpop.permute.xlu0 %3540
  %v3542 = vlaneseq
  %v3543 = vshrl.u32 %v3542, 7
  %v3544 = vadd.s32 %v3543, 8
  %3545 = vset.pattern.permute.xlu0 %v3544
  %3546 = vperm.xlu0 %3545, %v3535
  %v3547 = vpop.permute.xlu0 %3546
  %v3548 = vlaneseq
  %v3549 = vshrl.u32 %v3548, 7
  %v3550 = vadd.s32 %v3549, 16
  %3551 = vset.pattern.permute.xlu0 %v3550
  %3552 = vperm.xlu0 %3551, %v3535
  %v3553 = vpop.permute.xlu0 %3552
  %v3554 = vlaneseq
  %v3555 = vshrl.u32 %v3554, 7
  %v3556 = vadd.s32 %v3555, 24
  %3557 = vset.pattern.permute.xlu0 %v3556
  %3558 = vperm.xlu0 %3557, %v3535
  %v3559 = vpop.permute.xlu0 %3558
  %v3560 = vlaneseq
  %v3561 = vshrl.u32 %v3560, 7
  %v3562 = vadd.s32 %v3561, 32
  %3563 = vset.pattern.permute.xlu0 %v3562
  %3564 = vperm.xlu0 %3563, %v3535
  %v3565 = vpop.permute.xlu0 %3564
  %v3566 = vlaneseq
  %v3567 = vshrl.u32 %v3566, 7
  %v3568 = vadd.s32 %v3567, 40
  %3569 = vset.pattern.permute.xlu0 %v3568
  %3570 = vperm.xlu0 %3569, %v3535
  %v3571 = vpop.permute.xlu0 %3570
  %v3572 = vlaneseq
  %v3573 = vshrl.u32 %v3572, 7
  %v3574 = vadd.s32 %v3573, 48
  %3575 = vset.pattern.permute.xlu0 %v3574
  %3576 = vperm.xlu0 %3575, %v3535
  %v3577 = vpop.permute.xlu0 %3576
  %v3578 = vlaneseq
  %v3579 = vshrl.u32 %v3578, 7
  %v3580 = vadd.s32 %v3579, 56
  %3581 = vset.pattern.permute.xlu0 %v3580
  %3582 = vperm.xlu0 %3581, %v3535
  %v3583 = vpop.permute.xlu0 %3582
  %v3584 = vlaneseq
  %v3585 = vshrl.u32 %v3584, 7
  %v3586 = vadd.s32 %v3585, 64
  %3587 = vset.pattern.permute.xlu0 %v3586
  %3588 = vperm.xlu0 %3587, %v3535
  %v3589 = vpop.permute.xlu0 %3588
  %v3590 = vlaneseq
  %v3591 = vshrl.u32 %v3590, 7
  %v3592 = vadd.s32 %v3591, 72
  %3593 = vset.pattern.permute.xlu0 %v3592
  %3594 = vperm.xlu0 %3593, %v3535
  %v3595 = vpop.permute.xlu0 %3594
  %v3596 = vlaneseq
  %v3597 = vshrl.u32 %v3596, 7
  %v3598 = vadd.s32 %v3597, 80
  %3599 = vset.pattern.permute.xlu0 %v3598
  %3600 = vperm.xlu0 %3599, %v3535
  %v3601 = vpop.permute.xlu0 %3600
  %v3602 = vlaneseq
  %v3603 = vshrl.u32 %v3602, 7
  %v3604 = vadd.s32 %v3603, 88
  %3605 = vset.pattern.permute.xlu0 %v3604
  %3606 = vperm.xlu0 %3605, %v3535
  %v3607 = vpop.permute.xlu0 %3606
  %v3608 = vlaneseq
  %v3609 = vshrl.u32 %v3608, 7
  %v3610 = vadd.s32 %v3609, 96
  %3611 = vset.pattern.permute.xlu0 %v3610
  %3612 = vperm.xlu0 %3611, %v3535
  %v3613 = vpop.permute.xlu0 %3612
  %v3614 = vlaneseq
  %v3615 = vshrl.u32 %v3614, 7
  %v3616 = vadd.s32 %v3615, 104
  %3617 = vset.pattern.permute.xlu0 %v3616
  %3618 = vperm.xlu0 %3617, %v3535
  %v3619 = vpop.permute.xlu0 %3618
  %v3620 = vlaneseq
  %v3621 = vshrl.u32 %v3620, 7
  %v3622 = vadd.s32 %v3621, 112
  %3623 = vset.pattern.permute.xlu0 %v3622
  %3624 = vperm.xlu0 %3623, %v3535
  %v3625 = vpop.permute.xlu0 %3624
  %v3626 = vlaneseq
  %v3627 = vshrl.u32 %v3626, 7
  %v3628 = vadd.s32 %v3627, 120
  %3629 = vset.pattern.permute.xlu0 %v3628
  %3630 = vperm.xlu0 %3629, %v3535
  %v3631 = vpop.permute.xlu0 %3630
  %v3632 = vperm.slane %v63, 0
  %v3633 = vlaneseq
  %v3634 = vshrl.u32 %v3633, 7
  %3636 = vset.pattern.permute.xlu0 %v3634
  %3637 = vperm.xlu0 %3636, %v3632
  %v3638 = vpop.permute.xlu0 %3637
  %v3639 = vlaneseq
  %v3640 = vshrl.u32 %v3639, 7
  %v3641 = vadd.s32 %v3640, 8
  %3642 = vset.pattern.permute.xlu0 %v3641
  %3643 = vperm.xlu0 %3642, %v3632
  %v3644 = vpop.permute.xlu0 %3643
  %v3645 = vlaneseq
  %v3646 = vshrl.u32 %v3645, 7
  %v3647 = vadd.s32 %v3646, 16
  %3648 = vset.pattern.permute.xlu0 %v3647
  %3649 = vperm.xlu0 %3648, %v3632
  %v3650 = vpop.permute.xlu0 %3649
  %v3651 = vlaneseq
  %v3652 = vshrl.u32 %v3651, 7
  %v3653 = vadd.s32 %v3652, 24
  %3654 = vset.pattern.permute.xlu0 %v3653
  %3655 = vperm.xlu0 %3654, %v3632
  %v3656 = vpop.permute.xlu0 %3655
  %v3657 = vlaneseq
  %v3658 = vshrl.u32 %v3657, 7
  %v3659 = vadd.s32 %v3658, 32
  %3660 = vset.pattern.permute.xlu0 %v3659
  %3661 = vperm.xlu0 %3660, %v3632
  %v3662 = vpop.permute.xlu0 %3661
  %v3663 = vlaneseq
  %v3664 = vshrl.u32 %v3663, 7
  %v3665 = vadd.s32 %v3664, 40
  %3666 = vset.pattern.permute.xlu0 %v3665
  %3667 = vperm.xlu0 %3666, %v3632
  %v3668 = vpop.permute.xlu0 %3667
  %v3669 = vlaneseq
  %v3670 = vshrl.u32 %v3669, 7
  %v3671 = vadd.s32 %v3670, 48
  %3672 = vset.pattern.permute.xlu0 %v3671
  %3673 = vperm.xlu0 %3672, %v3632
  %v3674 = vpop.permute.xlu0 %3673
  %v3675 = vlaneseq
  %v3676 = vshrl.u32 %v3675, 7
  %v3677 = vadd.s32 %v3676, 56
  %3678 = vset.pattern.permute.xlu0 %v3677
  %3679 = vperm.xlu0 %3678, %v3632
  %v3680 = vpop.permute.xlu0 %3679
  %v3681 = vlaneseq
  %v3682 = vshrl.u32 %v3681, 7
  %v3683 = vadd.s32 %v3682, 64
  %3684 = vset.pattern.permute.xlu0 %v3683
  %3685 = vperm.xlu0 %3684, %v3632
  %v3686 = vpop.permute.xlu0 %3685
  %v3687 = vlaneseq
  %v3688 = vshrl.u32 %v3687, 7
  %v3689 = vadd.s32 %v3688, 72
  %3690 = vset.pattern.permute.xlu0 %v3689
  %3691 = vperm.xlu0 %3690, %v3632
  %v3692 = vpop.permute.xlu0 %3691
  %v3693 = vlaneseq
  %v3694 = vshrl.u32 %v3693, 7
  %v3695 = vadd.s32 %v3694, 80
  %3696 = vset.pattern.permute.xlu0 %v3695
  %3697 = vperm.xlu0 %3696, %v3632
  %v3698 = vpop.permute.xlu0 %3697
  %v3699 = vlaneseq
  %v3700 = vshrl.u32 %v3699, 7
  %v3701 = vadd.s32 %v3700, 88
  %3702 = vset.pattern.permute.xlu0 %v3701
  %3703 = vperm.xlu0 %3702, %v3632
  %v3704 = vpop.permute.xlu0 %3703
  %v3705 = vlaneseq
  %v3706 = vshrl.u32 %v3705, 7
  %v3707 = vadd.s32 %v3706, 96
  %3708 = vset.pattern.permute.xlu0 %v3707
  %3709 = vperm.xlu0 %3708, %v3632
  %v3710 = vpop.permute.xlu0 %3709
  %v3711 = vlaneseq
  %v3712 = vshrl.u32 %v3711, 7
  %v3713 = vadd.s32 %v3712, 104
  %3714 = vset.pattern.permute.xlu0 %v3713
  %3715 = vperm.xlu0 %3714, %v3632
  %v3716 = vpop.permute.xlu0 %3715
  %v3717 = vlaneseq
  %v3718 = vshrl.u32 %v3717, 7
  %v3719 = vadd.s32 %v3718, 112
  %3720 = vset.pattern.permute.xlu0 %v3719
  %3721 = vperm.xlu0 %3720, %v3632
  %v3722 = vpop.permute.xlu0 %3721
  %v3723 = vlaneseq
  %v3724 = vshrl.u32 %v3723, 7
  %v3725 = vadd.s32 %v3724, 120
  %3726 = vset.pattern.permute.xlu0 %v3725
  %3727 = vperm.xlu0 %3726, %v3632
  %v3728 = vpop.permute.xlu0 %3727
  %v3729 = vperm.slane %v62, 1
  %v3730 = vlaneseq
  %v3731 = vshrl.u32 %v3730, 7
  %3733 = vset.pattern.permute.xlu0 %v3731
  %3734 = vperm.xlu0 %3733, %v3729
  %v3735 = vpop.permute.xlu0 %3734
  %v3736 = vlaneseq
  %v3737 = vshrl.u32 %v3736, 7
  %v3738 = vadd.s32 %v3737, 8
  %3739 = vset.pattern.permute.xlu0 %v3738
  %3740 = vperm.xlu0 %3739, %v3729
  %v3741 = vpop.permute.xlu0 %3740
  %v3742 = vlaneseq
  %v3743 = vshrl.u32 %v3742, 7
  %v3744 = vadd.s32 %v3743, 16
  %3745 = vset.pattern.permute.xlu0 %v3744
  %3746 = vperm.xlu0 %3745, %v3729
  %v3747 = vpop.permute.xlu0 %3746
  %v3748 = vlaneseq
  %v3749 = vshrl.u32 %v3748, 7
  %v3750 = vadd.s32 %v3749, 24
  %3751 = vset.pattern.permute.xlu0 %v3750
  %3752 = vperm.xlu0 %3751, %v3729
  %v3753 = vpop.permute.xlu0 %3752
  %v3754 = vlaneseq
  %v3755 = vshrl.u32 %v3754, 7
  %v3756 = vadd.s32 %v3755, 32
  %3757 = vset.pattern.permute.xlu0 %v3756
  %3758 = vperm.xlu0 %3757, %v3729
  %v3759 = vpop.permute.xlu0 %3758
  %v3760 = vlaneseq
  %v3761 = vshrl.u32 %v3760, 7
  %v3762 = vadd.s32 %v3761, 40
  %3763 = vset.pattern.permute.xlu0 %v3762
  %3764 = vperm.xlu0 %3763, %v3729
  %v3765 = vpop.permute.xlu0 %3764
  %v3766 = vlaneseq
  %v3767 = vshrl.u32 %v3766, 7
  %v3768 = vadd.s32 %v3767, 48
  %3769 = vset.pattern.permute.xlu0 %v3768
  %3770 = vperm.xlu0 %3769, %v3729
  %v3771 = vpop.permute.xlu0 %3770
  %v3772 = vlaneseq
  %v3773 = vshrl.u32 %v3772, 7
  %v3774 = vadd.s32 %v3773, 56
  %3775 = vset.pattern.permute.xlu0 %v3774
  %3776 = vperm.xlu0 %3775, %v3729
  %v3777 = vpop.permute.xlu0 %3776
  %v3778 = vlaneseq
  %v3779 = vshrl.u32 %v3778, 7
  %v3780 = vadd.s32 %v3779, 64
  %3781 = vset.pattern.permute.xlu0 %v3780
  %3782 = vperm.xlu0 %3781, %v3729
  %v3783 = vpop.permute.xlu0 %3782
  %v3784 = vlaneseq
  %v3785 = vshrl.u32 %v3784, 7
  %v3786 = vadd.s32 %v3785, 72
  %3787 = vset.pattern.permute.xlu0 %v3786
  %3788 = vperm.xlu0 %3787, %v3729
  %v3789 = vpop.permute.xlu0 %3788
  %v3790 = vlaneseq
  %v3791 = vshrl.u32 %v3790, 7
  %v3792 = vadd.s32 %v3791, 80
  %3793 = vset.pattern.permute.xlu0 %v3792
  %3794 = vperm.xlu0 %3793, %v3729
  %v3795 = vpop.permute.xlu0 %3794
  %v3796 = vlaneseq
  %v3797 = vshrl.u32 %v3796, 7
  %v3798 = vadd.s32 %v3797, 88
  %3799 = vset.pattern.permute.xlu0 %v3798
  %3800 = vperm.xlu0 %3799, %v3729
  %v3801 = vpop.permute.xlu0 %3800
  %v3802 = vlaneseq
  %v3803 = vshrl.u32 %v3802, 7
  %v3804 = vadd.s32 %v3803, 96
  %3805 = vset.pattern.permute.xlu0 %v3804
  %3806 = vperm.xlu0 %3805, %v3729
  %v3807 = vpop.permute.xlu0 %3806
  %v3808 = vlaneseq
  %v3809 = vshrl.u32 %v3808, 7
  %v3810 = vadd.s32 %v3809, 104
  %3811 = vset.pattern.permute.xlu0 %v3810
  %3812 = vperm.xlu0 %3811, %v3729
  %v3813 = vpop.permute.xlu0 %3812
  %v3814 = vlaneseq
  %v3815 = vshrl.u32 %v3814, 7
  %v3816 = vadd.s32 %v3815, 112
  %3817 = vset.pattern.permute.xlu0 %v3816
  %3818 = vperm.xlu0 %3817, %v3729
  %v3819 = vpop.permute.xlu0 %3818
  %v3820 = vlaneseq
  %v3821 = vshrl.u32 %v3820, 7
  %v3822 = vadd.s32 %v3821, 120
  %3823 = vset.pattern.permute.xlu0 %v3822
  %3824 = vperm.xlu0 %3823, %v3729
  %v3825 = vpop.permute.xlu0 %3824
  %v3826 = vperm.slane %v63, 1
  %v3827 = vlaneseq
  %v3828 = vshrl.u32 %v3827, 7
  %3830 = vset.pattern.permute.xlu0 %v3828
  %3831 = vperm.xlu0 %3830, %v3826
  %v3832 = vpop.permute.xlu0 %3831
  %v3833 = vlaneseq
  %v3834 = vshrl.u32 %v3833, 7
  %v3835 = vadd.s32 %v3834, 8
  %3836 = vset.pattern.permute.xlu0 %v3835
  %3837 = vperm.xlu0 %3836, %v3826
  %v3838 = vpop.permute.xlu0 %3837
  %v3839 = vlaneseq
  %v3840 = vshrl.u32 %v3839, 7
  %v3841 = vadd.s32 %v3840, 16
  %3842 = vset.pattern.permute.xlu0 %v3841
  %3843 = vperm.xlu0 %3842, %v3826
  %v3844 = vpop.permute.xlu0 %3843
  %v3845 = vlaneseq
  %v3846 = vshrl.u32 %v3845, 7
  %v3847 = vadd.s32 %v3846, 24
  %3848 = vset.pattern.permute.xlu0 %v3847
  %3849 = vperm.xlu0 %3848, %v3826
  %v3850 = vpop.permute.xlu0 %3849
  %v3851 = vlaneseq
  %v3852 = vshrl.u32 %v3851, 7
  %v3853 = vadd.s32 %v3852, 32
  %3854 = vset.pattern.permute.xlu0 %v3853
  %3855 = vperm.xlu0 %3854, %v3826
  %v3856 = vpop.permute.xlu0 %3855
  %v3857 = vlaneseq
  %v3858 = vshrl.u32 %v3857, 7
  %v3859 = vadd.s32 %v3858, 40
  %3860 = vset.pattern.permute.xlu0 %v3859
  %3861 = vperm.xlu0 %3860, %v3826
  %v3862 = vpop.permute.xlu0 %3861
  %v3863 = vlaneseq
  %v3864 = vshrl.u32 %v3863, 7
  %v3865 = vadd.s32 %v3864, 48
  %3866 = vset.pattern.permute.xlu0 %v3865
  %3867 = vperm.xlu0 %3866, %v3826
  %v3868 = vpop.permute.xlu0 %3867
  %v3869 = vlaneseq
  %v3870 = vshrl.u32 %v3869, 7
  %v3871 = vadd.s32 %v3870, 56
  %3872 = vset.pattern.permute.xlu0 %v3871
  %3873 = vperm.xlu0 %3872, %v3826
  %v3874 = vpop.permute.xlu0 %3873
  %v3875 = vlaneseq
  %v3876 = vshrl.u32 %v3875, 7
  %v3877 = vadd.s32 %v3876, 64
  %3878 = vset.pattern.permute.xlu0 %v3877
  %3879 = vperm.xlu0 %3878, %v3826
  %v3880 = vpop.permute.xlu0 %3879
  %v3881 = vlaneseq
  %v3882 = vshrl.u32 %v3881, 7
  %v3883 = vadd.s32 %v3882, 72
  %3884 = vset.pattern.permute.xlu0 %v3883
  %3885 = vperm.xlu0 %3884, %v3826
  %v3886 = vpop.permute.xlu0 %3885
  %v3887 = vlaneseq
  %v3888 = vshrl.u32 %v3887, 7
  %v3889 = vadd.s32 %v3888, 80
  %3890 = vset.pattern.permute.xlu0 %v3889
  %3891 = vperm.xlu0 %3890, %v3826
  %v3892 = vpop.permute.xlu0 %3891
  %v3893 = vlaneseq
  %v3894 = vshrl.u32 %v3893, 7
  %v3895 = vadd.s32 %v3894, 88
  %3896 = vset.pattern.permute.xlu0 %v3895
  %3897 = vperm.xlu0 %3896, %v3826
  %v3898 = vpop.permute.xlu0 %3897
  %v3899 = vlaneseq
  %v3900 = vshrl.u32 %v3899, 7
  %v3901 = vadd.s32 %v3900, 96
  %3902 = vset.pattern.permute.xlu0 %v3901
  %3903 = vperm.xlu0 %3902, %v3826
  %v3904 = vpop.permute.xlu0 %3903
  %v3905 = vlaneseq
  %v3906 = vshrl.u32 %v3905, 7
  %v3907 = vadd.s32 %v3906, 104
  %3908 = vset.pattern.permute.xlu0 %v3907
  %3909 = vperm.xlu0 %3908, %v3826
  %v3910 = vpop.permute.xlu0 %3909
  %v3911 = vlaneseq
  %v3912 = vshrl.u32 %v3911, 7
  %v3913 = vadd.s32 %v3912, 112
  %3914 = vset.pattern.permute.xlu0 %v3913
  %3915 = vperm.xlu0 %3914, %v3826
  %v3916 = vpop.permute.xlu0 %3915
  %v3917 = vlaneseq
  %v3918 = vshrl.u32 %v3917, 7
  %v3919 = vadd.s32 %v3918, 120
  %3920 = vset.pattern.permute.xlu0 %v3919
  %3921 = vperm.xlu0 %3920, %v3826
  %v3922 = vpop.permute.xlu0 %3921
  %v3923 = vperm.slane %v62, 2
  %v3924 = vlaneseq
  %v3925 = vshrl.u32 %v3924, 7
  %3927 = vset.pattern.permute.xlu0 %v3925
  %3928 = vperm.xlu0 %3927, %v3923
  %v3929 = vpop.permute.xlu0 %3928
  %v3930 = vlaneseq
  %v3931 = vshrl.u32 %v3930, 7
  %v3932 = vadd.s32 %v3931, 8
  %3933 = vset.pattern.permute.xlu0 %v3932
  %3934 = vperm.xlu0 %3933, %v3923
  %v3935 = vpop.permute.xlu0 %3934
  %v3936 = vlaneseq
  %v3937 = vshrl.u32 %v3936, 7
  %v3938 = vadd.s32 %v3937, 16
  %3939 = vset.pattern.permute.xlu0 %v3938
  %3940 = vperm.xlu0 %3939, %v3923
  %v3941 = vpop.permute.xlu0 %3940
  %v3942 = vlaneseq
  %v3943 = vshrl.u32 %v3942, 7
  %v3944 = vadd.s32 %v3943, 24
  %3945 = vset.pattern.permute.xlu0 %v3944
  %3946 = vperm.xlu0 %3945, %v3923
  %v3947 = vpop.permute.xlu0 %3946
  %v3948 = vlaneseq
  %v3949 = vshrl.u32 %v3948, 7
  %v3950 = vadd.s32 %v3949, 32
  %3951 = vset.pattern.permute.xlu0 %v3950
  %3952 = vperm.xlu0 %3951, %v3923
  %v3953 = vpop.permute.xlu0 %3952
  %v3954 = vlaneseq
  %v3955 = vshrl.u32 %v3954, 7
  %v3956 = vadd.s32 %v3955, 40
  %3957 = vset.pattern.permute.xlu0 %v3956
  %3958 = vperm.xlu0 %3957, %v3923
  %v3959 = vpop.permute.xlu0 %3958
  %v3960 = vlaneseq
  %v3961 = vshrl.u32 %v3960, 7
  %v3962 = vadd.s32 %v3961, 48
  %3963 = vset.pattern.permute.xlu0 %v3962
  %3964 = vperm.xlu0 %3963, %v3923
  %v3965 = vpop.permute.xlu0 %3964
  %v3966 = vlaneseq
  %v3967 = vshrl.u32 %v3966, 7
  %v3968 = vadd.s32 %v3967, 56
  %3969 = vset.pattern.permute.xlu0 %v3968
  %3970 = vperm.xlu0 %3969, %v3923
  %v3971 = vpop.permute.xlu0 %3970
  %v3972 = vlaneseq
  %v3973 = vshrl.u32 %v3972, 7
  %v3974 = vadd.s32 %v3973, 64
  %3975 = vset.pattern.permute.xlu0 %v3974
  %3976 = vperm.xlu0 %3975, %v3923
  %v3977 = vpop.permute.xlu0 %3976
  %v3978 = vlaneseq
  %v3979 = vshrl.u32 %v3978, 7
  %v3980 = vadd.s32 %v3979, 72
  %3981 = vset.pattern.permute.xlu0 %v3980
  %3982 = vperm.xlu0 %3981, %v3923
  %v3983 = vpop.permute.xlu0 %3982
  %v3984 = vlaneseq
  %v3985 = vshrl.u32 %v3984, 7
  %v3986 = vadd.s32 %v3985, 80
  %3987 = vset.pattern.permute.xlu0 %v3986
  %3988 = vperm.xlu0 %3987, %v3923
  %v3989 = vpop.permute.xlu0 %3988
  %v3990 = vlaneseq
  %v3991 = vshrl.u32 %v3990, 7
  %v3992 = vadd.s32 %v3991, 88
  %3993 = vset.pattern.permute.xlu0 %v3992
  %3994 = vperm.xlu0 %3993, %v3923
  %v3995 = vpop.permute.xlu0 %3994
  %v3996 = vlaneseq
  %v3997 = vshrl.u32 %v3996, 7
  %v3998 = vadd.s32 %v3997, 96
  %3999 = vset.pattern.permute.xlu0 %v3998
  %4000 = vperm.xlu0 %3999, %v3923
  %v4001 = vpop.permute.xlu0 %4000
  %v4002 = vlaneseq
  %v4003 = vshrl.u32 %v4002, 7
  %v4004 = vadd.s32 %v4003, 104
  %4005 = vset.pattern.permute.xlu0 %v4004
  %4006 = vperm.xlu0 %4005, %v3923
  %v4007 = vpop.permute.xlu0 %4006
  %v4008 = vlaneseq
  %v4009 = vshrl.u32 %v4008, 7
  %v4010 = vadd.s32 %v4009, 112
  %4011 = vset.pattern.permute.xlu0 %v4010
  %4012 = vperm.xlu0 %4011, %v3923
  %v4013 = vpop.permute.xlu0 %4012
  %v4014 = vlaneseq
  %v4015 = vshrl.u32 %v4014, 7
  %v4016 = vadd.s32 %v4015, 120
  %4017 = vset.pattern.permute.xlu0 %v4016
  %4018 = vperm.xlu0 %4017, %v3923
  %v4019 = vpop.permute.xlu0 %4018
  %v4020 = vperm.slane %v63, 2
  %v4021 = vlaneseq
  %v4022 = vshrl.u32 %v4021, 7
  %4024 = vset.pattern.permute.xlu0 %v4022
  %4025 = vperm.xlu0 %4024, %v4020
  %v4026 = vpop.permute.xlu0 %4025
  %v4027 = vlaneseq
  %v4028 = vshrl.u32 %v4027, 7
  %v4029 = vadd.s32 %v4028, 8
  %4030 = vset.pattern.permute.xlu0 %v4029
  %4031 = vperm.xlu0 %4030, %v4020
  %v4032 = vpop.permute.xlu0 %4031
  %v4033 = vlaneseq
  %v4034 = vshrl.u32 %v4033, 7
  %v4035 = vadd.s32 %v4034, 16
  %4036 = vset.pattern.permute.xlu0 %v4035
  %4037 = vperm.xlu0 %4036, %v4020
  %v4038 = vpop.permute.xlu0 %4037
  %v4039 = vlaneseq
  %v4040 = vshrl.u32 %v4039, 7
  %v4041 = vadd.s32 %v4040, 24
  %4042 = vset.pattern.permute.xlu0 %v4041
  %4043 = vperm.xlu0 %4042, %v4020
  %v4044 = vpop.permute.xlu0 %4043
  %v4045 = vlaneseq
  %v4046 = vshrl.u32 %v4045, 7
  %v4047 = vadd.s32 %v4046, 32
  %4048 = vset.pattern.permute.xlu0 %v4047
  %4049 = vperm.xlu0 %4048, %v4020
  %v4050 = vpop.permute.xlu0 %4049
  %v4051 = vlaneseq
  %v4052 = vshrl.u32 %v4051, 7
  %v4053 = vadd.s32 %v4052, 40
  %4054 = vset.pattern.permute.xlu0 %v4053
  %4055 = vperm.xlu0 %4054, %v4020
  %v4056 = vpop.permute.xlu0 %4055
  %v4057 = vlaneseq
  %v4058 = vshrl.u32 %v4057, 7
  %v4059 = vadd.s32 %v4058, 48
  %4060 = vset.pattern.permute.xlu0 %v4059
  %4061 = vperm.xlu0 %4060, %v4020
  %v4062 = vpop.permute.xlu0 %4061
  %v4063 = vlaneseq
  %v4064 = vshrl.u32 %v4063, 7
  %v4065 = vadd.s32 %v4064, 56
  %4066 = vset.pattern.permute.xlu0 %v4065
  %4067 = vperm.xlu0 %4066, %v4020
  %v4068 = vpop.permute.xlu0 %4067
  %v4069 = vlaneseq
  %v4070 = vshrl.u32 %v4069, 7
  %v4071 = vadd.s32 %v4070, 64
  %4072 = vset.pattern.permute.xlu0 %v4071
  %4073 = vperm.xlu0 %4072, %v4020
  %v4074 = vpop.permute.xlu0 %4073
  %v4075 = vlaneseq
  %v4076 = vshrl.u32 %v4075, 7
  %v4077 = vadd.s32 %v4076, 72
  %4078 = vset.pattern.permute.xlu0 %v4077
  %4079 = vperm.xlu0 %4078, %v4020
  %v4080 = vpop.permute.xlu0 %4079
  %v4081 = vlaneseq
  %v4082 = vshrl.u32 %v4081, 7
  %v4083 = vadd.s32 %v4082, 80
  %4084 = vset.pattern.permute.xlu0 %v4083
  %4085 = vperm.xlu0 %4084, %v4020
  %v4086 = vpop.permute.xlu0 %4085
  %v4087 = vlaneseq
  %v4088 = vshrl.u32 %v4087, 7
  %v4089 = vadd.s32 %v4088, 88
  %4090 = vset.pattern.permute.xlu0 %v4089
  %4091 = vperm.xlu0 %4090, %v4020
  %v4092 = vpop.permute.xlu0 %4091
  %v4093 = vlaneseq
  %v4094 = vshrl.u32 %v4093, 7
  %v4095 = vadd.s32 %v4094, 96
  %4096 = vset.pattern.permute.xlu0 %v4095
  %4097 = vperm.xlu0 %4096, %v4020
  %v4098 = vpop.permute.xlu0 %4097
  %v4099 = vlaneseq
  %v4100 = vshrl.u32 %v4099, 7
  %v4101 = vadd.s32 %v4100, 104
  %4102 = vset.pattern.permute.xlu0 %v4101
  %4103 = vperm.xlu0 %4102, %v4020
  %v4104 = vpop.permute.xlu0 %4103
  %v4105 = vlaneseq
  %v4106 = vshrl.u32 %v4105, 7
  %v4107 = vadd.s32 %v4106, 112
  %4108 = vset.pattern.permute.xlu0 %v4107
  %4109 = vperm.xlu0 %4108, %v4020
  %v4110 = vpop.permute.xlu0 %4109
  %v4111 = vlaneseq
  %v4112 = vshrl.u32 %v4111, 7
  %v4113 = vadd.s32 %v4112, 120
  %4114 = vset.pattern.permute.xlu0 %v4113
  %4115 = vperm.xlu0 %4114, %v4020
  %v4116 = vpop.permute.xlu0 %4115
  %v4117 = vperm.slane %v62, 3
  %v4118 = vlaneseq
  %v4119 = vshrl.u32 %v4118, 7
  %4121 = vset.pattern.permute.xlu0 %v4119
  %4122 = vperm.xlu0 %4121, %v4117
  %v4123 = vpop.permute.xlu0 %4122
  %v4124 = vlaneseq
  %v4125 = vshrl.u32 %v4124, 7
  %v4126 = vadd.s32 %v4125, 8
  %4127 = vset.pattern.permute.xlu0 %v4126
  %4128 = vperm.xlu0 %4127, %v4117
  %v4129 = vpop.permute.xlu0 %4128
  %v4130 = vlaneseq
  %v4131 = vshrl.u32 %v4130, 7
  %v4132 = vadd.s32 %v4131, 16
  %4133 = vset.pattern.permute.xlu0 %v4132
  %4134 = vperm.xlu0 %4133, %v4117
  %v4135 = vpop.permute.xlu0 %4134
  %v4136 = vlaneseq
  %v4137 = vshrl.u32 %v4136, 7
  %v4138 = vadd.s32 %v4137, 24
  %4139 = vset.pattern.permute.xlu0 %v4138
  %4140 = vperm.xlu0 %4139, %v4117
  %v4141 = vpop.permute.xlu0 %4140
  %v4142 = vlaneseq
  %v4143 = vshrl.u32 %v4142, 7
  %v4144 = vadd.s32 %v4143, 32
  %4145 = vset.pattern.permute.xlu0 %v4144
  %4146 = vperm.xlu0 %4145, %v4117
  %v4147 = vpop.permute.xlu0 %4146
  %v4148 = vlaneseq
  %v4149 = vshrl.u32 %v4148, 7
  %v4150 = vadd.s32 %v4149, 40
  %4151 = vset.pattern.permute.xlu0 %v4150
  %4152 = vperm.xlu0 %4151, %v4117
  %v4153 = vpop.permute.xlu0 %4152
  %v4154 = vlaneseq
  %v4155 = vshrl.u32 %v4154, 7
  %v4156 = vadd.s32 %v4155, 48
  %4157 = vset.pattern.permute.xlu0 %v4156
  %4158 = vperm.xlu0 %4157, %v4117
  %v4159 = vpop.permute.xlu0 %4158
  %v4160 = vlaneseq
  %v4161 = vshrl.u32 %v4160, 7
  %v4162 = vadd.s32 %v4161, 56
  %4163 = vset.pattern.permute.xlu0 %v4162
  %4164 = vperm.xlu0 %4163, %v4117
  %v4165 = vpop.permute.xlu0 %4164
  %v4166 = vlaneseq
  %v4167 = vshrl.u32 %v4166, 7
  %v4168 = vadd.s32 %v4167, 64
  %4169 = vset.pattern.permute.xlu0 %v4168
  %4170 = vperm.xlu0 %4169, %v4117
  %v4171 = vpop.permute.xlu0 %4170
  %v4172 = vlaneseq
  %v4173 = vshrl.u32 %v4172, 7
  %v4174 = vadd.s32 %v4173, 72
  %4175 = vset.pattern.permute.xlu0 %v4174
  %4176 = vperm.xlu0 %4175, %v4117
  %v4177 = vpop.permute.xlu0 %4176
  %v4178 = vlaneseq
  %v4179 = vshrl.u32 %v4178, 7
  %v4180 = vadd.s32 %v4179, 80
  %4181 = vset.pattern.permute.xlu0 %v4180
  %4182 = vperm.xlu0 %4181, %v4117
  %v4183 = vpop.permute.xlu0 %4182
  %v4184 = vlaneseq
  %v4185 = vshrl.u32 %v4184, 7
  %v4186 = vadd.s32 %v4185, 88
  %4187 = vset.pattern.permute.xlu0 %v4186
  %4188 = vperm.xlu0 %4187, %v4117
  %v4189 = vpop.permute.xlu0 %4188
  %v4190 = vlaneseq
  %v4191 = vshrl.u32 %v4190, 7
  %v4192 = vadd.s32 %v4191, 96
  %4193 = vset.pattern.permute.xlu0 %v4192
  %4194 = vperm.xlu0 %4193, %v4117
  %v4195 = vpop.permute.xlu0 %4194
  %v4196 = vlaneseq
  %v4197 = vshrl.u32 %v4196, 7
  %v4198 = vadd.s32 %v4197, 104
  %4199 = vset.pattern.permute.xlu0 %v4198
  %4200 = vperm.xlu0 %4199, %v4117
  %v4201 = vpop.permute.xlu0 %4200
  %v4202 = vlaneseq
  %v4203 = vshrl.u32 %v4202, 7
  %v4204 = vadd.s32 %v4203, 112
  %4205 = vset.pattern.permute.xlu0 %v4204
  %4206 = vperm.xlu0 %4205, %v4117
  %v4207 = vpop.permute.xlu0 %4206
  %v4208 = vlaneseq
  %v4209 = vshrl.u32 %v4208, 7
  %v4210 = vadd.s32 %v4209, 120
  %4211 = vset.pattern.permute.xlu0 %v4210
  %4212 = vperm.xlu0 %4211, %v4117
  %v4213 = vpop.permute.xlu0 %4212
  %v4214 = vperm.slane %v63, 3
  %v4215 = vlaneseq
  %v4216 = vshrl.u32 %v4215, 7
  %4218 = vset.pattern.permute.xlu0 %v4216
  %4219 = vperm.xlu0 %4218, %v4214
  %v4220 = vpop.permute.xlu0 %4219
  %v4221 = vlaneseq
  %v4222 = vshrl.u32 %v4221, 7
  %v4223 = vadd.s32 %v4222, 8
  %4224 = vset.pattern.permute.xlu0 %v4223
  %4225 = vperm.xlu0 %4224, %v4214
  %v4226 = vpop.permute.xlu0 %4225
  %v4227 = vlaneseq
  %v4228 = vshrl.u32 %v4227, 7
  %v4229 = vadd.s32 %v4228, 16
  %4230 = vset.pattern.permute.xlu0 %v4229
  %4231 = vperm.xlu0 %4230, %v4214
  %v4232 = vpop.permute.xlu0 %4231
  %v4233 = vlaneseq
  %v4234 = vshrl.u32 %v4233, 7
  %v4235 = vadd.s32 %v4234, 24
  %4236 = vset.pattern.permute.xlu0 %v4235
  %4237 = vperm.xlu0 %4236, %v4214
  %v4238 = vpop.permute.xlu0 %4237
  %v4239 = vlaneseq
  %v4240 = vshrl.u32 %v4239, 7
  %v4241 = vadd.s32 %v4240, 32
  %4242 = vset.pattern.permute.xlu0 %v4241
  %4243 = vperm.xlu0 %4242, %v4214
  %v4244 = vpop.permute.xlu0 %4243
  %v4245 = vlaneseq
  %v4246 = vshrl.u32 %v4245, 7
  %v4247 = vadd.s32 %v4246, 40
  %4248 = vset.pattern.permute.xlu0 %v4247
  %4249 = vperm.xlu0 %4248, %v4214
  %v4250 = vpop.permute.xlu0 %4249
  %v4251 = vlaneseq
  %v4252 = vshrl.u32 %v4251, 7
  %v4253 = vadd.s32 %v4252, 48
  %4254 = vset.pattern.permute.xlu0 %v4253
  %4255 = vperm.xlu0 %4254, %v4214
  %v4256 = vpop.permute.xlu0 %4255
  %v4257 = vlaneseq
  %v4258 = vshrl.u32 %v4257, 7
  %v4259 = vadd.s32 %v4258, 56
  %4260 = vset.pattern.permute.xlu0 %v4259
  %4261 = vperm.xlu0 %4260, %v4214
  %v4262 = vpop.permute.xlu0 %4261
  %v4263 = vlaneseq
  %v4264 = vshrl.u32 %v4263, 7
  %v4265 = vadd.s32 %v4264, 64
  %4266 = vset.pattern.permute.xlu0 %v4265
  %4267 = vperm.xlu0 %4266, %v4214
  %v4268 = vpop.permute.xlu0 %4267
  %v4269 = vlaneseq
  %v4270 = vshrl.u32 %v4269, 7
  %v4271 = vadd.s32 %v4270, 72
  %4272 = vset.pattern.permute.xlu0 %v4271
  %4273 = vperm.xlu0 %4272, %v4214
  %v4274 = vpop.permute.xlu0 %4273
  %v4275 = vlaneseq
  %v4276 = vshrl.u32 %v4275, 7
  %v4277 = vadd.s32 %v4276, 80
  %4278 = vset.pattern.permute.xlu0 %v4277
  %4279 = vperm.xlu0 %4278, %v4214
  %v4280 = vpop.permute.xlu0 %4279
  %v4281 = vlaneseq
  %v4282 = vshrl.u32 %v4281, 7
  %v4283 = vadd.s32 %v4282, 88
  %4284 = vset.pattern.permute.xlu0 %v4283
  %4285 = vperm.xlu0 %4284, %v4214
  %v4286 = vpop.permute.xlu0 %4285
  %v4287 = vlaneseq
  %v4288 = vshrl.u32 %v4287, 7
  %v4289 = vadd.s32 %v4288, 96
  %4290 = vset.pattern.permute.xlu0 %v4289
  %4291 = vperm.xlu0 %4290, %v4214
  %v4292 = vpop.permute.xlu0 %4291
  %v4293 = vlaneseq
  %v4294 = vshrl.u32 %v4293, 7
  %v4295 = vadd.s32 %v4294, 104
  %4296 = vset.pattern.permute.xlu0 %v4295
  %4297 = vperm.xlu0 %4296, %v4214
  %v4298 = vpop.permute.xlu0 %4297
  %v4299 = vlaneseq
  %v4300 = vshrl.u32 %v4299, 7
  %v4301 = vadd.s32 %v4300, 112
  %4302 = vset.pattern.permute.xlu0 %v4301
  %4303 = vperm.xlu0 %4302, %v4214
  %v4304 = vpop.permute.xlu0 %4303
  %v4305 = vlaneseq
  %v4306 = vshrl.u32 %v4305, 7
  %v4307 = vadd.s32 %v4306, 120
  %4308 = vset.pattern.permute.xlu0 %v4307
  %4309 = vperm.xlu0 %4308, %v4214
  %v4310 = vpop.permute.xlu0 %4309
  %v4311 = vperm.slane %v62, 4
  %v4312 = vlaneseq
  %v4313 = vshrl.u32 %v4312, 7
  %4315 = vset.pattern.permute.xlu0 %v4313
  %4316 = vperm.xlu0 %4315, %v4311
  %v4317 = vpop.permute.xlu0 %4316
  %v4318 = vlaneseq
  %v4319 = vshrl.u32 %v4318, 7
  %v4320 = vadd.s32 %v4319, 8
  %4321 = vset.pattern.permute.xlu0 %v4320
  %4322 = vperm.xlu0 %4321, %v4311
  %v4323 = vpop.permute.xlu0 %4322
  %v4324 = vlaneseq
  %v4325 = vshrl.u32 %v4324, 7
  %v4326 = vadd.s32 %v4325, 16
  %4327 = vset.pattern.permute.xlu0 %v4326
  %4328 = vperm.xlu0 %4327, %v4311
  %v4329 = vpop.permute.xlu0 %4328
  %v4330 = vlaneseq
  %v4331 = vshrl.u32 %v4330, 7
  %v4332 = vadd.s32 %v4331, 24
  %4333 = vset.pattern.permute.xlu0 %v4332
  %4334 = vperm.xlu0 %4333, %v4311
  %v4335 = vpop.permute.xlu0 %4334
  %v4336 = vlaneseq
  %v4337 = vshrl.u32 %v4336, 7
  %v4338 = vadd.s32 %v4337, 32
  %4339 = vset.pattern.permute.xlu0 %v4338
  %4340 = vperm.xlu0 %4339, %v4311
  %v4341 = vpop.permute.xlu0 %4340
  %v4342 = vlaneseq
  %v4343 = vshrl.u32 %v4342, 7
  %v4344 = vadd.s32 %v4343, 40
  %4345 = vset.pattern.permute.xlu0 %v4344
  %4346 = vperm.xlu0 %4345, %v4311
  %v4347 = vpop.permute.xlu0 %4346
  %v4348 = vlaneseq
  %v4349 = vshrl.u32 %v4348, 7
  %v4350 = vadd.s32 %v4349, 48
  %4351 = vset.pattern.permute.xlu0 %v4350
  %4352 = vperm.xlu0 %4351, %v4311
  %v4353 = vpop.permute.xlu0 %4352
  %v4354 = vlaneseq
  %v4355 = vshrl.u32 %v4354, 7
  %v4356 = vadd.s32 %v4355, 56
  %4357 = vset.pattern.permute.xlu0 %v4356
  %4358 = vperm.xlu0 %4357, %v4311
  %v4359 = vpop.permute.xlu0 %4358
  %v4360 = vlaneseq
  %v4361 = vshrl.u32 %v4360, 7
  %v4362 = vadd.s32 %v4361, 64
  %4363 = vset.pattern.permute.xlu0 %v4362
  %4364 = vperm.xlu0 %4363, %v4311
  %v4365 = vpop.permute.xlu0 %4364
  %v4366 = vlaneseq
  %v4367 = vshrl.u32 %v4366, 7
  %v4368 = vadd.s32 %v4367, 72
  %4369 = vset.pattern.permute.xlu0 %v4368
  %4370 = vperm.xlu0 %4369, %v4311
  %v4371 = vpop.permute.xlu0 %4370
  %v4372 = vlaneseq
  %v4373 = vshrl.u32 %v4372, 7
  %v4374 = vadd.s32 %v4373, 80
  %4375 = vset.pattern.permute.xlu0 %v4374
  %4376 = vperm.xlu0 %4375, %v4311
  %v4377 = vpop.permute.xlu0 %4376
  %v4378 = vlaneseq
  %v4379 = vshrl.u32 %v4378, 7
  %v4380 = vadd.s32 %v4379, 88
  %4381 = vset.pattern.permute.xlu0 %v4380
  %4382 = vperm.xlu0 %4381, %v4311
  %v4383 = vpop.permute.xlu0 %4382
  %v4384 = vlaneseq
  %v4385 = vshrl.u32 %v4384, 7
  %v4386 = vadd.s32 %v4385, 96
  %4387 = vset.pattern.permute.xlu0 %v4386
  %4388 = vperm.xlu0 %4387, %v4311
  %v4389 = vpop.permute.xlu0 %4388
  %v4390 = vlaneseq
  %v4391 = vshrl.u32 %v4390, 7
  %v4392 = vadd.s32 %v4391, 104
  %4393 = vset.pattern.permute.xlu0 %v4392
  %4394 = vperm.xlu0 %4393, %v4311
  %v4395 = vpop.permute.xlu0 %4394
  %v4396 = vlaneseq
  %v4397 = vshrl.u32 %v4396, 7
  %v4398 = vadd.s32 %v4397, 112
  %4399 = vset.pattern.permute.xlu0 %v4398
  %4400 = vperm.xlu0 %4399, %v4311
  %v4401 = vpop.permute.xlu0 %4400
  %v4402 = vlaneseq
  %v4403 = vshrl.u32 %v4402, 7
  %v4404 = vadd.s32 %v4403, 120
  %4405 = vset.pattern.permute.xlu0 %v4404
  %4406 = vperm.xlu0 %4405, %v4311
  %v4407 = vpop.permute.xlu0 %4406
  %v4408 = vperm.slane %v63, 4
  %v4409 = vlaneseq
  %v4410 = vshrl.u32 %v4409, 7
  %4412 = vset.pattern.permute.xlu0 %v4410
  %4413 = vperm.xlu0 %4412, %v4408
  %v4414 = vpop.permute.xlu0 %4413
  %v4415 = vlaneseq
  %v4416 = vshrl.u32 %v4415, 7
  %v4417 = vadd.s32 %v4416, 8
  %4418 = vset.pattern.permute.xlu0 %v4417
  %4419 = vperm.xlu0 %4418, %v4408
  %v4420 = vpop.permute.xlu0 %4419
  %v4421 = vlaneseq
  %v4422 = vshrl.u32 %v4421, 7
  %v4423 = vadd.s32 %v4422, 16
  %4424 = vset.pattern.permute.xlu0 %v4423
  %4425 = vperm.xlu0 %4424, %v4408
  %v4426 = vpop.permute.xlu0 %4425
  %v4427 = vlaneseq
  %v4428 = vshrl.u32 %v4427, 7
  %v4429 = vadd.s32 %v4428, 24
  %4430 = vset.pattern.permute.xlu0 %v4429
  %4431 = vperm.xlu0 %4430, %v4408
  %v4432 = vpop.permute.xlu0 %4431
  %v4433 = vlaneseq
  %v4434 = vshrl.u32 %v4433, 7
  %v4435 = vadd.s32 %v4434, 32
  %4436 = vset.pattern.permute.xlu0 %v4435
  %4437 = vperm.xlu0 %4436, %v4408
  %v4438 = vpop.permute.xlu0 %4437
  %v4439 = vlaneseq
  %v4440 = vshrl.u32 %v4439, 7
  %v4441 = vadd.s32 %v4440, 40
  %4442 = vset.pattern.permute.xlu0 %v4441
  %4443 = vperm.xlu0 %4442, %v4408
  %v4444 = vpop.permute.xlu0 %4443
  %v4445 = vlaneseq
  %v4446 = vshrl.u32 %v4445, 7
  %v4447 = vadd.s32 %v4446, 48
  %4448 = vset.pattern.permute.xlu0 %v4447
  %4449 = vperm.xlu0 %4448, %v4408
  %v4450 = vpop.permute.xlu0 %4449
  %v4451 = vlaneseq
  %v4452 = vshrl.u32 %v4451, 7
  %v4453 = vadd.s32 %v4452, 56
  %4454 = vset.pattern.permute.xlu0 %v4453
  %4455 = vperm.xlu0 %4454, %v4408
  %v4456 = vpop.permute.xlu0 %4455
  %v4457 = vlaneseq
  %v4458 = vshrl.u32 %v4457, 7
  %v4459 = vadd.s32 %v4458, 64
  %4460 = vset.pattern.permute.xlu0 %v4459
  %4461 = vperm.xlu0 %4460, %v4408
  %v4462 = vpop.permute.xlu0 %4461
  %v4463 = vlaneseq
  %v4464 = vshrl.u32 %v4463, 7
  %v4465 = vadd.s32 %v4464, 72
  %4466 = vset.pattern.permute.xlu0 %v4465
  %4467 = vperm.xlu0 %4466, %v4408
  %v4468 = vpop.permute.xlu0 %4467
  %v4469 = vlaneseq
  %v4470 = vshrl.u32 %v4469, 7
  %v4471 = vadd.s32 %v4470, 80
  %4472 = vset.pattern.permute.xlu0 %v4471
  %4473 = vperm.xlu0 %4472, %v4408
  %v4474 = vpop.permute.xlu0 %4473
  %v4475 = vlaneseq
  %v4476 = vshrl.u32 %v4475, 7
  %v4477 = vadd.s32 %v4476, 88
  %4478 = vset.pattern.permute.xlu0 %v4477
  %4479 = vperm.xlu0 %4478, %v4408
  %v4480 = vpop.permute.xlu0 %4479
  %v4481 = vlaneseq
  %v4482 = vshrl.u32 %v4481, 7
  %v4483 = vadd.s32 %v4482, 96
  %4484 = vset.pattern.permute.xlu0 %v4483
  %4485 = vperm.xlu0 %4484, %v4408
  %v4486 = vpop.permute.xlu0 %4485
  %v4487 = vlaneseq
  %v4488 = vshrl.u32 %v4487, 7
  %v4489 = vadd.s32 %v4488, 104
  %4490 = vset.pattern.permute.xlu0 %v4489
  %4491 = vperm.xlu0 %4490, %v4408
  %v4492 = vpop.permute.xlu0 %4491
  %v4493 = vlaneseq
  %v4494 = vshrl.u32 %v4493, 7
  %v4495 = vadd.s32 %v4494, 112
  %4496 = vset.pattern.permute.xlu0 %v4495
  %4497 = vperm.xlu0 %4496, %v4408
  %v4498 = vpop.permute.xlu0 %4497
  %v4499 = vlaneseq
  %v4500 = vshrl.u32 %v4499, 7
  %v4501 = vadd.s32 %v4500, 120
  %4502 = vset.pattern.permute.xlu0 %v4501
  %4503 = vperm.xlu0 %4502, %v4408
  %v4504 = vpop.permute.xlu0 %4503
  %v4505 = vperm.slane %v62, 5
  %v4506 = vlaneseq
  %v4507 = vshrl.u32 %v4506, 7
  %4509 = vset.pattern.permute.xlu0 %v4507
  %4510 = vperm.xlu0 %4509, %v4505
  %v4511 = vpop.permute.xlu0 %4510
  %v4512 = vlaneseq
  %v4513 = vshrl.u32 %v4512, 7
  %v4514 = vadd.s32 %v4513, 8
  %4515 = vset.pattern.permute.xlu0 %v4514
  %4516 = vperm.xlu0 %4515, %v4505
  %v4517 = vpop.permute.xlu0 %4516
  %v4518 = vlaneseq
  %v4519 = vshrl.u32 %v4518, 7
  %v4520 = vadd.s32 %v4519, 16
  %4521 = vset.pattern.permute.xlu0 %v4520
  %4522 = vperm.xlu0 %4521, %v4505
  %v4523 = vpop.permute.xlu0 %4522
  %v4524 = vlaneseq
  %v4525 = vshrl.u32 %v4524, 7
  %v4526 = vadd.s32 %v4525, 24
  %4527 = vset.pattern.permute.xlu0 %v4526
  %4528 = vperm.xlu0 %4527, %v4505
  %v4529 = vpop.permute.xlu0 %4528
  %v4530 = vlaneseq
  %v4531 = vshrl.u32 %v4530, 7
  %v4532 = vadd.s32 %v4531, 32
  %4533 = vset.pattern.permute.xlu0 %v4532
  %4534 = vperm.xlu0 %4533, %v4505
  %v4535 = vpop.permute.xlu0 %4534
  %v4536 = vlaneseq
  %v4537 = vshrl.u32 %v4536, 7
  %v4538 = vadd.s32 %v4537, 40
  %4539 = vset.pattern.permute.xlu0 %v4538
  %4540 = vperm.xlu0 %4539, %v4505
  %v4541 = vpop.permute.xlu0 %4540
  %v4542 = vlaneseq
  %v4543 = vshrl.u32 %v4542, 7
  %v4544 = vadd.s32 %v4543, 48
  %4545 = vset.pattern.permute.xlu0 %v4544
  %4546 = vperm.xlu0 %4545, %v4505
  %v4547 = vpop.permute.xlu0 %4546
  %v4548 = vlaneseq
  %v4549 = vshrl.u32 %v4548, 7
  %v4550 = vadd.s32 %v4549, 56
  %4551 = vset.pattern.permute.xlu0 %v4550
  %4552 = vperm.xlu0 %4551, %v4505
  %v4553 = vpop.permute.xlu0 %4552
  %v4554 = vlaneseq
  %v4555 = vshrl.u32 %v4554, 7
  %v4556 = vadd.s32 %v4555, 64
  %4557 = vset.pattern.permute.xlu0 %v4556
  %4558 = vperm.xlu0 %4557, %v4505
  %v4559 = vpop.permute.xlu0 %4558
  %v4560 = vlaneseq
  %v4561 = vshrl.u32 %v4560, 7
  %v4562 = vadd.s32 %v4561, 72
  %4563 = vset.pattern.permute.xlu0 %v4562
  %4564 = vperm.xlu0 %4563, %v4505
  %v4565 = vpop.permute.xlu0 %4564
  %v4566 = vlaneseq
  %v4567 = vshrl.u32 %v4566, 7
  %v4568 = vadd.s32 %v4567, 80
  %4569 = vset.pattern.permute.xlu0 %v4568
  %4570 = vperm.xlu0 %4569, %v4505
  %v4571 = vpop.permute.xlu0 %4570
  %v4572 = vlaneseq
  %v4573 = vshrl.u32 %v4572, 7
  %v4574 = vadd.s32 %v4573, 88
  %4575 = vset.pattern.permute.xlu0 %v4574
  %4576 = vperm.xlu0 %4575, %v4505
  %v4577 = vpop.permute.xlu0 %4576
  %v4578 = vlaneseq
  %v4579 = vshrl.u32 %v4578, 7
  %v4580 = vadd.s32 %v4579, 96
  %4581 = vset.pattern.permute.xlu0 %v4580
  %4582 = vperm.xlu0 %4581, %v4505
  %v4583 = vpop.permute.xlu0 %4582
  %v4584 = vlaneseq
  %v4585 = vshrl.u32 %v4584, 7
  %v4586 = vadd.s32 %v4585, 104
  %4587 = vset.pattern.permute.xlu0 %v4586
  %4588 = vperm.xlu0 %4587, %v4505
  %v4589 = vpop.permute.xlu0 %4588
  %v4590 = vlaneseq
  %v4591 = vshrl.u32 %v4590, 7
  %v4592 = vadd.s32 %v4591, 112
  %4593 = vset.pattern.permute.xlu0 %v4592
  %4594 = vperm.xlu0 %4593, %v4505
  %v4595 = vpop.permute.xlu0 %4594
  %v4596 = vlaneseq
  %v4597 = vshrl.u32 %v4596, 7
  %v4598 = vadd.s32 %v4597, 120
  %4599 = vset.pattern.permute.xlu0 %v4598
  %4600 = vperm.xlu0 %4599, %v4505
  %v4601 = vpop.permute.xlu0 %4600
  %v4602 = vperm.slane %v63, 5
  %v4603 = vlaneseq
  %v4604 = vshrl.u32 %v4603, 7
  %4606 = vset.pattern.permute.xlu0 %v4604
  %4607 = vperm.xlu0 %4606, %v4602
  %v4608 = vpop.permute.xlu0 %4607
  %v4609 = vlaneseq
  %v4610 = vshrl.u32 %v4609, 7
  %v4611 = vadd.s32 %v4610, 8
  %4612 = vset.pattern.permute.xlu0 %v4611
  %4613 = vperm.xlu0 %4612, %v4602
  %v4614 = vpop.permute.xlu0 %4613
  %v4615 = vlaneseq
  %v4616 = vshrl.u32 %v4615, 7
  %v4617 = vadd.s32 %v4616, 16
  %4618 = vset.pattern.permute.xlu0 %v4617
  %4619 = vperm.xlu0 %4618, %v4602
  %v4620 = vpop.permute.xlu0 %4619
  %v4621 = vlaneseq
  %v4622 = vshrl.u32 %v4621, 7
  %v4623 = vadd.s32 %v4622, 24
  %4624 = vset.pattern.permute.xlu0 %v4623
  %4625 = vperm.xlu0 %4624, %v4602
  %v4626 = vpop.permute.xlu0 %4625
  %v4627 = vlaneseq
  %v4628 = vshrl.u32 %v4627, 7
  %v4629 = vadd.s32 %v4628, 32
  %4630 = vset.pattern.permute.xlu0 %v4629
  %4631 = vperm.xlu0 %4630, %v4602
  %v4632 = vpop.permute.xlu0 %4631
  %v4633 = vlaneseq
  %v4634 = vshrl.u32 %v4633, 7
  %v4635 = vadd.s32 %v4634, 40
  %4636 = vset.pattern.permute.xlu0 %v4635
  %4637 = vperm.xlu0 %4636, %v4602
  %v4638 = vpop.permute.xlu0 %4637
  %v4639 = vlaneseq
  %v4640 = vshrl.u32 %v4639, 7
  %v4641 = vadd.s32 %v4640, 48
  %4642 = vset.pattern.permute.xlu0 %v4641
  %4643 = vperm.xlu0 %4642, %v4602
  %v4644 = vpop.permute.xlu0 %4643
  %v4645 = vlaneseq
  %v4646 = vshrl.u32 %v4645, 7
  %v4647 = vadd.s32 %v4646, 56
  %4648 = vset.pattern.permute.xlu0 %v4647
  %4649 = vperm.xlu0 %4648, %v4602
  %v4650 = vpop.permute.xlu0 %4649
  %v4651 = vlaneseq
  %v4652 = vshrl.u32 %v4651, 7
  %v4653 = vadd.s32 %v4652, 64
  %4654 = vset.pattern.permute.xlu0 %v4653
  %4655 = vperm.xlu0 %4654, %v4602
  %v4656 = vpop.permute.xlu0 %4655
  %v4657 = vlaneseq
  %v4658 = vshrl.u32 %v4657, 7
  %v4659 = vadd.s32 %v4658, 72
  %4660 = vset.pattern.permute.xlu0 %v4659
  %4661 = vperm.xlu0 %4660, %v4602
  %v4662 = vpop.permute.xlu0 %4661
  %v4663 = vlaneseq
  %v4664 = vshrl.u32 %v4663, 7
  %v4665 = vadd.s32 %v4664, 80
  %4666 = vset.pattern.permute.xlu0 %v4665
  %4667 = vperm.xlu0 %4666, %v4602
  %v4668 = vpop.permute.xlu0 %4667
  %v4669 = vlaneseq
  %v4670 = vshrl.u32 %v4669, 7
  %v4671 = vadd.s32 %v4670, 88
  %4672 = vset.pattern.permute.xlu0 %v4671
  %4673 = vperm.xlu0 %4672, %v4602
  %v4674 = vpop.permute.xlu0 %4673
  %v4675 = vlaneseq
  %v4676 = vshrl.u32 %v4675, 7
  %v4677 = vadd.s32 %v4676, 96
  %4678 = vset.pattern.permute.xlu0 %v4677
  %4679 = vperm.xlu0 %4678, %v4602
  %v4680 = vpop.permute.xlu0 %4679
  %v4681 = vlaneseq
  %v4682 = vshrl.u32 %v4681, 7
  %v4683 = vadd.s32 %v4682, 104
  %4684 = vset.pattern.permute.xlu0 %v4683
  %4685 = vperm.xlu0 %4684, %v4602
  %v4686 = vpop.permute.xlu0 %4685
  %v4687 = vlaneseq
  %v4688 = vshrl.u32 %v4687, 7
  %v4689 = vadd.s32 %v4688, 112
  %4690 = vset.pattern.permute.xlu0 %v4689
  %4691 = vperm.xlu0 %4690, %v4602
  %v4692 = vpop.permute.xlu0 %4691
  %v4693 = vlaneseq
  %v4694 = vshrl.u32 %v4693, 7
  %v4695 = vadd.s32 %v4694, 120
  %4696 = vset.pattern.permute.xlu0 %v4695
  %4697 = vperm.xlu0 %4696, %v4602
  %v4698 = vpop.permute.xlu0 %4697
  %v4699 = vperm.slane %v62, 6
  %v4700 = vlaneseq
  %v4701 = vshrl.u32 %v4700, 7
  %4703 = vset.pattern.permute.xlu0 %v4701
  %4704 = vperm.xlu0 %4703, %v4699
  %v4705 = vpop.permute.xlu0 %4704
  %v4706 = vlaneseq
  %v4707 = vshrl.u32 %v4706, 7
  %v4708 = vadd.s32 %v4707, 8
  %4709 = vset.pattern.permute.xlu0 %v4708
  %4710 = vperm.xlu0 %4709, %v4699
  %v4711 = vpop.permute.xlu0 %4710
  %v4712 = vlaneseq
  %v4713 = vshrl.u32 %v4712, 7
  %v4714 = vadd.s32 %v4713, 16
  %4715 = vset.pattern.permute.xlu0 %v4714
  %4716 = vperm.xlu0 %4715, %v4699
  %v4717 = vpop.permute.xlu0 %4716
  %v4718 = vlaneseq
  %v4719 = vshrl.u32 %v4718, 7
  %v4720 = vadd.s32 %v4719, 24
  %4721 = vset.pattern.permute.xlu0 %v4720
  %4722 = vperm.xlu0 %4721, %v4699
  %v4723 = vpop.permute.xlu0 %4722
  %v4724 = vlaneseq
  %v4725 = vshrl.u32 %v4724, 7
  %v4726 = vadd.s32 %v4725, 32
  %4727 = vset.pattern.permute.xlu0 %v4726
  %4728 = vperm.xlu0 %4727, %v4699
  %v4729 = vpop.permute.xlu0 %4728
  %v4730 = vlaneseq
  %v4731 = vshrl.u32 %v4730, 7
  %v4732 = vadd.s32 %v4731, 40
  %4733 = vset.pattern.permute.xlu0 %v4732
  %4734 = vperm.xlu0 %4733, %v4699
  %v4735 = vpop.permute.xlu0 %4734
  %v4736 = vlaneseq
  %v4737 = vshrl.u32 %v4736, 7
  %v4738 = vadd.s32 %v4737, 48
  %4739 = vset.pattern.permute.xlu0 %v4738
  %4740 = vperm.xlu0 %4739, %v4699
  %v4741 = vpop.permute.xlu0 %4740
  %v4742 = vlaneseq
  %v4743 = vshrl.u32 %v4742, 7
  %v4744 = vadd.s32 %v4743, 56
  %4745 = vset.pattern.permute.xlu0 %v4744
  %4746 = vperm.xlu0 %4745, %v4699
  %v4747 = vpop.permute.xlu0 %4746
  %v4748 = vlaneseq
  %v4749 = vshrl.u32 %v4748, 7
  %v4750 = vadd.s32 %v4749, 64
  %4751 = vset.pattern.permute.xlu0 %v4750
  %4752 = vperm.xlu0 %4751, %v4699
  %v4753 = vpop.permute.xlu0 %4752
  %v4754 = vlaneseq
  %v4755 = vshrl.u32 %v4754, 7
  %v4756 = vadd.s32 %v4755, 72
  %4757 = vset.pattern.permute.xlu0 %v4756
  %4758 = vperm.xlu0 %4757, %v4699
  %v4759 = vpop.permute.xlu0 %4758
  %v4760 = vlaneseq
  %v4761 = vshrl.u32 %v4760, 7
  %v4762 = vadd.s32 %v4761, 80
  %4763 = vset.pattern.permute.xlu0 %v4762
  %4764 = vperm.xlu0 %4763, %v4699
  %v4765 = vpop.permute.xlu0 %4764
  %v4766 = vlaneseq
  %v4767 = vshrl.u32 %v4766, 7
  %v4768 = vadd.s32 %v4767, 88
  %4769 = vset.pattern.permute.xlu0 %v4768
  %4770 = vperm.xlu0 %4769, %v4699
  %v4771 = vpop.permute.xlu0 %4770
  %v4772 = vlaneseq
  %v4773 = vshrl.u32 %v4772, 7
  %v4774 = vadd.s32 %v4773, 96
  %4775 = vset.pattern.permute.xlu0 %v4774
  %4776 = vperm.xlu0 %4775, %v4699
  %v4777 = vpop.permute.xlu0 %4776
  %v4778 = vlaneseq
  %v4779 = vshrl.u32 %v4778, 7
  %v4780 = vadd.s32 %v4779, 104
  %4781 = vset.pattern.permute.xlu0 %v4780
  %4782 = vperm.xlu0 %4781, %v4699
  %v4783 = vpop.permute.xlu0 %4782
  %v4784 = vlaneseq
  %v4785 = vshrl.u32 %v4784, 7
  %v4786 = vadd.s32 %v4785, 112
  %4787 = vset.pattern.permute.xlu0 %v4786
  %4788 = vperm.xlu0 %4787, %v4699
  %v4789 = vpop.permute.xlu0 %4788
  %v4790 = vlaneseq
  %v4791 = vshrl.u32 %v4790, 7
  %v4792 = vadd.s32 %v4791, 120
  %4793 = vset.pattern.permute.xlu0 %v4792
  %4794 = vperm.xlu0 %4793, %v4699
  %v4795 = vpop.permute.xlu0 %4794
  %v4796 = vperm.slane %v63, 6
  %v4797 = vlaneseq
  %v4798 = vshrl.u32 %v4797, 7
  %4800 = vset.pattern.permute.xlu0 %v4798
  %4801 = vperm.xlu0 %4800, %v4796
  %v4802 = vpop.permute.xlu0 %4801
  %v4803 = vlaneseq
  %v4804 = vshrl.u32 %v4803, 7
  %v4805 = vadd.s32 %v4804, 8
  %4806 = vset.pattern.permute.xlu0 %v4805
  %4807 = vperm.xlu0 %4806, %v4796
  %v4808 = vpop.permute.xlu0 %4807
  %v4809 = vlaneseq
  %v4810 = vshrl.u32 %v4809, 7
  %v4811 = vadd.s32 %v4810, 16
  %4812 = vset.pattern.permute.xlu0 %v4811
  %4813 = vperm.xlu0 %4812, %v4796
  %v4814 = vpop.permute.xlu0 %4813
  %v4815 = vlaneseq
  %v4816 = vshrl.u32 %v4815, 7
  %v4817 = vadd.s32 %v4816, 24
  %4818 = vset.pattern.permute.xlu0 %v4817
  %4819 = vperm.xlu0 %4818, %v4796
  %v4820 = vpop.permute.xlu0 %4819
  %v4821 = vlaneseq
  %v4822 = vshrl.u32 %v4821, 7
  %v4823 = vadd.s32 %v4822, 32
  %4824 = vset.pattern.permute.xlu0 %v4823
  %4825 = vperm.xlu0 %4824, %v4796
  %v4826 = vpop.permute.xlu0 %4825
  %v4827 = vlaneseq
  %v4828 = vshrl.u32 %v4827, 7
  %v4829 = vadd.s32 %v4828, 40
  %4830 = vset.pattern.permute.xlu0 %v4829
  %4831 = vperm.xlu0 %4830, %v4796
  %v4832 = vpop.permute.xlu0 %4831
  %v4833 = vlaneseq
  %v4834 = vshrl.u32 %v4833, 7
  %v4835 = vadd.s32 %v4834, 48
  %4836 = vset.pattern.permute.xlu0 %v4835
  %4837 = vperm.xlu0 %4836, %v4796
  %v4838 = vpop.permute.xlu0 %4837
  %v4839 = vlaneseq
  %v4840 = vshrl.u32 %v4839, 7
  %v4841 = vadd.s32 %v4840, 56
  %4842 = vset.pattern.permute.xlu0 %v4841
  %4843 = vperm.xlu0 %4842, %v4796
  %v4844 = vpop.permute.xlu0 %4843
  %v4845 = vlaneseq
  %v4846 = vshrl.u32 %v4845, 7
  %v4847 = vadd.s32 %v4846, 64
  %4848 = vset.pattern.permute.xlu0 %v4847
  %4849 = vperm.xlu0 %4848, %v4796
  %v4850 = vpop.permute.xlu0 %4849
  %v4851 = vlaneseq
  %v4852 = vshrl.u32 %v4851, 7
  %v4853 = vadd.s32 %v4852, 72
  %4854 = vset.pattern.permute.xlu0 %v4853
  %4855 = vperm.xlu0 %4854, %v4796
  %v4856 = vpop.permute.xlu0 %4855
  %v4857 = vlaneseq
  %v4858 = vshrl.u32 %v4857, 7
  %v4859 = vadd.s32 %v4858, 80
  %4860 = vset.pattern.permute.xlu0 %v4859
  %4861 = vperm.xlu0 %4860, %v4796
  %v4862 = vpop.permute.xlu0 %4861
  %v4863 = vlaneseq
  %v4864 = vshrl.u32 %v4863, 7
  %v4865 = vadd.s32 %v4864, 88
  %4866 = vset.pattern.permute.xlu0 %v4865
  %4867 = vperm.xlu0 %4866, %v4796
  %v4868 = vpop.permute.xlu0 %4867
  %v4869 = vlaneseq
  %v4870 = vshrl.u32 %v4869, 7
  %v4871 = vadd.s32 %v4870, 96
  %4872 = vset.pattern.permute.xlu0 %v4871
  %4873 = vperm.xlu0 %4872, %v4796
  %v4874 = vpop.permute.xlu0 %4873
  %v4875 = vlaneseq
  %v4876 = vshrl.u32 %v4875, 7
  %v4877 = vadd.s32 %v4876, 104
  %4878 = vset.pattern.permute.xlu0 %v4877
  %4879 = vperm.xlu0 %4878, %v4796
  %v4880 = vpop.permute.xlu0 %4879
  %v4881 = vlaneseq
  %v4882 = vshrl.u32 %v4881, 7
  %v4883 = vadd.s32 %v4882, 112
  %4884 = vset.pattern.permute.xlu0 %v4883
  %4885 = vperm.xlu0 %4884, %v4796
  %v4886 = vpop.permute.xlu0 %4885
  %v4887 = vlaneseq
  %v4888 = vshrl.u32 %v4887, 7
  %v4889 = vadd.s32 %v4888, 120
  %4890 = vset.pattern.permute.xlu0 %v4889
  %4891 = vperm.xlu0 %4890, %v4796
  %v4892 = vpop.permute.xlu0 %4891
  %v4893 = vperm.slane %v62, 7
  %v4894 = vlaneseq
  %v4895 = vshrl.u32 %v4894, 7
  %4897 = vset.pattern.permute.xlu0 %v4895
  %4898 = vperm.xlu0 %4897, %v4893
  %v4899 = vpop.permute.xlu0 %4898
  %v4900 = vlaneseq
  %v4901 = vshrl.u32 %v4900, 7
  %v4902 = vadd.s32 %v4901, 8
  %4903 = vset.pattern.permute.xlu0 %v4902
  %4904 = vperm.xlu0 %4903, %v4893
  %v4905 = vpop.permute.xlu0 %4904
  %v4906 = vlaneseq
  %v4907 = vshrl.u32 %v4906, 7
  %v4908 = vadd.s32 %v4907, 16
  %4909 = vset.pattern.permute.xlu0 %v4908
  %4910 = vperm.xlu0 %4909, %v4893
  %v4911 = vpop.permute.xlu0 %4910
  %v4912 = vlaneseq
  %v4913 = vshrl.u32 %v4912, 7
  %v4914 = vadd.s32 %v4913, 24
  %4915 = vset.pattern.permute.xlu0 %v4914
  %4916 = vperm.xlu0 %4915, %v4893
  %v4917 = vpop.permute.xlu0 %4916
  %v4918 = vlaneseq
  %v4919 = vshrl.u32 %v4918, 7
  %v4920 = vadd.s32 %v4919, 32
  %4921 = vset.pattern.permute.xlu0 %v4920
  %4922 = vperm.xlu0 %4921, %v4893
  %v4923 = vpop.permute.xlu0 %4922
  %v4924 = vlaneseq
  %v4925 = vshrl.u32 %v4924, 7
  %v4926 = vadd.s32 %v4925, 40
  %4927 = vset.pattern.permute.xlu0 %v4926
  %4928 = vperm.xlu0 %4927, %v4893
  %v4929 = vpop.permute.xlu0 %4928
  %v4930 = vlaneseq
  %v4931 = vshrl.u32 %v4930, 7
  %v4932 = vadd.s32 %v4931, 48
  %4933 = vset.pattern.permute.xlu0 %v4932
  %4934 = vperm.xlu0 %4933, %v4893
  %v4935 = vpop.permute.xlu0 %4934
  %v4936 = vlaneseq
  %v4937 = vshrl.u32 %v4936, 7
  %v4938 = vadd.s32 %v4937, 56
  %4939 = vset.pattern.permute.xlu0 %v4938
  %4940 = vperm.xlu0 %4939, %v4893
  %v4941 = vpop.permute.xlu0 %4940
  %v4942 = vlaneseq
  %v4943 = vshrl.u32 %v4942, 7
  %v4944 = vadd.s32 %v4943, 64
  %4945 = vset.pattern.permute.xlu0 %v4944
  %4946 = vperm.xlu0 %4945, %v4893
  %v4947 = vpop.permute.xlu0 %4946
  %v4948 = vlaneseq
  %v4949 = vshrl.u32 %v4948, 7
  %v4950 = vadd.s32 %v4949, 72
  %4951 = vset.pattern.permute.xlu0 %v4950
  %4952 = vperm.xlu0 %4951, %v4893
  %v4953 = vpop.permute.xlu0 %4952
  %v4954 = vlaneseq
  %v4955 = vshrl.u32 %v4954, 7
  %v4956 = vadd.s32 %v4955, 80
  %4957 = vset.pattern.permute.xlu0 %v4956
  %4958 = vperm.xlu0 %4957, %v4893
  %v4959 = vpop.permute.xlu0 %4958
  %v4960 = vlaneseq
  %v4961 = vshrl.u32 %v4960, 7
  %v4962 = vadd.s32 %v4961, 88
  %4963 = vset.pattern.permute.xlu0 %v4962
  %4964 = vperm.xlu0 %4963, %v4893
  %v4965 = vpop.permute.xlu0 %4964
  %v4966 = vlaneseq
  %v4967 = vshrl.u32 %v4966, 7
  %v4968 = vadd.s32 %v4967, 96
  %4969 = vset.pattern.permute.xlu0 %v4968
  %4970 = vperm.xlu0 %4969, %v4893
  %v4971 = vpop.permute.xlu0 %4970
  %v4972 = vlaneseq
  %v4973 = vshrl.u32 %v4972, 7
  %v4974 = vadd.s32 %v4973, 104
  %4975 = vset.pattern.permute.xlu0 %v4974
  %4976 = vperm.xlu0 %4975, %v4893
  %v4977 = vpop.permute.xlu0 %4976
  %v4978 = vlaneseq
  %v4979 = vshrl.u32 %v4978, 7
  %v4980 = vadd.s32 %v4979, 112
  %4981 = vset.pattern.permute.xlu0 %v4980
  %4982 = vperm.xlu0 %4981, %v4893
  %v4983 = vpop.permute.xlu0 %4982
  %v4984 = vlaneseq
  %v4985 = vshrl.u32 %v4984, 7
  %v4986 = vadd.s32 %v4985, 120
  %4987 = vset.pattern.permute.xlu0 %v4986
  %4988 = vperm.xlu0 %4987, %v4893
  %v4989 = vpop.permute.xlu0 %4988
  %v4990 = vperm.slane %v63, 7
  %v4991 = vlaneseq
  %v4992 = vshrl.u32 %v4991, 7
  %4994 = vset.pattern.permute.xlu0 %v4992
  %4995 = vperm.xlu0 %4994, %v4990
  %v4996 = vpop.permute.xlu0 %4995
  %v4997 = vlaneseq
  %v4998 = vshrl.u32 %v4997, 7
  %v4999 = vadd.s32 %v4998, 8
  %5000 = vset.pattern.permute.xlu0 %v4999
  %5001 = vperm.xlu0 %5000, %v4990
  %v5002 = vpop.permute.xlu0 %5001
  %v5003 = vlaneseq
  %v5004 = vshrl.u32 %v5003, 7
  %v5005 = vadd.s32 %v5004, 16
  %5006 = vset.pattern.permute.xlu0 %v5005
  %5007 = vperm.xlu0 %5006, %v4990
  %v5008 = vpop.permute.xlu0 %5007
  %v5009 = vlaneseq
  %v5010 = vshrl.u32 %v5009, 7
  %v5011 = vadd.s32 %v5010, 24
  %5012 = vset.pattern.permute.xlu0 %v5011
  %5013 = vperm.xlu0 %5012, %v4990
  %v5014 = vpop.permute.xlu0 %5013
  %v5015 = vlaneseq
  %v5016 = vshrl.u32 %v5015, 7
  %v5017 = vadd.s32 %v5016, 32
  %5018 = vset.pattern.permute.xlu0 %v5017
  %5019 = vperm.xlu0 %5018, %v4990
  %v5020 = vpop.permute.xlu0 %5019
  %v5021 = vlaneseq
  %v5022 = vshrl.u32 %v5021, 7
  %v5023 = vadd.s32 %v5022, 40
  %5024 = vset.pattern.permute.xlu0 %v5023
  %5025 = vperm.xlu0 %5024, %v4990
  %v5026 = vpop.permute.xlu0 %5025
  %v5027 = vlaneseq
  %v5028 = vshrl.u32 %v5027, 7
  %v5029 = vadd.s32 %v5028, 48
  %5030 = vset.pattern.permute.xlu0 %v5029
  %5031 = vperm.xlu0 %5030, %v4990
  %v5032 = vpop.permute.xlu0 %5031
  %v5033 = vlaneseq
  %v5034 = vshrl.u32 %v5033, 7
  %v5035 = vadd.s32 %v5034, 56
  %5036 = vset.pattern.permute.xlu0 %v5035
  %5037 = vperm.xlu0 %5036, %v4990
  %v5038 = vpop.permute.xlu0 %5037
  %v5039 = vlaneseq
  %v5040 = vshrl.u32 %v5039, 7
  %v5041 = vadd.s32 %v5040, 64
  %5042 = vset.pattern.permute.xlu0 %v5041
  %5043 = vperm.xlu0 %5042, %v4990
  %v5044 = vpop.permute.xlu0 %5043
  %v5045 = vlaneseq
  %v5046 = vshrl.u32 %v5045, 7
  %v5047 = vadd.s32 %v5046, 72
  %5048 = vset.pattern.permute.xlu0 %v5047
  %5049 = vperm.xlu0 %5048, %v4990
  %v5050 = vpop.permute.xlu0 %5049
  %v5051 = vlaneseq
  %v5052 = vshrl.u32 %v5051, 7
  %v5053 = vadd.s32 %v5052, 80
  %5054 = vset.pattern.permute.xlu0 %v5053
  %5055 = vperm.xlu0 %5054, %v4990
  %v5056 = vpop.permute.xlu0 %5055
  %v5057 = vlaneseq
  %v5058 = vshrl.u32 %v5057, 7
  %v5059 = vadd.s32 %v5058, 88
  %5060 = vset.pattern.permute.xlu0 %v5059
  %5061 = vperm.xlu0 %5060, %v4990
  %v5062 = vpop.permute.xlu0 %5061
  %v5063 = vlaneseq
  %v5064 = vshrl.u32 %v5063, 7
  %v5065 = vadd.s32 %v5064, 96
  %5066 = vset.pattern.permute.xlu0 %v5065
  %5067 = vperm.xlu0 %5066, %v4990
  %v5068 = vpop.permute.xlu0 %5067
  %v5069 = vlaneseq
  %v5070 = vshrl.u32 %v5069, 7
  %v5071 = vadd.s32 %v5070, 104
  %5072 = vset.pattern.permute.xlu0 %v5071
  %5073 = vperm.xlu0 %5072, %v4990
  %v5074 = vpop.permute.xlu0 %5073
  %v5075 = vlaneseq
  %v5076 = vshrl.u32 %v5075, 7
  %v5077 = vadd.s32 %v5076, 112
  %5078 = vset.pattern.permute.xlu0 %v5077
  %5079 = vperm.xlu0 %5078, %v4990
  %v5080 = vpop.permute.xlu0 %5079
  %v5081 = vlaneseq
  %v5082 = vshrl.u32 %v5081, 7
  %v5083 = vadd.s32 %v5082, 120
  %5084 = vset.pattern.permute.xlu0 %v5083
  %5085 = vperm.xlu0 %5084, %v4990
  %v5086 = vpop.permute.xlu0 %5085
  %v5087 = vmul.f32 %v3279, %v3541
  %v5088 = vmul.f32 %v3280, %v3547
  %v5089 = vmul.f32 %v3281, %v3553
  %v5090 = vmul.f32 %v3282, %v3559
  %v5091 = vmul.f32 %v3283, %v3565
  %v5092 = vmul.f32 %v3284, %v3571
  %v5093 = vmul.f32 %v3285, %v3577
  %v5094 = vmul.f32 %v3286, %v3583
  %v5095 = vmul.f32 %v3287, %v3589
  %v5096 = vmul.f32 %v3288, %v3595
  %v5097 = vmul.f32 %v3289, %v3601
  %v5098 = vmul.f32 %v3290, %v3607
  %v5099 = vmul.f32 %v3291, %v3613
  %v5100 = vmul.f32 %v3292, %v3619
  %v5101 = vmul.f32 %v3293, %v3625
  %v5102 = vmul.f32 %v3294, %v3631
  %v5103 = vmul.f32 %v3295, %v3638
  %v5104 = vmul.f32 %v3296, %v3644
  %v5105 = vmul.f32 %v3297, %v3650
  %v5106 = vmul.f32 %v3298, %v3656
  %v5107 = vmul.f32 %v3299, %v3662
  %v5108 = vmul.f32 %v3300, %v3668
  %v5109 = vmul.f32 %v3301, %v3674
  %v5110 = vmul.f32 %v3302, %v3680
  %v5111 = vmul.f32 %v3303, %v3686
  %v5112 = vmul.f32 %v3304, %v3692
  %v5113 = vmul.f32 %v3305, %v3698
  %v5114 = vmul.f32 %v3306, %v3704
  %v5115 = vmul.f32 %v3307, %v3710
  %v5116 = vmul.f32 %v3308, %v3716
  %v5117 = vmul.f32 %v3309, %v3722
  %v5118 = vmul.f32 %v3310, %v3728
  %v5119 = vmul.f32 %v3311, %v3735
  %v5120 = vmul.f32 %v3312, %v3741
  %v5121 = vmul.f32 %v3313, %v3747
  %v5122 = vmul.f32 %v3314, %v3753
  %v5123 = vmul.f32 %v3315, %v3759
  %v5124 = vmul.f32 %v3316, %v3765
  %v5125 = vmul.f32 %v3317, %v3771
  %v5126 = vmul.f32 %v3318, %v3777
  %v5127 = vmul.f32 %v3319, %v3783
  %v5128 = vmul.f32 %v3320, %v3789
  %v5129 = vmul.f32 %v3321, %v3795
  %v5130 = vmul.f32 %v3322, %v3801
  %v5131 = vmul.f32 %v3323, %v3807
  %v5132 = vmul.f32 %v3324, %v3813
  %v5133 = vmul.f32 %v3325, %v3819
  %v5134 = vmul.f32 %v3326, %v3825
  %v5135 = vmul.f32 %v3327, %v3832
  %v5136 = vmul.f32 %v3328, %v3838
  %v5137 = vmul.f32 %v3329, %v3844
  %v5138 = vmul.f32 %v3330, %v3850
  %v5139 = vmul.f32 %v3331, %v3856
  %v5140 = vmul.f32 %v3332, %v3862
  %v5141 = vmul.f32 %v3333, %v3868
  %v5142 = vmul.f32 %v3334, %v3874
  %v5143 = vmul.f32 %v3335, %v3880
  %v5144 = vmul.f32 %v3336, %v3886
  %v5145 = vmul.f32 %v3337, %v3892
  %v5146 = vmul.f32 %v3338, %v3898
  %v5147 = vmul.f32 %v3339, %v3904
  %v5148 = vmul.f32 %v3340, %v3910
  %v5149 = vmul.f32 %v3341, %v3916
  %v5150 = vmul.f32 %v3342, %v3922
  %v5151 = vmul.f32 %v3343, %v3929
  %v5152 = vmul.f32 %v3344, %v3935
  %v5153 = vmul.f32 %v3345, %v3941
  %v5154 = vmul.f32 %v3346, %v3947
  %v5155 = vmul.f32 %v3347, %v3953
  %v5156 = vmul.f32 %v3348, %v3959
  %v5157 = vmul.f32 %v3349, %v3965
  %v5158 = vmul.f32 %v3350, %v3971
  %v5159 = vmul.f32 %v3351, %v3977
  %v5160 = vmul.f32 %v3352, %v3983
  %v5161 = vmul.f32 %v3353, %v3989
  %v5162 = vmul.f32 %v3354, %v3995
  %v5163 = vmul.f32 %v3355, %v4001
  %v5164 = vmul.f32 %v3356, %v4007
  %v5165 = vmul.f32 %v3357, %v4013
  %v5166 = vmul.f32 %v3358, %v4019
  %v5167 = vmul.f32 %v3359, %v4026
  %v5168 = vmul.f32 %v3360, %v4032
  %v5169 = vmul.f32 %v3361, %v4038
  %v5170 = vmul.f32 %v3362, %v4044
  %v5171 = vmul.f32 %v3363, %v4050
  %v5172 = vmul.f32 %v3364, %v4056
  %v5173 = vmul.f32 %v3365, %v4062
  %v5174 = vmul.f32 %v3366, %v4068
  %v5175 = vmul.f32 %v3367, %v4074
  %v5176 = vmul.f32 %v3368, %v4080
  %v5177 = vmul.f32 %v3369, %v4086
  %v5178 = vmul.f32 %v3370, %v4092
  %v5179 = vmul.f32 %v3371, %v4098
  %v5180 = vmul.f32 %v3372, %v4104
  %v5181 = vmul.f32 %v3373, %v4110
  %v5182 = vmul.f32 %v3374, %v4116
  %v5183 = vmul.f32 %v3375, %v4123
  %v5184 = vmul.f32 %v3376, %v4129
  %v5185 = vmul.f32 %v3377, %v4135
  %v5186 = vmul.f32 %v3378, %v4141
  %v5187 = vmul.f32 %v3379, %v4147
  %v5188 = vmul.f32 %v3380, %v4153
  %v5189 = vmul.f32 %v3381, %v4159
  %v5190 = vmul.f32 %v3382, %v4165
  %v5191 = vmul.f32 %v3383, %v4171
  %v5192 = vmul.f32 %v3384, %v4177
  %v5193 = vmul.f32 %v3385, %v4183
  %v5194 = vmul.f32 %v3386, %v4189
  %v5195 = vmul.f32 %v3387, %v4195
  %v5196 = vmul.f32 %v3388, %v4201
  %v5197 = vmul.f32 %v3389, %v4207
  %v5198 = vmul.f32 %v3390, %v4213
  %v5199 = vmul.f32 %v3391, %v4220
  %v5200 = vmul.f32 %v3392, %v4226
  %v5201 = vmul.f32 %v3393, %v4232
  %v5202 = vmul.f32 %v3394, %v4238
  %v5203 = vmul.f32 %v3395, %v4244
  %v5204 = vmul.f32 %v3396, %v4250
  %v5205 = vmul.f32 %v3397, %v4256
  %v5206 = vmul.f32 %v3398, %v4262
  %v5207 = vmul.f32 %v3399, %v4268
  %v5208 = vmul.f32 %v3400, %v4274
  %v5209 = vmul.f32 %v3401, %v4280
  %v5210 = vmul.f32 %v3402, %v4286
  %v5211 = vmul.f32 %v3403, %v4292
  %v5212 = vmul.f32 %v3404, %v4298
  %v5213 = vmul.f32 %v3405, %v4304
  %v5214 = vmul.f32 %v3406, %v4310
  %v5215 = vmul.f32 %v3407, %v4317
  %v5216 = vmul.f32 %v3408, %v4323
  %v5217 = vmul.f32 %v3409, %v4329
  %v5218 = vmul.f32 %v3410, %v4335
  %v5219 = vmul.f32 %v3411, %v4341
  %v5220 = vmul.f32 %v3412, %v4347
  %v5221 = vmul.f32 %v3413, %v4353
  %v5222 = vmul.f32 %v3414, %v4359
  %v5223 = vmul.f32 %v3415, %v4365
  %v5224 = vmul.f32 %v3416, %v4371
  %v5225 = vmul.f32 %v3417, %v4377
  %v5226 = vmul.f32 %v3418, %v4383
  %v5227 = vmul.f32 %v3419, %v4389
  %v5228 = vmul.f32 %v3420, %v4395
  %v5229 = vmul.f32 %v3421, %v4401
  %v5230 = vmul.f32 %v3422, %v4407
  %v5231 = vmul.f32 %v3423, %v4414
  %v5232 = vmul.f32 %v3424, %v4420
  %v5233 = vmul.f32 %v3425, %v4426
  %v5234 = vmul.f32 %v3426, %v4432
  %v5235 = vmul.f32 %v3427, %v4438
  %v5236 = vmul.f32 %v3428, %v4444
  %v5237 = vmul.f32 %v3429, %v4450
  %v5238 = vmul.f32 %v3430, %v4456
  %v5239 = vmul.f32 %v3431, %v4462
  %v5240 = vmul.f32 %v3432, %v4468
  %v5241 = vmul.f32 %v3433, %v4474
  %v5242 = vmul.f32 %v3434, %v4480
  %v5243 = vmul.f32 %v3435, %v4486
  %v5244 = vmul.f32 %v3436, %v4492
  %v5245 = vmul.f32 %v3437, %v4498
  %v5246 = vmul.f32 %v3438, %v4504
  %v5247 = vmul.f32 %v3439, %v4511
  %v5248 = vmul.f32 %v3440, %v4517
  %v5249 = vmul.f32 %v3441, %v4523
  %v5250 = vmul.f32 %v3442, %v4529
  %v5251 = vmul.f32 %v3443, %v4535
  %v5252 = vmul.f32 %v3444, %v4541
  %v5253 = vmul.f32 %v3445, %v4547
  %v5254 = vmul.f32 %v3446, %v4553
  %v5255 = vmul.f32 %v3447, %v4559
  %v5256 = vmul.f32 %v3448, %v4565
  %v5257 = vmul.f32 %v3449, %v4571
  %v5258 = vmul.f32 %v3450, %v4577
  %v5259 = vmul.f32 %v3451, %v4583
  %v5260 = vmul.f32 %v3452, %v4589
  %v5261 = vmul.f32 %v3453, %v4595
  %v5262 = vmul.f32 %v3454, %v4601
  %v5263 = vmul.f32 %v3455, %v4608
  %v5264 = vmul.f32 %v3456, %v4614
  %v5265 = vmul.f32 %v3457, %v4620
  %v5266 = vmul.f32 %v3458, %v4626
  %v5267 = vmul.f32 %v3459, %v4632
  %v5268 = vmul.f32 %v3460, %v4638
  %v5269 = vmul.f32 %v3461, %v4644
  %v5270 = vmul.f32 %v3462, %v4650
  %v5271 = vmul.f32 %v3463, %v4656
  %v5272 = vmul.f32 %v3464, %v4662
  %v5273 = vmul.f32 %v3465, %v4668
  %v5274 = vmul.f32 %v3466, %v4674
  %v5275 = vmul.f32 %v3467, %v4680
  %v5276 = vmul.f32 %v3468, %v4686
  %v5277 = vmul.f32 %v3469, %v4692
  %v5278 = vmul.f32 %v3470, %v4698
  %v5279 = vmul.f32 %v3471, %v4705
  %v5280 = vmul.f32 %v3472, %v4711
  %v5281 = vmul.f32 %v3473, %v4717
  %v5282 = vmul.f32 %v3474, %v4723
  %v5283 = vmul.f32 %v3475, %v4729
  %v5284 = vmul.f32 %v3476, %v4735
  %v5285 = vmul.f32 %v3477, %v4741
  %v5286 = vmul.f32 %v3478, %v4747
  %v5287 = vmul.f32 %v3479, %v4753
  %v5288 = vmul.f32 %v3480, %v4759
  %v5289 = vmul.f32 %v3481, %v4765
  %v5290 = vmul.f32 %v3482, %v4771
  %v5291 = vmul.f32 %v3483, %v4777
  %v5292 = vmul.f32 %v3484, %v4783
  %v5293 = vmul.f32 %v3485, %v4789
  %v5294 = vmul.f32 %v3486, %v4795
  %v5295 = vmul.f32 %v3487, %v4802
  %v5296 = vmul.f32 %v3488, %v4808
  %v5297 = vmul.f32 %v3489, %v4814
  %v5298 = vmul.f32 %v3490, %v4820
  %v5299 = vmul.f32 %v3491, %v4826
  %v5300 = vmul.f32 %v3492, %v4832
  %v5301 = vmul.f32 %v3493, %v4838
  %v5302 = vmul.f32 %v3494, %v4844
  %v5303 = vmul.f32 %v3495, %v4850
  %v5304 = vmul.f32 %v3496, %v4856
  %v5305 = vmul.f32 %v3497, %v4862
  %v5306 = vmul.f32 %v3498, %v4868
  %v5307 = vmul.f32 %v3499, %v4874
  %v5308 = vmul.f32 %v3500, %v4880
  %v5309 = vmul.f32 %v3501, %v4886
  %v5310 = vmul.f32 %v3502, %v4892
  %v5311 = vmul.f32 %v3503, %v4899
  %v5312 = vmul.f32 %v3504, %v4905
  %v5313 = vmul.f32 %v3505, %v4911
  %v5314 = vmul.f32 %v3506, %v4917
  %v5315 = vmul.f32 %v3507, %v4923
  %v5316 = vmul.f32 %v3508, %v4929
  %v5317 = vmul.f32 %v3509, %v4935
  %v5318 = vmul.f32 %v3510, %v4941
  %v5319 = vmul.f32 %v3511, %v4947
  %v5320 = vmul.f32 %v3512, %v4953
  %v5321 = vmul.f32 %v3513, %v4959
  %v5322 = vmul.f32 %v3514, %v4965
  %v5323 = vmul.f32 %v3515, %v4971
  %v5324 = vmul.f32 %v3516, %v4977
  %v5325 = vmul.f32 %v3517, %v4983
  %v5326 = vmul.f32 %v3518, %v4989
  %v5327 = vmul.f32 %v3519, %v4996
  %v5328 = vmul.f32 %v3520, %v5002
  %v5329 = vmul.f32 %v3521, %v5008
  %v5330 = vmul.f32 %v3522, %v5014
  %v5331 = vmul.f32 %v3523, %v5020
  %v5332 = vmul.f32 %v3524, %v5026
  %v5333 = vmul.f32 %v3525, %v5032
  %v5334 = vmul.f32 %v3526, %v5038
  %v5335 = vmul.f32 %v3527, %v5044
  %v5336 = vmul.f32 %v3528, %v5050
  %v5337 = vmul.f32 %v3529, %v5056
  %v5338 = vmul.f32 %v3530, %v5062
  %v5339 = vmul.f32 %v3531, %v5068
  %v5340 = vmul.f32 %v3532, %v5074
  %v5341 = vmul.f32 %v3533, %v5080
  %v5342 = vmul.f32 %v3534, %v5086
  %v5343 = vld [vmem:[#allocation2] sm:$0xff]
  %v5344 = vadd.f32 %v5087, %v5088
  %v5345 = vadd.f32 %v5344, %v5089
  %v5346 = vadd.f32 %v5345, %v5090
  %v5347 = vadd.f32 %v5346, %v5091
  %v5348 = vadd.f32 %v5347, %v5092
  %v5349 = vadd.f32 %v5348, %v5093
  %v5350 = vadd.f32 %v5349, %v5094
  %v5351 = vadd.f32 %v5350, %v5095
  %v5352 = vadd.f32 %v5351, %v5096
  %v5353 = vadd.f32 %v5352, %v5097
  %v5354 = vadd.f32 %v5353, %v5098
  %v5355 = vadd.f32 %v5354, %v5099
  %v5356 = vadd.f32 %v5355, %v5100
  %v5357 = vadd.f32 %v5356, %v5101
  %v5358 = vadd.f32 %v5357, %v5102
  %v5359 = vadd.f32 %v5358, %v5103
  %v5360 = vadd.f32 %v5359, %v5104
  %v5361 = vadd.f32 %v5360, %v5105
  %v5362 = vadd.f32 %v5361, %v5106
  %v5363 = vadd.f32 %v5362, %v5107
  %v5364 = vadd.f32 %v5363, %v5108
  %v5365 = vadd.f32 %v5364, %v5109
  %v5366 = vadd.f32 %v5365, %v5110
  %v5367 = vadd.f32 %v5366, %v5111
  %v5368 = vadd.f32 %v5367, %v5112
  %v5369 = vadd.f32 %v5368, %v5113
  %v5370 = vadd.f32 %v5369, %v5114
  %v5371 = vadd.f32 %v5370, %v5115
  %v5372 = vadd.f32 %v5371, %v5116
  %v5373 = vadd.f32 %v5372, %v5117
  %v5374 = vadd.f32 %v5373, %v5118
  %v5375 = vrot.slane %v5374, 4
  %v5376 = vadd.f32 %v5374, %v5375
  %v5377 = vrot.slane %v5376, 2
  %v5378 = vadd.f32 %v5376, %v5377
  %v5379 = vrot.slane %v5378, 1
  %v5380 = vadd.f32 %v5378, %v5379
  %v5381 = vadd.f32 %v5119, %v5120
  %v5382 = vadd.f32 %v5381, %v5121
  %v5383 = vadd.f32 %v5382, %v5122
  %v5384 = vadd.f32 %v5383, %v5123
  %v5385 = vadd.f32 %v5384, %v5124
  %v5386 = vadd.f32 %v5385, %v5125
  %v5387 = vadd.f32 %v5386, %v5126
  %v5388 = vadd.f32 %v5387, %v5127
  %v5389 = vadd.f32 %v5388, %v5128
  %v5390 = vadd.f32 %v5389, %v5129
  %v5391 = vadd.f32 %v5390, %v5130
  %v5392 = vadd.f32 %v5391, %v5131
  %v5393 = vadd.f32 %v5392, %v5132
  %v5394 = vadd.f32 %v5393, %v5133
  %v5395 = vadd.f32 %v5394, %v5134
  %v5396 = vadd.f32 %v5395, %v5135
  %v5397 = vadd.f32 %v5396, %v5136
  %v5398 = vadd.f32 %v5397, %v5137
  %v5399 = vadd.f32 %v5398, %v5138
  %v5400 = vadd.f32 %v5399, %v5139
  %v5401 = vadd.f32 %v5400, %v5140
  %v5402 = vadd.f32 %v5401, %v5141
  %v5403 = vadd.f32 %v5402, %v5142
  %v5404 = vadd.f32 %v5403, %v5143
  %v5405 = vadd.f32 %v5404, %v5144
  %v5406 = vadd.f32 %v5405, %v5145
  %v5407 = vadd.f32 %v5406, %v5146
  %v5408 = vadd.f32 %v5407, %v5147
  %v5409 = vadd.f32 %v5408, %v5148
  %v5410 = vadd.f32 %v5409, %v5149
  %v5411 = vadd.f32 %v5410, %v5150
  %v5412 = vrot.slane %v5411, 4
  %v5413 = vadd.f32 %v5411, %v5412
  %v5414 = vrot.slane %v5413, 2
  %v5415 = vadd.f32 %v5413, %v5414
  %v5416 = vrot.slane %v5415, 1
  %v5417 = vadd.f32 %v5415, %v5416
  %v5418 = vadd.f32 %v5151, %v5152
  %v5419 = vadd.f32 %v5418, %v5153
  %v5420 = vadd.f32 %v5419, %v5154
  %v5421 = vadd.f32 %v5420, %v5155
  %v5422 = vadd.f32 %v5421, %v5156
  %v5423 = vadd.f32 %v5422, %v5157
  %v5424 = vadd.f32 %v5423, %v5158
  %v5425 = vadd.f32 %v5424, %v5159
  %v5426 = vadd.f32 %v5425, %v5160
  %v5427 = vadd.f32 %v5426, %v5161
  %v5428 = vadd.f32 %v5427, %v5162
  %v5429 = vadd.f32 %v5428, %v5163
  %v5430 = vadd.f32 %v5429, %v5164
  %v5431 = vadd.f32 %v5430, %v5165
  %v5432 = vadd.f32 %v5431, %v5166
  %v5433 = vadd.f32 %v5432, %v5167
  %v5434 = vadd.f32 %v5433, %v5168
  %v5435 = vadd.f32 %v5434, %v5169
  %v5436 = vadd.f32 %v5435, %v5170
  %v5437 = vadd.f32 %v5436, %v5171
  %v5438 = vadd.f32 %v5437, %v5172
  %v5439 = vadd.f32 %v5438, %v5173
  %v5440 = vadd.f32 %v5439, %v5174
  %v5441 = vadd.f32 %v5440, %v5175
  %v5442 = vadd.f32 %v5441, %v5176
  %v5443 = vadd.f32 %v5442, %v5177
  %v5444 = vadd.f32 %v5443, %v5178
  %v5445 = vadd.f32 %v5444, %v5179
  %v5446 = vadd.f32 %v5445, %v5180
  %v5447 = vadd.f32 %v5446, %v5181
  %v5448 = vadd.f32 %v5447, %v5182
  %v5449 = vrot.slane %v5448, 4
  %v5450 = vadd.f32 %v5448, %v5449
  %v5451 = vrot.slane %v5450, 2
  %v5452 = vadd.f32 %v5450, %v5451
  %v5453 = vrot.slane %v5452, 1
  %v5454 = vadd.f32 %v5452, %v5453
  %v5455 = vadd.f32 %v5183, %v5184
  %v5456 = vadd.f32 %v5455, %v5185
  %v5457 = vadd.f32 %v5456, %v5186
  %v5458 = vadd.f32 %v5457, %v5187
  %v5459 = vadd.f32 %v5458, %v5188
  %v5460 = vadd.f32 %v5459, %v5189
  %v5461 = vadd.f32 %v5460, %v5190
  %v5462 = vadd.f32 %v5461, %v5191
  %v5463 = vadd.f32 %v5462, %v5192
  %v5464 = vadd.f32 %v5463, %v5193
  %v5465 = vadd.f32 %v5464, %v5194
  %v5466 = vadd.f32 %v5465, %v5195
  %v5467 = vadd.f32 %v5466, %v5196
  %v5468 = vadd.f32 %v5467, %v5197
  %v5469 = vadd.f32 %v5468, %v5198
  %v5470 = vadd.f32 %v5469, %v5199
  %v5471 = vadd.f32 %v5470, %v5200
  %v5472 = vadd.f32 %v5471, %v5201
  %v5473 = vadd.f32 %v5472, %v5202
  %v5474 = vadd.f32 %v5473, %v5203
  %v5475 = vadd.f32 %v5474, %v5204
  %v5476 = vadd.f32 %v5475, %v5205
  %v5477 = vadd.f32 %v5476, %v5206
  %v5478 = vadd.f32 %v5477, %v5207
  %v5479 = vadd.f32 %v5478, %v5208
  %v5480 = vadd.f32 %v5479, %v5209
  %v5481 = vadd.f32 %v5480, %v5210
  %v5482 = vadd.f32 %v5481, %v5211
  %v5483 = vadd.f32 %v5482, %v5212
  %v5484 = vadd.f32 %v5483, %v5213
  %v5485 = vadd.f32 %v5484, %v5214
  %v5486 = vrot.slane %v5485, 4
  %v5487 = vadd.f32 %v5485, %v5486
  %v5488 = vrot.slane %v5487, 2
  %v5489 = vadd.f32 %v5487, %v5488
  %v5490 = vrot.slane %v5489, 1
  %v5491 = vadd.f32 %v5489, %v5490
  %v5492 = vadd.f32 %v5215, %v5216
  %v5493 = vadd.f32 %v5492, %v5217
  %v5494 = vadd.f32 %v5493, %v5218
  %v5495 = vadd.f32 %v5494, %v5219
  %v5496 = vadd.f32 %v5495, %v5220
  %v5497 = vadd.f32 %v5496, %v5221
  %v5498 = vadd.f32 %v5497, %v5222
  %v5499 = vadd.f32 %v5498, %v5223
  %v5500 = vadd.f32 %v5499, %v5224
  %v5501 = vadd.f32 %v5500, %v5225
  %v5502 = vadd.f32 %v5501, %v5226
  %v5503 = vadd.f32 %v5502, %v5227
  %v5504 = vadd.f32 %v5503, %v5228
  %v5505 = vadd.f32 %v5504, %v5229
  %v5506 = vadd.f32 %v5505, %v5230
  %v5507 = vadd.f32 %v5506, %v5231
  %v5508 = vadd.f32 %v5507, %v5232
  %v5509 = vadd.f32 %v5508, %v5233
  %v5510 = vadd.f32 %v5509, %v5234
  %v5511 = vadd.f32 %v5510, %v5235
  %v5512 = vadd.f32 %v5511, %v5236
  %v5513 = vadd.f32 %v5512, %v5237
  %v5514 = vadd.f32 %v5513, %v5238
  %v5515 = vadd.f32 %v5514, %v5239
  %v5516 = vadd.f32 %v5515, %v5240
  %v5517 = vadd.f32 %v5516, %v5241
  %v5518 = vadd.f32 %v5517, %v5242
  %v5519 = vadd.f32 %v5518, %v5243
  %v5520 = vadd.f32 %v5519, %v5244
  %v5521 = vadd.f32 %v5520, %v5245
  %v5522 = vadd.f32 %v5521, %v5246
  %v5523 = vrot.slane %v5522, 4
  %v5524 = vadd.f32 %v5522, %v5523
  %v5525 = vrot.slane %v5524, 2
  %v5526 = vadd.f32 %v5524, %v5525
  %v5527 = vrot.slane %v5526, 1
  %v5528 = vadd.f32 %v5526, %v5527
  %v5529 = vadd.f32 %v5247, %v5248
  %v5530 = vadd.f32 %v5529, %v5249
  %v5531 = vadd.f32 %v5530, %v5250
  %v5532 = vadd.f32 %v5531, %v5251
  %v5533 = vadd.f32 %v5532, %v5252
  %v5534 = vadd.f32 %v5533, %v5253
  %v5535 = vadd.f32 %v5534, %v5254
  %v5536 = vadd.f32 %v5535, %v5255
  %v5537 = vadd.f32 %v5536, %v5256
  %v5538 = vadd.f32 %v5537, %v5257
  %v5539 = vadd.f32 %v5538, %v5258
  %v5540 = vadd.f32 %v5539, %v5259
  %v5541 = vadd.f32 %v5540, %v5260
  %v5542 = vadd.f32 %v5541, %v5261
  %v5543 = vadd.f32 %v5542, %v5262
  %v5544 = vadd.f32 %v5543, %v5263
  %v5545 = vadd.f32 %v5544, %v5264
  %v5546 = vadd.f32 %v5545, %v5265
  %v5547 = vadd.f32 %v5546, %v5266
  %v5548 = vadd.f32 %v5547, %v5267
  %v5549 = vadd.f32 %v5548, %v5268
  %v5550 = vadd.f32 %v5549, %v5269
  %v5551 = vadd.f32 %v5550, %v5270
  %v5552 = vadd.f32 %v5551, %v5271
  %v5553 = vadd.f32 %v5552, %v5272
  %v5554 = vadd.f32 %v5553, %v5273
  %v5555 = vadd.f32 %v5554, %v5274
  %v5556 = vadd.f32 %v5555, %v5275
  %v5557 = vadd.f32 %v5556, %v5276
  %v5558 = vadd.f32 %v5557, %v5277
  %v5559 = vadd.f32 %v5558, %v5278
  %v5560 = vrot.slane %v5559, 4
  %v5561 = vadd.f32 %v5559, %v5560
  %v5562 = vrot.slane %v5561, 2
  %v5563 = vadd.f32 %v5561, %v5562
  %v5564 = vrot.slane %v5563, 1
  %v5565 = vadd.f32 %v5563, %v5564
  %v5566 = vadd.f32 %v5279, %v5280
  %v5567 = vadd.f32 %v5566, %v5281
  %v5568 = vadd.f32 %v5567, %v5282
  %v5569 = vadd.f32 %v5568, %v5283
  %v5570 = vadd.f32 %v5569, %v5284
  %v5571 = vadd.f32 %v5570, %v5285
  %v5572 = vadd.f32 %v5571, %v5286
  %v5573 = vadd.f32 %v5572, %v5287
  %v5574 = vadd.f32 %v5573, %v5288
  %v5575 = vadd.f32 %v5574, %v5289
  %v5576 = vadd.f32 %v5575, %v5290
  %v5577 = vadd.f32 %v5576, %v5291
  %v5578 = vadd.f32 %v5577, %v5292
  %v5579 = vadd.f32 %v5578, %v5293
  %v5580 = vadd.f32 %v5579, %v5294
  %v5581 = vadd.f32 %v5580, %v5295
  %v5582 = vadd.f32 %v5581, %v5296
  %v5583 = vadd.f32 %v5582, %v5297
  %v5584 = vadd.f32 %v5583, %v5298
  %v5585 = vadd.f32 %v5584, %v5299
  %v5586 = vadd.f32 %v5585, %v5300
  %v5587 = vadd.f32 %v5586, %v5301
  %v5588 = vadd.f32 %v5587, %v5302
  %v5589 = vadd.f32 %v5588, %v5303
  %v5590 = vadd.f32 %v5589, %v5304
  %v5591 = vadd.f32 %v5590, %v5305
  %v5592 = vadd.f32 %v5591, %v5306
  %v5593 = vadd.f32 %v5592, %v5307
  %v5594 = vadd.f32 %v5593, %v5308
  %v5595 = vadd.f32 %v5594, %v5309
  %v5596 = vadd.f32 %v5595, %v5310
  %v5597 = vrot.slane %v5596, 4
  %v5598 = vadd.f32 %v5596, %v5597
  %v5599 = vrot.slane %v5598, 2
  %v5600 = vadd.f32 %v5598, %v5599
  %v5601 = vrot.slane %v5600, 1
  %v5602 = vadd.f32 %v5600, %v5601
  %v5603 = vadd.f32 %v5311, %v5312
  %v5604 = vadd.f32 %v5603, %v5313
  %v5605 = vadd.f32 %v5604, %v5314
  %v5606 = vadd.f32 %v5605, %v5315
  %v5607 = vadd.f32 %v5606, %v5316
  %v5608 = vadd.f32 %v5607, %v5317
  %v5609 = vadd.f32 %v5608, %v5318
  %v5610 = vadd.f32 %v5609, %v5319
  %v5611 = vadd.f32 %v5610, %v5320
  %v5612 = vadd.f32 %v5611, %v5321
  %v5613 = vadd.f32 %v5612, %v5322
  %v5614 = vadd.f32 %v5613, %v5323
  %v5615 = vadd.f32 %v5614, %v5324
  %v5616 = vadd.f32 %v5615, %v5325
  %v5617 = vadd.f32 %v5616, %v5326
  %v5618 = vadd.f32 %v5617, %v5327
  %v5619 = vadd.f32 %v5618, %v5328
  %v5620 = vadd.f32 %v5619, %v5329
  %v5621 = vadd.f32 %v5620, %v5330
  %v5622 = vadd.f32 %v5621, %v5331
  %v5623 = vadd.f32 %v5622, %v5332
  %v5624 = vadd.f32 %v5623, %v5333
  %v5625 = vadd.f32 %v5624, %v5334
  %v5626 = vadd.f32 %v5625, %v5335
  %v5627 = vadd.f32 %v5626, %v5336
  %v5628 = vadd.f32 %v5627, %v5337
  %v5629 = vadd.f32 %v5628, %v5338
  %v5630 = vadd.f32 %v5629, %v5339
  %v5631 = vadd.f32 %v5630, %v5340
  %v5632 = vadd.f32 %v5631, %v5341
  %v5633 = vadd.f32 %v5632, %v5342
  %v5634 = vrot.slane %v5633, 4
  %v5635 = vadd.f32 %v5633, %v5634
  %v5636 = vrot.slane %v5635, 2
  %v5637 = vadd.f32 %v5635, %v5636
  %v5638 = vrot.slane %v5637, 1
  %v5639 = vadd.f32 %v5637, %v5638
  %vm5648 = vcmask 1041409
  %v5649 = vsel %vm5648, %v5417, %v5380
  %vm5650 = vcmask 1042434
  %v5651 = vsel %vm5650, %v5454, %v5649
  %vm5652 = vcmask 1043459
  %v5653 = vsel %vm5652, %v5491, %v5651
  %vm5654 = vcmask 1044484
  %v5655 = vsel %vm5654, %v5528, %v5653
  %vm5656 = vcmask 1045509
  %v5657 = vsel %vm5656, %v5565, %v5655
  %vm5658 = vcmask 1046534
  %v5659 = vsel %vm5658, %v5602, %v5657
  %vm5660 = vcmask 1047559
  %v5661 = vsel %vm5660, %v5639, %v5659
  %v5663 = vadd.f32 %v5343, %v5661
  %5664 = vst [vmem:[#allocation2] sm:$0xff] %v5663
  // Predicated region
  $region46: #{partial_encoder_forward.1} parent=0 // pred_check
    %p5665 = pneg %p35
  $region47: #{partial_encoder_forward.1} parent=0 // pred_check_branch
    %5667 = sbr.rel (%p5665) target = $region49
  $region48: #{partial_encoder_forward.1} parent=0 // pred_region
    %v5668 = vld [vmem:[#allocation2] sm:$0xff]
    %v5669 = vpack.c.bf16 %v5668, %v5668
    %v5670 = vld [vmem:[%s6] sm:$0xf]
    %v5671 = vld [vmem:[%s6 + $0x4] sm:$0xf]
    %v5672 = vld [vmem:[%s6 + $0x8] sm:$0xf]
    %v5673 = vld [vmem:[%s6 + $0xc] sm:$0xf]
    %v5674 = vld [vmem:[%s6 + $0x10] sm:$0xf]
    %v5675 = vld [vmem:[%s6 + $0x14] sm:$0xf]
    %v5676 = vld [vmem:[%s6 + $0x18] sm:$0xf]
    %v5677 = vld [vmem:[%s6 + $0x1c] sm:$0xf]
    %v5678 = vld [vmem:[%s6 + $0x20] sm:$0xf]
    %v5679 = vld [vmem:[%s6 + $0x24] sm:$0xf]
    %v5680 = vld [vmem:[%s6 + $0x28] sm:$0xf]
    %v5681 = vld [vmem:[%s6 + $0x2c] sm:$0xf]
    %v5682 = vld [vmem:[%s6 + $0x30] sm:$0xf]
    %v5683 = vld [vmem:[%s6 + $0x34] sm:$0xf]
    %v5684 = vld [vmem:[%s6 + $0x38] sm:$0xf]
    %v5685 = vld [vmem:[%s6 + $0x3c] sm:$0xf]
    %v5686 = vld [vmem:[%s7] sm:$0x1]
    %v5688 = vperm.slane %v5686, 0
    %v5706 = vunpack.c.l.b16 %v5670
    %v5707 = vunpack.c.l.b16 %v5671
    %v5708 = vunpack.c.l.b16 %v5672
    %v5709 = vunpack.c.l.b16 %v5673
    %v5710 = vunpack.c.l.b16 %v5674
    %v5711 = vunpack.c.l.b16 %v5675
    %v5712 = vunpack.c.l.b16 %v5676
    %v5713 = vunpack.c.l.b16 %v5677
    %v5714 = vunpack.c.l.b16 %v5678
    %v5715 = vunpack.c.l.b16 %v5679
    %v5716 = vunpack.c.l.b16 %v5680
    %v5717 = vunpack.c.l.b16 %v5681
    %v5718 = vunpack.c.l.b16 %v5682
    %v5719 = vunpack.c.l.b16 %v5683
    %v5720 = vunpack.c.l.b16 %v5684
    %v5721 = vunpack.c.l.b16 %v5685
    %v5722 = vpack.c.b16 %v5707, %v5706
    %v5723 = vpack.c.b16 %v5709, %v5708
    %v5724 = vpack.c.b16 %v5711, %v5710
    %v5725 = vpack.c.b16 %v5713, %v5712
    %v5726 = vpack.c.b16 %v5715, %v5714
    %v5727 = vpack.c.b16 %v5717, %v5716
    %v5728 = vpack.c.b16 %v5719, %v5718
    %v5729 = vpack.c.b16 %v5721, %v5720
    %5738 = vmatpush.bf16.msra.mxu0 %v5729
    %5739 = vmatpush.bf16.msra.mxu0 %v5728
    %5740 = vmatpush.bf16.msra.mxu0 %v5727
    %5741 = vmatpush.bf16.msra.mxu0 %v5726
    %5742 = vmatpush.bf16.msra.mxu0 %v5725
    %5743 = vmatpush.bf16.msra.mxu0 %v5724
    %5744 = vmatpush.bf16.msra.mxu0 %v5723
    %5745 = vmatpush.bf16.msra.mxu0 %v5722
    %5746 = vmatmul.bf16.gmra.mxu0 %v5669
    %v5747 = vpop.f32.mrf.mxu0
    %v5748 = vadd.f32 %v5688, %v5747
    %v5749 = vpop.f32.mrf.mxu0
    %5750 = vdwg.mxu0
    %v5751 = vmax.f32 %v5748, 0.0
    %v5752 = vpack.c.bf16 %v5751, %v5751
    %v5753 = vld [vmem:[%s8] sm:$0xf]
    %v5754 = vld [vmem:[%s8 + $0x4] sm:$0xf]
    %v5755 = vld [vmem:[%s8 + $0x8] sm:$0xf]
    %v5756 = vld [vmem:[%s8 + $0xc] sm:$0xf]
    %v5757 = vld [vmem:[%s8 + $0x10] sm:$0xf]
    %v5758 = vld [vmem:[%s8 + $0x14] sm:$0xf]
    %v5759 = vld [vmem:[%s8 + $0x18] sm:$0xf]
    %v5760 = vld [vmem:[%s8 + $0x1c] sm:$0xf]
    %v5761 = vld [vmem:[%s8 + $0x20] sm:$0xf]
    %v5762 = vld [vmem:[%s8 + $0x24] sm:$0xf]
    %v5763 = vld [vmem:[%s8 + $0x28] sm:$0xf]
    %v5764 = vld [vmem:[%s8 + $0x2c] sm:$0xf]
    %v5765 = vld [vmem:[%s8 + $0x30] sm:$0xf]
    %v5766 = vld [vmem:[%s8 + $0x34] sm:$0xf]
    %v5767 = vld [vmem:[%s8 + $0x38] sm:$0xf]
    %v5768 = vld [vmem:[%s8 + $0x3c] sm:$0xf]
    %v5769 = vld [vmem:[%s9] sm:$0x1]
    %v5771 = vperm.slane %v5769, 0
    %v5789 = vunpack.c.l.b16 %v5753
    %v5790 = vunpack.c.l.b16 %v5754
    %v5791 = vunpack.c.l.b16 %v5755
    %v5792 = vunpack.c.l.b16 %v5756
    %v5793 = vunpack.c.l.b16 %v5757
    %v5794 = vunpack.c.l.b16 %v5758
    %v5795 = vunpack.c.l.b16 %v5759
    %v5796 = vunpack.c.l.b16 %v5760
    %v5797 = vunpack.c.l.b16 %v5761
    %v5798 = vunpack.c.l.b16 %v5762
    %v5799 = vunpack.c.l.b16 %v5763
    %v5800 = vunpack.c.l.b16 %v5764
    %v5801 = vunpack.c.l.b16 %v5765
    %v5802 = vunpack.c.l.b16 %v5766
    %v5803 = vunpack.c.l.b16 %v5767
    %v5804 = vunpack.c.l.b16 %v5768
    %v5805 = vpack.c.b16 %v5790, %v5789
    %v5806 = vpack.c.b16 %v5792, %v5791
    %v5807 = vpack.c.b16 %v5794, %v5793
    %v5808 = vpack.c.b16 %v5796, %v5795
    %v5809 = vpack.c.b16 %v5798, %v5797
    %v5810 = vpack.c.b16 %v5800, %v5799
    %v5811 = vpack.c.b16 %v5802, %v5801
    %v5812 = vpack.c.b16 %v5804, %v5803
    %5821 = vmatpush.bf16.msra.mxu0 %v5812
    %5822 = vmatpush.bf16.msra.mxu0 %v5811
    %5823 = vmatpush.bf16.msra.mxu0 %v5810
    %5824 = vmatpush.bf16.msra.mxu0 %v5809
    %5825 = vmatpush.bf16.msra.mxu0 %v5808
    %5826 = vmatpush.bf16.msra.mxu0 %v5807
    %5827 = vmatpush.bf16.msra.mxu0 %v5806
    %5828 = vmatpush.bf16.msra.mxu0 %v5805
    %5829 = vmatmul.bf16.gmra.mxu0 %v5752
    %v5830 = vpop.f32.mrf.mxu0
    %v5831 = vadd.f32 %v5771, %v5830
    %v5832 = vpop.f32.mrf.mxu0
    %5833 = vdwg.mxu0
    %5834 = vst [vmem:[%s10] sm:$0xff] %v5831
  $region49: #{partial_encoder_forward.1} parent=0 // pred_fallthru
    _
  // Predicated region
  $region50: #{partial_encoder_forward.1} parent=0 // pred_check
    _
  $region51: #{partial_encoder_forward.1} parent=0 // pred_check_branch
    %5836 = sbr.rel (0) target = $region53
  $region52: #{partial_encoder_forward.1} parent=0 // pred_region
    _
  $region53: #{partial_encoder_forward.1} parent=0 // pred_fallthru
    _
  // Predicated region
  $region54: #{partial_encoder_forward.1} parent=0 // pred_check
    _
  $region55: #{partial_encoder_forward.1} parent=0 // pred_check_branch
    %5838 = sbr.rel (0) target = $region57
  $region56: #{partial_encoder_forward.1} parent=0 // pred_region
    _
  $region57: #{partial_encoder_forward.1} parent=0 // pred_fallthru
    _

</llo_original>
